<compile_context>
chip_gen: v7x
topology: tpu7x:2x2x1
jax: 0.10.0
libtpu: 0.0.40
codegen_flags: <defaults>
</compile_context>

<pallas_src>
import functools
import math

import jax
import jax.numpy as jnp
from jax.experimental import pallas as pl
from jax.experimental.pallas import tpu as pltpu

_SQRT_HALF = 0.7071067811865476  # 1/sqrt(2), precomputed (avoid in-kernel divide)


# ---------------------------------------------------------------------------
# hardware-aware knobs
# ---------------------------------------------------------------------------
@functools.lru_cache(maxsize=1)
def _vmem_capacity_bytes():
    try:
        return int(pltpu.get_tpu_info().vmem_capacity_bytes)
    except Exception:
        return 64 * 1024 * 1024  # conservative default (v7x-sized VMEM)


@functools.lru_cache(maxsize=1)
def _vmem_limit_bytes():
    # ~75% of physical VMEM, capped at 64 MiB: 64 MiB on 128 MiB parts (v5e/v6e),
    # 48 MiB on v7x's 64 MiB per-TC VMEM (leaves compiler scratch headroom).
    return int(min(64 * 1024 * 1024, _vmem_capacity_bytes() * 3 // 4))


@functools.lru_cache(maxsize=1)
def _default_row_tile():
    # Mem-bound kernels reach ~85% of HBM roofline at 512-1024 row tiles on
    # 128 MiB-VMEM parts (v5e/v6e); keep 256 on v7x (64 MiB per TC).
    return 1024 if _vmem_capacity_bytes() >= 100 * 1024 * 1024 else 256


@functools.lru_cache(maxsize=1)
def _buffered_one_supported():
    """One-time probe: can grid-invariant operands be single-buffered?"""
    try:
        with jax.ensure_compile_time_eval():
            def _probe(x_ref, c_ref, o_ref):
                o_ref[...] = x_ref[...] + c_ref[...]

            f = pl.pallas_call(
                _probe,
                out_shape=jax.ShapeDtypeStruct((16, 128), jnp.float32),
                grid=(2,),
                in_specs=[
                    pl.BlockSpec((8, 128), lambda i: (i, 0)),
                    pl.BlockSpec((8, 128), lambda i: (0, 0),
                                 pipeline_mode=pl.Buffered(1)),
                ],
                out_specs=pl.BlockSpec((8, 128), lambda i: (i, 0)),
            )
            jax.block_until_ready(
                f(jnp.zeros((16, 128), jnp.float32), jnp.ones((8, 128), jnp.float32)))
        return True
    except Exception:
        return False


def _const_spec(block_shape, index_map):
    """BlockSpec for a grid-invariant operand (single-buffered when supported)."""
    if _buffered_one_supported():
        return pl.BlockSpec(block_shape, index_map, pipeline_mode=pl.Buffered(1))
    return pl.BlockSpec(block_shape, index_map)


# ---------------------------------------------------------------------------
# helpers: row tiling / padding
# ---------------------------------------------------------------------------
def _round_up(a, b):
    return ((a + b - 1) // b) * b


def _choose_tile(m, tile_m, dtype):
    """Row tile aligned to the dtype's sublane packing (8 f32 / 16 bf16 / 32 int8),
    clamped so the M grid has >= 2 steps when possible (v7x megacore)."""
    itemsize = jnp.dtype(dtype).itemsize
    sub = 8 if itemsize >= 4 else (16 if itemsize == 2 else 32)
    m_min = _round_up(m, sub)
    tm = min(_round_up(tile_m, sub), m_min)
    if m_min // tm < 2 and m_min >= 2 * sub:
        tm = _round_up(m_min // 2, sub)
    m_pad = _round_up(m, tm)
    return tm, m_pad


def _pad_rows(a, m_pad):
    m = a.shape[0]
    if m_pad == m:
        return a
    return jnp.pad(a, ((0, m_pad - m), (0, 0)))


# ---------------------------------------------------------------------------
# linear (x @ W^T + b) kernel — used for all nn.Linear projections
# ---------------------------------------------------------------------------
def _linear_kernel(x_ref, w_ref, b_ref, o_ref):
    # x: (tm, K), w: (N, K) torch layout -> contract K on the MXU, f32 accumulate.
    acc = jax.lax.dot_general(x_ref[...], w_ref[...], (((1,), (1,)), ((), ())),
                              preferred_element_type=jnp.float32)
    o_ref[...] = (acc + b_ref[...]).astype(o_ref.dtype)


def linear(x2d, w, b, *, tile_m=None):
    """x2d: (M, K); w: (N, K) [torch nn.Linear layout]; b: (N,) -> (M, N)."""
    m, k = x2d.shape
    n = w.shape[0]
    tile_m = _default_row_tile() if tile_m is None else tile_m
    tm, m_pad = _choose_tile(m, tile_m, x2d.dtype)
    x_pad = _pad_rows(x2d, m_pad)
    br = b.reshape(1, n).astype(jnp.float32)
    out = pl.pallas_call(
        _linear_kernel,
        out_shape=jax.ShapeDtypeStruct((m_pad, n), x2d.dtype),
        grid=(m_pad // tm,),
        in_specs=[
            pl.BlockSpec((tm, k), lambda i: (i, 0)),
            _const_spec((n, k), lambda i: (0, 0)),      # weight stays in torch layout
            _const_spec((1, n), lambda i: (0, 0)),
        ],
        out_specs=pl.BlockSpec((tm, n), lambda i: (i, 0)),
        compiler_params=pltpu.CompilerParams(
            dimension_semantics=("parallel",),
            vmem_limit_bytes=_vmem_limit_bytes(),
        ),
    )(x_pad, w, br)
    return out[:m] if m_pad != m else out


# ---------------------------------------------------------------------------
# scaled-dot-product attention kernel (per batch, all heads per grid step)
# ---------------------------------------------------------------------------
def _attn_kernel(q_ref, k_ref, v_ref, m_ref, ctx_ref, prob_ref, *,
                 n_head, d_head, scale):
    q_all = q_ref[0]                   # (n_q, n_head*d_head)
    k_all = k_ref[0]                   # (n_k, n_head*d_head)
    v_all = v_ref[0]                   # (n_k, n_head*d_head)
    masked = m_ref[0] != 0             # (n_q, n_k) bool, True = masked

    ctxs = []
    for h in range(n_head):            # static unroll over heads
        lo = h * d_head
        q = q_all[:, lo:lo + d_head]
        k = k_all[:, lo:lo + d_head]
        v = v_all[:, lo:lo + d_head]
        # scores = Q @ K^T * scale  (contract d_head on the MXU, f32 accumulate)
        s = jax.lax.dot_general(q, k, (((1,), (1,)), ((), ())),
                                preferred_element_type=jnp.float32) * scale
        s = jnp.where(masked, jnp.float32(-1e9), s)     # masked_fill_(attn_mask, -1e9)
        e = jnp.exp(s - jnp.max(s, axis=-1, keepdims=True))
        # divide -> EUP reciprocal (separate VLIW slot)
        p = e * pl.reciprocal(jnp.sum(e, axis=-1, keepdims=True), approx=True)
        # TODO(synk): attention-prob dropout is identity (eval-mode semantics).
        ctxs.append(jnp.dot(p.astype(v.dtype), v, preferred_element_type=jnp.float32))
        prob_ref[0, h] = p.astype(prob_ref.dtype)
    # Lane-dense context store: heads folded into the last dim -> no transpose afterwards.
    ctx_ref[0] = jnp.concatenate(ctxs, axis=-1).astype(ctx_ref.dtype)


def scaled_dot_product_attention(q, k, v, mask_i32, *, n_head, d_head, scale):
    """q: (bs, n_q, H); k, v: (bs, n_k, H) with H = n_head*d_head;
    mask_i32: (bs, n_q, n_k) int32 (nonzero = masked).  No head broadcast in HBM."""
    bs, n_q, h_dim = q.shape
    n_k = k.shape[1]
    ctx, prob = pl.pallas_call(
        functools.partial(_attn_kernel, n_head=n_head, d_head=d_head, scale=scale),
        out_shape=(
            jax.ShapeDtypeStruct((bs, n_q, h_dim), q.dtype),
            jax.ShapeDtypeStruct((bs, n_head, n_q, n_k), q.dtype),
        ),
        grid=(bs,),
        in_specs=[
            pl.BlockSpec((1, n_q, h_dim), lambda i: (i, 0, 0)),
            pl.BlockSpec((1, n_k, h_dim), lambda i: (i, 0, 0)),
            pl.BlockSpec((1, n_k, h_dim), lambda i: (i, 0, 0)),
            pl.BlockSpec((1, n_q, n_k), lambda i: (i, 0, 0)),
        ],
        out_specs=(
            pl.BlockSpec((1, n_q, h_dim), lambda i: (i, 0, 0)),
            pl.BlockSpec((1, n_head, n_q, n_k), lambda i: (i, 0, 0, 0)),
        ),
        compiler_params=pltpu.CompilerParams(
            dimension_semantics=("parallel",),
            vmem_limit_bytes=_vmem_limit_bytes(),
        ),
    )(q, k, v, mask_i32)
    return ctx, prob


# ---------------------------------------------------------------------------
# fused residual add + LayerNorm kernel
# ---------------------------------------------------------------------------
def _add_ln_kernel(x_ref, r_ref, g_ref, b_ref, o_ref, *, eps):
    v = x_ref[...].astype(jnp.float32) + r_ref[...].astype(jnp.float32)
    mu = jnp.mean(v, axis=-1, keepdims=True)
    c = v - mu
    var = jnp.mean(c * c, axis=-1, keepdims=True)
    y = c * jax.lax.rsqrt(var + eps)
    o_ref[...] = (y * g_ref[...] + b_ref[...]).astype(o_ref.dtype)


def add_layer_norm(x, res, gamma, beta, *, eps, tile_m=None):
    bs, n_seq, d = x.shape
    m = bs * n_seq
    tile_m = _default_row_tile() if tile_m is None else tile_m
    tm, m_pad = _choose_tile(m, tile_m, x.dtype)
    x2d = _pad_rows(x.reshape(m, d), m_pad)
    r2d = _pad_rows(res.reshape(m, d), m_pad)
    out = pl.pallas_call(
        functools.partial(_add_ln_kernel, eps=eps),
        out_shape=jax.ShapeDtypeStruct((m_pad, d), x.dtype),
        grid=(m_pad // tm,),
        in_specs=[
            pl.BlockSpec((tm, d), lambda i: (i, 0)),
            pl.BlockSpec((tm, d), lambda i: (i, 0)),
            _const_spec((1, d), lambda i: (0, 0)),
            _const_spec((1, d), lambda i: (0, 0)),
        ],
        out_specs=pl.BlockSpec((tm, d), lambda i: (i, 0)),
        compiler_params=pltpu.CompilerParams(
            dimension_semantics=("parallel",),
            vmem_limit_bytes=_vmem_limit_bytes(),
        ),
    )(x2d, r2d, gamma.reshape(1, d).astype(jnp.float32),
      beta.reshape(1, d).astype(jnp.float32))
    out = out[:m] if m_pad != m else out
    return out.reshape(bs, n_seq, d)


# ---------------------------------------------------------------------------
# PoswiseFeedForwardNet kernel (pointwise conv1 -> GELU -> pointwise conv2)
# ---------------------------------------------------------------------------
def _ffn_kernel(x_ref, w1_ref, b1_ref, w2_ref, b2_ref, o_ref):
    # conv1 (kernel_size=1 => per-position linear), weight kept in (d_ff, d_hidn) layout.
    h = jax.lax.dot_general(x_ref[...], w1_ref[...], (((1,), (1,)), ((), ())),
                            preferred_element_type=jnp.float32) + b1_ref[...]
    # exact-erf GELU (F.gelu default), kept in f32; multiply by precomputed 1/sqrt(2).
    h = 0.5 * h * (1.0 + jax.lax.erf(h * _SQRT_HALF))
    # conv2 (kernel_size=1), weight kept in (d_hidn, d_ff) layout.
    o = jax.lax.dot_general(h.astype(w2_ref.dtype), w2_ref[...],
                            (((1,), (1,)), ((), ())),
                            preferred_element_type=jnp.float32) + b2_ref[...]
    # TODO(synk): FFN dropout is identity (eval-mode); training parity needs pltpu.prng_random_bits.
    o_ref[...] = o.astype(o_ref.dtype)


def poswise_ffn(x, w1, b1, w2, b2, *, tile_m=None):
    """x: (bs, n_seq, d_hidn); w1: (d_ff, d_hidn); b1: (d_ff,); w2: (d_hidn, d_ff); b2: (d_hidn,)."""
    bs, n_seq, d_hidn = x.shape
    d_ff = w1.shape[0]
    m = bs * n_seq
    tile_m = _default_row_tile() if tile_m is None else tile_m
    tm, m_pad = _choose_tile(m, tile_m, x.dtype)
    x_pad = _pad_rows(x.reshape(m, d_hidn), m_pad)
    b1r = b1.reshape(1, d_ff).astype(jnp.float32)
    b2r = b2.reshape(1, d_hidn).astype(jnp.float32)
    # TODO(synk): for configs where both weights exceed v7x's 64 MiB VMEM (d_hidn*d_ff >~ 4M f32),
    # add a d_ff reduction grid axis ("arbitrary") with a VMEM f32 accumulator instead of
    # keeping both full weights resident.  Not needed for d_hidn=256, d_ff=1024.
    cost = pl.CostEstimate(
        flops=int(4 * m_pad * d_hidn * d_ff),
        transcendentals=int(m_pad * d_ff),
        bytes_accessed=int(
            x_pad.size * x_pad.dtype.itemsize
            + w1.size * w1.dtype.itemsize + w2.size * w2.dtype.itemsize
            + b1r.size * 4 + b2r.size * 4
            + m_pad * d_hidn * x.dtype.itemsize
        ),
    )
    out2d = pl.pallas_call(
        _ffn_kernel,
        out_shape=jax.ShapeDtypeStruct((m_pad, d_hidn), x.dtype),
        grid=(m_pad // tm,),
        in_specs=[
            pl.BlockSpec((tm, d_hidn), lambda i: (i, 0)),   # x rows
            _const_spec((d_ff, d_hidn), lambda i: (0, 0)),  # W1 (torch layout)
            _const_spec((1, d_ff), lambda i: (0, 0)),       # b1
            _const_spec((d_hidn, d_ff), lambda i: (0, 0)),  # W2 (torch layout)
            _const_spec((1, d_hidn), lambda i: (0, 0)),     # b2
        ],
        out_specs=pl.BlockSpec((tm, d_hidn), lambda i: (i, 0)),
        compiler_params=pltpu.CompilerParams(
            dimension_semantics=("parallel",),
            vmem_limit_bytes=_vmem_limit_bytes(),
        ),
        cost_estimate=cost,
    )(x_pad, w1, b1r, w2, b2r)
    out2d = out2d[:m] if m_pad != m else out2d
    return out2d.reshape(bs, n_seq, d_hidn)


# ---------------------------------------------------------------------------
# MultiHeadAttention + Decoder forward (composition of the kernels above)
# ---------------------------------------------------------------------------
def multi_head_attention(q_in, k_in, v_in, attn_mask, p, *, n_head, d_head):
    """q_in: (bs, n_q, d_hidn); k_in, v_in: (bs, n_k, d_hidn);
    attn_mask: (bs, n_q, n_k) bool (True = masked)."""
    bs, n_q, d_hidn = q_in.shape
    n_k = k_in.shape[1]
    d_qkv = n_head * d_head

    # Fused projections: one pallas_call for Q/K/V when they share the same input
    # (self-attention) or for K/V (cross-attention) -> fewer launches, activation read
    # once, 3x/2x wider MXU N per row tile.  Weights stay in torch (N, K) layout.
    if q_in is k_in and k_in is v_in:
        w = jnp.concatenate([p["wq"], p["wk"], p["wv"]], axis=0)
        b = jnp.concatenate([p["bq"], p["bk"], p["bv"]], axis=0)
        qkv = linear(q_in.reshape(bs * n_q, d_hidn), w, b)
        q_s = qkv[:, :d_qkv].reshape(bs, n_q, d_qkv)
        k_s = qkv[:, d_qkv:2 * d_qkv].reshape(bs, n_q, d_qkv)
        v_s = qkv[:, 2 * d_qkv:].reshape(bs, n_q, d_qkv)
    elif k_in is v_in:
        q_s = linear(q_in.reshape(bs * n_q, d_hidn), p["wq"], p["bq"]).reshape(bs, n_q, d_qkv)
        w = jnp.concatenate([p["wk"], p["wv"]], axis=0)
        b = jnp.concatenate([p["bk"], p["bv"]], axis=0)
        kv = linear(k_in.reshape(bs * n_k, d_hidn), w, b)
        k_s = kv[:, :d_qkv].reshape(bs, n_k, d_qkv)
        v_s = kv[:, d_qkv:].reshape(bs, n_k, d_qkv)
    else:
        q_s = linear(q_in.reshape(bs * n_q, d_hidn), p["wq"], p["bq"]).reshape(bs, n_q, d_qkv)
        k_s = linear(k_in.reshape(bs * n_k, d_hidn), p["wk"], p["bk"]).reshape(bs, n_k, d_qkv)
        v_s = linear(v_in.reshape(bs * n_k, d_hidn), p["wv"], p["bv"]).reshape(bs, n_k, d_qkv)

    # Mask passed once per batch (no n_head broadcast in HBM).
    mask_i = attn_mask.astype(jnp.int32)
    scale = 1.0 / (d_head ** 0.5)
    ctx, prob = scaled_dot_product_attention(q_s, k_s, v_s, mask_i,
                                             n_head=n_head, d_head=d_head, scale=scale)
    # ctx is already (bs, n_q, n_head*d_head) lane-dense -> straight into the output proj.
    out = linear(ctx.reshape(bs * n_q, d_qkv), p["wo"], p["bo"]).reshape(bs, n_q, d_hidn)
    # TODO(synk): MHA output dropout is identity (eval-mode semantics).
    return out, prob


def decoder_forward(params, dec_inputs, enc_outputs, self_attn_mask, dec_enc_attn_mask,
                    *, n_head, d_head, eps):
    self_att, self_prob = multi_head_attention(
        dec_inputs, dec_inputs, dec_inputs, self_attn_mask,
        params["self_attn"], n_head=n_head, d_head=d_head)
    x1 = add_layer_norm(dec_inputs, self_att, params["ln1_g"], params["ln1_b"], eps=eps)
    cross_att, cross_prob = multi_head_attention(
        x1, enc_outputs, enc_outputs, dec_enc_attn_mask,
        params["dec_enc_attn"], n_head=n_head, d_head=d_head)
    x2 = add_layer_norm(x1, cross_att, params["ln2_g"], params["ln2_b"], eps=eps)
    ffn = poswise_ffn(x2, params["ffn_w1"], params["ffn_b1"],
                      params["ffn_w2"], params["ffn_b2"])
    out = add_layer_norm(x2, ffn, params["ln3_g"], params["ln3_b"], eps=eps)
    return out, self_prob, cross_prob


# ---------------------------------------------------------------------------
# parameter init (deterministic, PyTorch-default-like uniform for linears/convs)
# ---------------------------------------------------------------------------
def _init_linear(key, out_f, in_f):
    kw, kb = jax.random.split(key)
    bound = 1.0 / math.sqrt(in_f)
    w = jax.random.uniform(kw, (out_f, in_f), jnp.float32, -bound, bound)
    b = jax.random.uniform(kb, (out_f,), jnp.float32, -bound, bound)
    return w, b


def _init_mha(key, d_hidn, n_head, d_head):
    k = jax.random.split(key, 4)
    d_qkv = n_head * d_head
    wq, bq = _init_linear(k[0], d_qkv, d_hidn)
    wk, bk = _init_linear(k[1], d_qkv, d_hidn)
    wv, bv = _init_linear(k[2], d_qkv, d_hidn)
    wo, bo = _init_linear(k[3], d_hidn, d_qkv)
    return dict(wq=wq, bq=bq, wk=wk, bk=bk, wv=wv, bv=bv, wo=wo, bo=bo)


def init_decoder_params(key, d_hidn, n_head, d_head, d_ff):
    k = jax.random.split(key, 7)
    ffn_w1, ffn_b1 = _init_linear(k[2], d_ff, d_hidn)   # conv1 (k=1): d_hidn -> d_ff
    ffn_w2, ffn_b2 = _init_linear(k[3], d_hidn, d_ff)   # conv2 (k=1): d_ff -> d_hidn

    def ln_params(kk):
        g = 1.0 + 0.05 * jax.random.normal(kk, (d_hidn,), jnp.float32)
        b = 0.05 * jax.random.normal(jax.random.fold_in(kk, 1), (d_hidn,), jnp.float32)
        return g, b

    ln1_g, ln1_b = ln_params(k[4])
    ln2_g, ln2_b = ln_params(k[5])
    ln3_g, ln3_b = ln_params(k[6])
    return dict(
        self_attn=_init_mha(k[0], d_hidn, n_head, d_head),
        dec_enc_attn=_init_mha(k[1], d_hidn, n_head, d_head),
        ffn_w1=ffn_w1, ffn_b1=ffn_b1, ffn_w2=ffn_w2, ffn_b2=ffn_b2,
        ln1_g=ln1_g, ln1_b=ln1_b, ln2_g=ln2_g, ln2_b=ln2_b, ln3_g=ln3_g, ln3_b=ln3_b)


# ---------------------------------------------------------------------------
# pure-JAX reference (mirrors the PyTorch forward exactly, eval mode)
# ---------------------------------------------------------------------------
def reference_decoder(params, dec_inputs, enc_outputs, self_mask, cross_mask,
                      *, n_head, d_head, eps):
    hp = jax.lax.Precision.HIGHEST

    def lin(x, w, b):
        return jnp.matmul(x, w.T, precision=hp) + b

    def ln(x, g, b):
        mu = x.mean(-1, keepdims=True)
        var = ((x - mu) ** 2).mean(-1, keepdims=True)
        return (x - mu) / jnp.sqrt(var + eps) * g + b

    def mha(q_in, k_in, v_in, mask, p):
        bs, n_q, _ = q_in.shape
        n_k = k_in.shape[1]
        q = lin(q_in, p["wq"], p["bq"]).reshape(bs, n_q, n_head, d_head).transpose(0, 2, 1, 3)
        k = lin(k_in, p["wk"], p["bk"]).reshape(bs, n_k, n_head, d_head).transpose(0, 2, 1, 3)
        v = lin(v_in, p["wv"], p["bv"]).reshape(bs, n_k, n_head, d_head).transpose(0, 2, 1, 3)
        s = jnp.einsum("bhqd,bhkd->bhqk", q, k, precision=hp) * (1.0 / d_head ** 0.5)
        s = jnp.where(mask[:, None, :, :], jnp.float32(-1e9), s)
        prob = jax.nn.softmax(s, axis=-1)
        ctx = jnp.einsum("bhqk,bhkd->bhqd", prob, v, precision=hp)
        ctx = ctx.transpose(0, 2, 1, 3).reshape(bs, n_q, n_head * d_head)
        return lin(ctx, p["wo"], p["bo"]), prob

    sa, sp = mha(dec_inputs, dec_inputs, dec_inputs, self_mask, params["self_attn"])
    x1 = ln(dec_inputs + sa, params["ln1_g"], params["ln1_b"])
    ca, cp = mha(x1, enc_outputs, enc_outputs, cross_mask, params["dec_enc_attn"])
    x2 = ln(x1 + ca, params["ln2_g"], params["ln2_b"])
    h = lin(x2, params["ffn_w1"], params["ffn_b1"])
    h = 0.5 * h * (1.0 + jax.lax.erf(h / jnp.sqrt(2.0)))
    f = jnp.matmul(h, params["ffn_w2"].T, precision=hp) + params["ffn_b2"]
    out = ln(x2 + f, params["ln3_g"], params["ln3_b"])
    return out, sp, cp


if __name__ == "__main__":
    # Small shapes consistent with the module structure (d_hidn == n_head * d_head).
    bs, n_dec_seq, n_enc_seq = 2, 8, 16
    d_hidn, n_head, d_head, d_ff = 32, 4, 8, 64
    eps = 1e-12

    key = jax.random.PRNGKey(0)
    k_inp, k_enc, k_par = jax.random.split(key, 3)
    dec_inputs = jax.random.normal(k_inp, (bs, n_dec_seq, d_hidn), jnp.float32)
    enc_outputs = jax.random.normal(k_enc, (bs, n_enc_seq, d_hidn), jnp.float32)

    # Self-attention mask: causal (True = masked), matching masked_fill_ semantics.
    causal = jnp.triu(jnp.ones((n_dec_seq, n_dec_seq), dtype=bool), k=1)
    self_attn_mask = jnp.broadcast_to(causal[None], (bs, n_dec_seq, n_dec_seq))
    # Dec-enc mask: pretend the last 3 encoder positions of batch element 1 are padding.
    enc_pad = jnp.zeros((bs, n_enc_seq), dtype=bool).at[1, -3:].set(True)
    dec_enc_attn_mask = jnp.broadcast_to(enc_pad[:, None, :], (bs, n_dec_seq, n_enc_seq))

    params = init_decoder_params(k_par, d_hidn, n_head, d_head, d_ff)

    # One-time capability probe outside any trace (Buffered(1) single-buffering).
    _ = _buffered_one_supported()

    fwd = jax.jit(functools.partial(decoder_forward, n_head=n_head, d_head=d_head, eps=eps))
    out, self_prob, cross_prob = fwd(
        params, dec_inputs, enc_outputs, self_attn_mask, dec_enc_attn_mask)
    out = jax.block_until_ready(out)

    ref_out, ref_sp, ref_cp = reference_decoder(
        params, dec_inputs, enc_outputs, self_attn_mask, dec_enc_attn_mask,
        n_head=n_head, d_head=d_head, eps=eps)

    assert out.shape == (bs, n_dec_seq, d_hidn)
    assert self_prob.shape == (bs, n_head, n_dec_seq, n_dec_seq)
    assert cross_prob.shape == (bs, n_head, n_dec_seq, n_enc_seq)
    assert jnp.allclose(out, ref_out, atol=2e-3, rtol=2e-3), "decoder output mismatch"
    assert jnp.allclose(self_prob, ref_sp, atol=2e-3, rtol=2e-3), "self-attn prob mismatch"
    assert jnp.allclose(cross_prob, ref_cp, atol=2e-3, rtol=2e-3), "dec-enc attn prob mismatch"

    print("KERNEL_OK")
</pallas_src>

<mosaic_0001>
module attributes {stable_mosaic.version = 11 : i64} {
  func.func @_probe(%arg0: i32, %arg1: memref<8x128xf32, #tpu.memory_space<vmem>>, %arg2: memref<8x128xf32, #tpu.memory_space<vmem>>, %arg3: memref<8x128xf32, #tpu.memory_space<vmem>>) attributes {dimension_semantics = [#tpu.dimension_semantics<arbitrary>], iteration_bounds = array<i64: 2>, scalar_prefetch = 0 : i64, scratch_operands = 0 : i64, tpu.core_type = #tpu.core_type<tc>, window_params = [{transform_indices = @transform_0, window_bounds = array<i64: 8, 128>}, {pipeline_mode = #tpu.pipeline_mode<synchronous>, transform_indices = @transform_1, window_bounds = array<i64: 8, 128>}, {transform_indices = @transform_2, window_bounds = array<i64: 8, 128>}]} {
    %c0 = arith.constant 0 : index
    %c0_0 = arith.constant 0 : index
    %0 = vector.load %arg1[%c0, %c0_0] : memref<8x128xf32, #tpu.memory_space<vmem>>, vector<8x128xf32>
    %c0_1 = arith.constant 0 : index
    %c0_2 = arith.constant 0 : index
    %1 = vector.load %arg2[%c0_1, %c0_2] : memref<8x128xf32, #tpu.memory_space<vmem>>, vector<8x128xf32>
    %2 = arith.addf %0, %1 : vector<8x128xf32>
    %c0_3 = arith.constant 0 : index
    %c0_4 = arith.constant 0 : index
    %3 = vector.load %arg3[%c0_3, %c0_4] : memref<8x128xf32, #tpu.memory_space<vmem>>, vector<8x128xf32>
    tpu.vector_store %arg3[%c0_3, %c0_4], %2 {strides = array<i32>} : memref<8x128xf32, #tpu.memory_space<vmem>>, vector<8x128xf32>,
    return
  }
  func.func @transform_0(%arg0: i32) -> (i32, i32) {
    %c0_i32 = arith.constant 0 : i32
    %c0_i32_0 = arith.constant 0 : i32
    return %arg0, %c0_i32 : i32, i32
  }
  func.func @transform_1(%arg0: i32) -> (i32, i32) {
    %c0_i32 = arith.constant 0 : i32
    %c0_i32_0 = arith.constant 0 : i32
    %c0_i32_1 = arith.constant 0 : i32
    return %c0_i32, %c0_i32_0 : i32, i32
  }
  func.func @transform_2(%arg0: i32) -> (i32, i32) {
    %c0_i32 = arith.constant 0 : i32
    %c0_i32_0 = arith.constant 0 : i32
    return %arg0, %c0_i32 : i32, i32
  }
}

module attributes {stable_mosaic.version = 11 : i64} {
  func.func @_attn_kernel(%arg0: i32, %arg1: memref<1x8x32xf32, #tpu.memory_space<vmem>>, %arg2: memref<1x8x32xf32, #tpu.memory_space<vmem>>, %arg3: memref<1x8x32xf32, #tpu.memory_space<vmem>>, %arg4: memref<1x8x8xi32, #tpu.memory_space<vmem>>, %arg5: memref<1x8x32xf32, #tpu.memory_space<vmem>>, %arg6: memref<1x4x8x8xf32, #tpu.memory_space<vmem>>) attributes {dimension_semantics = [#tpu.dimension_semantics<parallel>], iteration_bounds = array<i64: 2>, scalar_prefetch = 0 : i64, scratch_operands = 0 : i64, tpu.core_type = #tpu.core_type<tc>, window_params = [{transform_indices = @transform_0, window_bounds = array<i64: 1, 8, 32>}, {transform_indices = @transform_1, window_bounds = array<i64: 1, 8, 32>}, {transform_indices = @transform_2, window_bounds = array<i64: 1, 8, 32>}, {transform_indices = @transform_3, window_bounds = array<i64: 1, 8, 8>}, {transform_indices = @transform_4, window_bounds = array<i64: 1, 8, 32>}, {transform_indices = @transform_5, window_bounds = array<i64: 1, 4, 8, 8>}]} {
    %c0 = arith.constant 0 : index
    %c0_0 = arith.constant 0 : index
    %c0_1 = arith.constant 0 : index
    %0 = vector.load %arg1[%c0, %c0_0, %c0_1] : memref<1x8x32xf32, #tpu.memory_space<vmem>>, vector<1x8x32xf32>
    %1 = vector.shape_cast %0 : vector<1x8x32xf32> to vector<8x32xf32>
    %c0_2 = arith.constant 0 : index
    %c0_3 = arith.constant 0 : index
    %c0_4 = arith.constant 0 : index
    %2 = vector.load %arg2[%c0_2, %c0_3, %c0_4] : memref<1x8x32xf32, #tpu.memory_space<vmem>>, vector<1x8x32xf32>
    %3 = vector.shape_cast %2 : vector<1x8x32xf32> to vector<8x32xf32>
    %c0_5 = arith.constant 0 : index
    %c0_6 = arith.constant 0 : index
    %c0_7 = arith.constant 0 : index
    %4 = vector.load %arg3[%c0_5, %c0_6, %c0_7] : memref<1x8x32xf32, #tpu.memory_space<vmem>>, vector<1x8x32xf32>
    %5 = vector.shape_cast %4 : vector<1x8x32xf32> to vector<8x32xf32>
    %c0_8 = arith.constant 0 : index
    %c0_9 = arith.constant 0 : index
    %c0_10 = arith.constant 0 : index
    %6 = vector.load %arg4[%c0_8, %c0_9, %c0_10] : memref<1x8x8xi32, #tpu.memory_space<vmem>>, vector<1x8x8xi32>
    %7 = vector.shape_cast %6 : vector<1x8x8xi32> to vector<8x8xi32>
    %c0_i32 = arith.constant 0 : i32
    %8 = vector.broadcast %c0_i32 : i32 to vector<8x8xi32>
    %9 = arith.cmpi ne, %7, %8 : vector<8x8xi32>
    %10 = vector.extract_strided_slice %1 {offsets = [0, 0], sizes = [8, 8], strides = [1, 1]} : vector<8x32xf32> to vector<8x8xf32>
    %11 = vector.extract_strided_slice %3 {offsets = [0, 0], sizes = [8, 8], strides = [1, 1]} : vector<8x32xf32> to vector<8x8xf32>
    %12 = vector.extract_strided_slice %5 {offsets = [0, 0], sizes = [8, 8], strides = [1, 1]} : vector<8x32xf32> to vector<8x8xf32>
    %cst = arith.constant dense<0.000000e+00> : vector<8x8xf32>
    %13 = tpu.matmul %10, %11, %cst {dimension_numbers = #tpu.dot_dimension_numbers<[1], [1], [0], [0], [0, 0, 1, 0], [], []>} : vector<8x8xf32>, vector<8x8xf32>, vector<8x8xf32> -> vector<8x8xf32>
    %cst_11 = arith.constant 0.353553385 : f32
    %14 = vector.broadcast %cst_11 : f32 to vector<8x8xf32>
    %15 = arith.mulf %13, %14 : vector<8x8xf32>
    %cst_12 = arith.constant -1.000000e+09 : f32
    %16 = vector.broadcast %cst_12 : f32 to vector<8x8xf32>
    %17 = arith.select %9, %16, %15 : vector<8x8xi1>, vector<8x8xf32>
    %cst_13 = arith.constant dense<0xFF800000> : vector<8xf32>
    %18 = vector.multi_reduction <maximumf>, %17, %cst_13 [1] : vector<8x8xf32> to vector<8xf32>
    %19 = vector.shape_cast %18 : vector<8xf32> to vector<8x1xf32>
    %20 = vector.broadcast %19 : vector<8x1xf32> to vector<8x8xf32>
    %21 = arith.subf %17, %20 : vector<8x8xf32>
    %22 = math.exp %21 : vector<8x8xf32>
    %cst_14 = arith.constant dense<0.000000e+00> : vector<8xf32>
    %23 = vector.multi_reduction <add>, %22, %cst_14 [1] : vector<8x8xf32> to vector<8xf32>
    %24 = vector.shape_cast %23 : vector<8xf32> to vector<8x1xf32>
    %25 = tpu.reciprocal %24 {approx = true} : vector<8x1xf32> -> vector<8x1xf32>
    %26 = vector.broadcast %25 : vector<8x1xf32> to vector<8x8xf32>
    %27 = arith.mulf %22, %26 : vector<8x8xf32>
    %cst_15 = arith.constant dense<0.000000e+00> : vector<8x8xf32>
    %28 = tpu.matmul %27, %12, %cst_15 {dimension_numbers = #tpu.dot_dimension_numbers<[1], [0], [0], [1], [0, 0, 1, 1], [], []>} : vector<8x8xf32>, vector<8x8xf32>, vector<8x8xf32> -> vector<8x8xf32>
    %c0_16 = arith.constant 0 : index
    %c0_17 = arith.constant 0 : index
    %c0_18 = arith.constant 0 : index
    %c0_19 = arith.constant 0 : index
    %29 = vector.load %arg6[%c0_16, %c0_17, %c0_18, %c0_19] : memref<1x4x8x8xf32, #tpu.memory_space<vmem>>, vector<1x1x8x8xf32>
    %30 = vector.shape_cast %29 : vector<1x1x8x8xf32> to vector<8x8xf32>
    %31 = vector.shape_cast %27 : vector<8x8xf32> to vector<1x1x8x8xf32>
    tpu.vector_store %arg6[%c0_16, %c0_17, %c0_18, %c0_19], %31 {strides = array<i32>} : memref<1x4x8x8xf32, #tpu.memory_space<vmem>>, vector<1x1x8x8xf32>,
    %32 = vector.extract_strided_slice %1 {offsets = [0, 8], sizes = [8, 8], strides = [1, 1]} : vector<8x32xf32> to vector<8x8xf32>
    %33 = vector.extract_strided_slice %3 {offsets = [0, 8], sizes = [8, 8], strides = [1, 1]} : vector<8x32xf32> to vector<8x8xf32>
    %34 = vector.extract_strided_slice %5 {offsets = [0, 8], sizes = [8, 8], strides = [1, 1]} : vector<8x32xf32> to vector<8x8xf32>
    %cst_20 = arith.constant dense<0.000000e+00> : vector<8x8xf32>
    %35 = tpu.matmul %32, %33, %cst_20 {dimension_numbers = #tpu.dot_dimension_numbers<[1], [1], [0], [0], [0, 0, 1, 0], [], []>} : vector<8x8xf32>, vector<8x8xf32>, vector<8x8xf32> -> vector<8x8xf32>
    %cst_21 = arith.constant 0.353553385 : f32
    %36 = vector.broadcast %cst_21 : f32 to vector<8x8xf32>
    %37 = arith.mulf %35, %36 : vector<8x8xf32>
    %cst_22 = arith.constant -1.000000e+09 : f32
    %38 = vector.broadcast %cst_22 : f32 to vector<8x8xf32>
    %39 = arith.select %9, %38, %37 : vector<8x8xi1>, vector<8x8xf32>
    %cst_23 = arith.constant dense<0xFF800000> : vector<8xf32>
    %40 = vector.multi_reduction <maximumf>, %39, %cst_23 [1] : vector<8x8xf32> to vector<8xf32>
    %41 = vector.shape_cast %40 : vector<8xf32> to vector<8x1xf32>
    %42 = vector.broadcast %41 : vector<8x1xf32> to vector<8x8xf32>
    %43 = arith.subf %39, %42 : vector<8x8xf32>
    %44 = math.exp %43 : vector<8x8xf32>
    %cst_24 = arith.constant dense<0.000000e+00> : vector<8xf32>
    %45 = vector.multi_reduction <add>, %44, %cst_24 [1] : vector<8x8xf32> to vector<8xf32>
    %46 = vector.shape_cast %45 : vector<8xf32> to vector<8x1xf32>
    %47 = tpu.reciprocal %46 {approx = true} : vector<8x1xf32> -> vector<8x1xf32>
    %48 = vector.broadcast %47 : vector<8x1xf32> to vector<8x8xf32>
    %49 = arith.mulf %44, %48 : vector<8x8xf32>
    %cst_25 = arith.constant dense<0.000000e+00> : vector<8x8xf32>
    %50 = tpu.matmul %49, %34, %cst_25 {dimension_numbers = #tpu.dot_dimension_numbers<[1], [0], [0], [1], [0, 0, 1, 1], [], []>} : vector<8x8xf32>, vector<8x8xf32>, vector<8x8xf32> -> vector<8x8xf32>
    %c0_26 = arith.constant 0 : index
    %c1 = arith.constant 1 : index
    %c0_27 = arith.constant 0 : index
    %c0_28 = arith.constant 0 : index
    %51 = vector.load %arg6[%c0_26, %c1, %c0_27, %c0_28] : memref<1x4x8x8xf32, #tpu.memory_space<vmem>>, vector<1x1x8x8xf32>
    %52 = vector.shape_cast %51 : vector<1x1x8x8xf32> to vector<8x8xf32>
    %53 = vector.shape_cast %49 : vector<8x8xf32> to vector<1x1x8x8xf32>
    tpu.vector_store %arg6[%c0_26, %c1, %c0_27, %c0_28], %53 {strides = array<i32>} : memref<1x4x8x8xf32, #tpu.memory_space<vmem>>, vector<1x1x8x8xf32>,
    %54 = vector.extract_strided_slice %1 {offsets = [0, 16], sizes = [8, 8], strides = [1, 1]} : vector<8x32xf32> to vector<8x8xf32>
    %55 = vector.extract_strided_slice %3 {offsets = [0, 16], sizes = [8, 8], strides = [1, 1]} : vector<8x32xf32> to vector<8x8xf32>
    %56 = vector.extract_strided_slice %5 {offsets = [0, 16], sizes = [8, 8], strides = [1, 1]} : vector<8x32xf32> to vector<8x8xf32>
    %cst_29 = arith.constant dense<0.000000e+00> : vector<8x8xf32>
    %57 = tpu.matmul %54, %55, %cst_29 {dimension_numbers = #tpu.dot_dimension_numbers<[1], [1], [0], [0], [0, 0, 1, 0], [], []>} : vector<8x8xf32>, vector<8x8xf32>, vector<8x8xf32> -> vector<8x8xf32>
    %cst_30 = arith.constant 0.353553385 : f32
    %58 = vector.broadcast %cst_30 : f32 to vector<8x8xf32>
    %59 = arith.mulf %57, %58 : vector<8x8xf32>
    %cst_31 = arith.constant -1.000000e+09 : f32
    %60 = vector.broadcast %cst_31 : f32 to vector<8x8xf32>
    %61 = arith.select %9, %60, %59 : vector<8x8xi1>, vector<8x8xf32>
    %cst_32 = arith.constant dense<0xFF800000> : vector<8xf32>
    %62 = vector.multi_reduction <maximumf>, %61, %cst_32 [1] : vector<8x8xf32> to vector<8xf32>
    %63 = vector.shape_cast %62 : vector<8xf32> to vector<8x1xf32>
    %64 = vector.broadcast %63 : vector<8x1xf32> to vector<8x8xf32>
    %65 = arith.subf %61, %64 : vector<8x8xf32>
    %66 = math.exp %65 : vector<8x8xf32>
    %cst_33 = arith.constant dense<0.000000e+00> : vector<8xf32>
    %67 = vector.multi_reduction <add>, %66, %cst_33 [1] : vector<8x8xf32> to vector<8xf32>
    %68 = vector.shape_cast %67 : vector<8xf32> to vector<8x1xf32>
    %69 = tpu.reciprocal %68 {approx = true} : vector<8x1xf32> -> vector<8x1xf32>
    %70 = vector.broadcast %69 : vector<8x1xf32> to vector<8x8xf32>
    %71 = arith.mulf %66, %70 : vector<8x8xf32>
    %cst_34 = arith.constant dense<0.000000e+00> : vector<8x8xf32>
    %72 = tpu.matmul %71, %56, %cst_34 {dimension_numbers = #tpu.dot_dimension_numbers<[1], [0], [0], [1], [0, 0, 1, 1], [], []>} : vector<8x8xf32>, vector<8x8xf32>, vector<8x8xf32> -> vector<8x8xf32>
    %c0_35 = arith.constant 0 : index
    %c2 = arith.constant 2 : index
    %c0_36 = arith.constant 0 : index
    %c0_37 = arith.constant 0 : index
    %73 = vector.load %arg6[%c0_35, %c2, %c0_36, %c0_37] : memref<1x4x8x8xf32, #tpu.memory_space<vmem>>, vector<1x1x8x8xf32>
    %74 = vector.shape_cast %73 : vector<1x1x8x8xf32> to vector<8x8xf32>
    %75 = vector.shape_cast %71 : vector<8x8xf32> to vector<1x1x8x8xf32>
    tpu.vector_store %arg6[%c0_35, %c2, %c0_36, %c0_37], %75 {strides = array<i32>} : memref<1x4x8x8xf32, #tpu.memory_space<vmem>>, vector<1x1x8x8xf32>,
    %76 = vector.extract_strided_slice %1 {offsets = [0, 24], sizes = [8, 8], strides = [1, 1]} : vector<8x32xf32> to vector<8x8xf32>
    %77 = vector.extract_strided_slice %3 {offsets = [0, 24], sizes = [8, 8], strides = [1, 1]} : vector<8x32xf32> to vector<8x8xf32>
    %78 = vector.extract_strided_slice %5 {offsets = [0, 24], sizes = [8, 8], strides = [1, 1]} : vector<8x32xf32> to vector<8x8xf32>
    %cst_38 = arith.constant dense<0.000000e+00> : vector<8x8xf32>
    %79 = tpu.matmul %76, %77, %cst_38 {dimension_numbers = #tpu.dot_dimension_numbers<[1], [1], [0], [0], [0, 0, 1, 0], [], []>} : vector<8x8xf32>, vector<8x8xf32>, vector<8x8xf32> -> vector<8x8xf32>
    %cst_39 = arith.constant 0.353553385 : f32
    %80 = vector.broadcast %cst_39 : f32 to vector<8x8xf32>
    %81 = arith.mulf %79, %80 : vector<8x8xf32>
    %cst_40 = arith.constant -1.000000e+09 : f32
    %82 = vector.broadcast %cst_40 : f32 to vector<8x8xf32>
    %83 = arith.select %9, %82, %81 : vector<8x8xi1>, vector<8x8xf32>
    %cst_41 = arith.constant dense<0xFF800000> : vector<8xf32>
    %84 = vector.multi_reduction <maximumf>, %83, %cst_41 [1] : vector<8x8xf32> to vector<8xf32>
    %85 = vector.shape_cast %84 : vector<8xf32> to vector<8x1xf32>
    %86 = vector.broadcast %85 : vector<8x1xf32> to vector<8x8xf32>
    %87 = arith.subf %83, %86 : vector<8x8xf32>
    %88 = math.exp %87 : vector<8x8xf32>
    %cst_42 = arith.constant dense<0.000000e+00> : vector<8xf32>
    %89 = vector.multi_reduction <add>, %88, %cst_42 [1] : vector<8x8xf32> to vector<8xf32>
    %90 = vector.shape_cast %89 : vector<8xf32> to vector<8x1xf32>
    %91 = tpu.reciprocal %90 {approx = true} : vector<8x1xf32> -> vector<8x1xf32>
    %92 = vector.broadcast %91 : vector<8x1xf32> to vector<8x8xf32>
    %93 = arith.mulf %88, %92 : vector<8x8xf32>
    %cst_43 = arith.constant dense<0.000000e+00> : vector<8x8xf32>
    %94 = tpu.matmul %93, %78, %cst_43 {dimension_numbers = #tpu.dot_dimension_numbers<[1], [0], [0], [1], [0, 0, 1, 1], [], []>} : vector<8x8xf32>, vector<8x8xf32>, vector<8x8xf32> -> vector<8x8xf32>
    %c0_44 = arith.constant 0 : index
    %c3 = arith.constant 3 : index
    %c0_45 = arith.constant 0 : index
    %c0_46 = arith.constant 0 : index
    %95 = vector.load %arg6[%c0_44, %c3, %c0_45, %c0_46] : memref<1x4x8x8xf32, #tpu.memory_space<vmem>>, vector<1x1x8x8xf32>
    %96 = vector.shape_cast %95 : vector<1x1x8x8xf32> to vector<8x8xf32>
    %97 = vector.shape_cast %93 : vector<8x8xf32> to vector<1x1x8x8xf32>
    tpu.vector_store %arg6[%c0_44, %c3, %c0_45, %c0_46], %97 {strides = array<i32>} : memref<1x4x8x8xf32, #tpu.memory_space<vmem>>, vector<1x1x8x8xf32>,
    %98 = tpu.concatenate %28, %50, %72, %94 in 1 : vector<8x8xf32>, vector<8x8xf32>, vector<8x8xf32>, vector<8x8xf32> -> vector<8x32xf32>
    %c0_47 = arith.constant 0 : index
    %c0_48 = arith.constant 0 : index
    %c0_49 = arith.constant 0 : index
    %99 = vector.load %arg5[%c0_47, %c0_48, %c0_49] : memref<1x8x32xf32, #tpu.memory_space<vmem>>, vector<1x8x32xf32>
    %100 = vector.shape_cast %99 : vector<1x8x32xf32> to vector<8x32xf32>
    %101 = vector.shape_cast %98 : vector<8x32xf32> to vector<1x8x32xf32>
    tpu.vector_store %arg5[%c0_47, %c0_48, %c0_49], %101 {strides = array<i32>} : memref<1x8x32xf32, #tpu.memory_space<vmem>>, vector<1x8x32xf32>,
    return
  }
  func.func @transform_0(%arg0: i32) -> (i32, i32, i32) {
    %c0_i32 = arith.constant 0 : i32
    %c0_i32_0 = arith.constant 0 : i32
    %c0_i32_1 = arith.constant 0 : i32
    return %arg0, %c0_i32, %c0_i32_0 : i32, i32, i32
  }
  func.func @transform_1(%arg0: i32) -> (i32, i32, i32) {
    %c0_i32 = arith.constant 0 : i32
    %c0_i32_0 = arith.constant 0 : i32
    %c0_i32_1 = arith.constant 0 : i32
    return %arg0, %c0_i32, %c0_i32_0 : i32, i32, i32
  }
  func.func @transform_2(%arg0: i32) -> (i32, i32, i32) {
    %c0_i32 = arith.constant 0 : i32
    %c0_i32_0 = arith.constant 0 : i32
    %c0_i32_1 = arith.constant 0 : i32
    return %arg0, %c0_i32, %c0_i32_0 : i32, i32, i32
  }
  func.func @transform_3(%arg0: i32) -> (i32, i32, i32) {
    %c0_i32 = arith.constant 0 : i32
    %c0_i32_0 = arith.constant 0 : i32
    %c0_i32_1 = arith.constant 0 : i32
    return %arg0, %c0_i32, %c0_i32_0 : i32, i32, i32
  }
  func.func @transform_4(%arg0: i32) -> (i32, i32, i32) {
    %c0_i32 = arith.constant 0 : i32
    %c0_i32_0 = arith.constant 0 : i32
    %c0_i32_1 = arith.constant 0 : i32
    return %arg0, %c0_i32, %c0_i32_0 : i32, i32, i32
  }
  func.func @transform_5(%arg0: i32) -> (i32, i32, i32, i32) {
    %c0_i32 = arith.constant 0 : i32
    %c0_i32_0 = arith.constant 0 : i32
    %c0_i32_1 = arith.constant 0 : i32
    %c0_i32_2 = arith.constant 0 : i32
    return %arg0, %c0_i32, %c0_i32_0, %c0_i32_1 : i32, i32, i32, i32
  }
}

module attributes {stable_mosaic.version = 11 : i64} {
  func.func @_linear_kernel(%arg0: i32, %arg1: memref<8x32xf32, #tpu.memory_space<vmem>>, %arg2: memref<96x32xf32, #tpu.memory_space<vmem>>, %arg3: memref<1x96xf32, #tpu.memory_space<vmem>>, %arg4: memref<8x96xf32, #tpu.memory_space<vmem>>) attributes {dimension_semantics = [#tpu.dimension_semantics<parallel>], iteration_bounds = array<i64: 2>, scalar_prefetch = 0 : i64, scratch_operands = 0 : i64, tpu.core_type = #tpu.core_type<tc>, window_params = [{transform_indices = @transform_0, window_bounds = array<i64: 8, 32>}, {pipeline_mode = #tpu.pipeline_mode<synchronous>, transform_indices = @transform_1, window_bounds = array<i64: 96, 32>}, {pipeline_mode = #tpu.pipeline_mode<synchronous>, transform_indices = @transform_2, window_bounds = array<i64: 1, 96>}, {transform_indices = @transform_3, window_bounds = array<i64: 8, 96>}]} {
    %c0 = arith.constant 0 : index
    %c0_0 = arith.constant 0 : index
    %0 = vector.load %arg1[%c0, %c0_0] : memref<8x32xf32, #tpu.memory_space<vmem>>, vector<8x32xf32>
    %c0_1 = arith.constant 0 : index
    %c0_2 = arith.constant 0 : index
    %1 = vector.load %arg2[%c0_1, %c0_2] : memref<96x32xf32, #tpu.memory_space<vmem>>, vector<96x32xf32>
    %cst = arith.constant dense<0.000000e+00> : vector<8x96xf32>
    %2 = tpu.matmul %0, %1, %cst {dimension_numbers = #tpu.dot_dimension_numbers<[1], [1], [0], [0], [0, 0, 1, 0], [], []>} : vector<8x32xf32>, vector<96x32xf32>, vector<8x96xf32> -> vector<8x96xf32>
    %c0_3 = arith.constant 0 : index
    %c0_4 = arith.constant 0 : index
    %3 = vector.load %arg3[%c0_3, %c0_4] : memref<1x96xf32, #tpu.memory_space<vmem>>, vector<1x96xf32>
    %4 = vector.broadcast %3 : vector<1x96xf32> to vector<8x96xf32>
    %5 = arith.addf %2, %4 : vector<8x96xf32>
    %c0_5 = arith.constant 0 : index
    %c0_6 = arith.constant 0 : index
    %6 = vector.load %arg4[%c0_5, %c0_6] : memref<8x96xf32, #tpu.memory_space<vmem>>, vector<8x96xf32>
    tpu.vector_store %arg4[%c0_5, %c0_6], %5 {strides = array<i32>} : memref<8x96xf32, #tpu.memory_space<vmem>>, vector<8x96xf32>,
    return
  }
  func.func @transform_0(%arg0: i32) -> (i32, i32) {
    %c0_i32 = arith.constant 0 : i32
    %c0_i32_0 = arith.constant 0 : i32
    return %arg0, %c0_i32 : i32, i32
  }
  func.func @transform_1(%arg0: i32) -> (i32, i32) {
    %c0_i32 = arith.constant 0 : i32
    %c0_i32_0 = arith.constant 0 : i32
    %c0_i32_1 = arith.constant 0 : i32
    return %c0_i32, %c0_i32_0 : i32, i32
  }
  func.func @transform_2(%arg0: i32) -> (i32, i32) {
    %c0_i32 = arith.constant 0 : i32
    %c0_i32_0 = arith.constant 0 : i32
    %c0_i32_1 = arith.constant 0 : i32
    return %c0_i32, %c0_i32_0 : i32, i32
  }
  func.func @transform_3(%arg0: i32) -> (i32, i32) {
    %c0_i32 = arith.constant 0 : i32
    %c0_i32_0 = arith.constant 0 : i32
    return %arg0, %c0_i32 : i32, i32
  }
}

module attributes {stable_mosaic.version = 11 : i64} {
  func.func @_linear_kernel(%arg0: i32, %arg1: memref<8x32xf32, #tpu.memory_space<vmem>>, %arg2: memref<32x32xf32, #tpu.memory_space<vmem>>, %arg3: memref<1x32xf32, #tpu.memory_space<vmem>>, %arg4: memref<8x32xf32, #tpu.memory_space<vmem>>) attributes {dimension_semantics = [#tpu.dimension_semantics<parallel>], iteration_bounds = array<i64: 2>, scalar_prefetch = 0 : i64, scratch_operands = 0 : i64, tpu.core_type = #tpu.core_type<tc>, window_params = [{transform_indices = @transform_0, window_bounds = array<i64: 8, 32>}, {pipeline_mode = #tpu.pipeline_mode<synchronous>, transform_indices = @transform_1, window_bounds = array<i64: 32, 32>}, {pipeline_mode = #tpu.pipeline_mode<synchronous>, transform_indices = @transform_2, window_bounds = array<i64: 1, 32>}, {transform_indices = @transform_3, window_bounds = array<i64: 8, 32>}]} {
    %c0 = arith.constant 0 : index
    %c0_0 = arith.constant 0 : index
    %0 = vector.load %arg1[%c0, %c0_0] : memref<8x32xf32, #tpu.memory_space<vmem>>, vector<8x32xf32>
    %c0_1 = arith.constant 0 : index
    %c0_2 = arith.constant 0 : index
    %1 = vector.load %arg2[%c0_1, %c0_2] : memref<32x32xf32, #tpu.memory_space<vmem>>, vector<32x32xf32>
    %cst = arith.constant dense<0.000000e+00> : vector<8x32xf32>
    %2 = tpu.matmul %0, %1, %cst {dimension_numbers = #tpu.dot_dimension_numbers<[1], [1], [0], [0], [0, 0, 1, 0], [], []>} : vector<8x32xf32>, vector<32x32xf32>, vector<8x32xf32> -> vector<8x32xf32>
    %c0_3 = arith.constant 0 : index
    %c0_4 = arith.constant 0 : index
    %3 = vector.load %arg3[%c0_3, %c0_4] : memref<1x32xf32, #tpu.memory_space<vmem>>, vector<1x32xf32>
    %4 = vector.broadcast %3 : vector<1x32xf32> to vector<8x32xf32>
    %5 = arith.addf %2, %4 : vector<8x32xf32>
    %c0_5 = arith.constant 0 : index
    %c0_6 = arith.constant 0 : index
    %6 = vector.load %arg4[%c0_5, %c0_6] : memref<8x32xf32, #tpu.memory_space<vmem>>, vector<8x32xf32>
    tpu.vector_store %arg4[%c0_5, %c0_6], %5 {strides = array<i32>} : memref<8x32xf32, #tpu.memory_space<vmem>>, vector<8x32xf32>,
    return
  }
  func.func @transform_0(%arg0: i32) -> (i32, i32) {
    %c0_i32 = arith.constant 0 : i32
    %c0_i32_0 = arith.constant 0 : i32
    return %arg0, %c0_i32 : i32, i32
  }
  func.func @transform_1(%arg0: i32) -> (i32, i32) {
    %c0_i32 = arith.constant 0 : i32
    %c0_i32_0 = arith.constant 0 : i32
    %c0_i32_1 = arith.constant 0 : i32
    return %c0_i32, %c0_i32_0 : i32, i32
  }
  func.func @transform_2(%arg0: i32) -> (i32, i32) {
    %c0_i32 = arith.constant 0 : i32
    %c0_i32_0 = arith.constant 0 : i32
    %c0_i32_1 = arith.constant 0 : i32
    return %c0_i32, %c0_i32_0 : i32, i32
  }
  func.func @transform_3(%arg0: i32) -> (i32, i32) {
    %c0_i32 = arith.constant 0 : i32
    %c0_i32_0 = arith.constant 0 : i32
    return %arg0, %c0_i32 : i32, i32
  }
}

module attributes {stable_mosaic.version = 11 : i64} {
  func.func @_add_ln_kernel(%arg0: i32, %arg1: memref<8x32xf32, #tpu.memory_space<vmem>>, %arg2: memref<8x32xf32, #tpu.memory_space<vmem>>, %arg3: memref<1x32xf32, #tpu.memory_space<vmem>>, %arg4: memref<1x32xf32, #tpu.memory_space<vmem>>, %arg5: memref<8x32xf32, #tpu.memory_space<vmem>>) attributes {dimension_semantics = [#tpu.dimension_semantics<parallel>], iteration_bounds = array<i64: 2>, scalar_prefetch = 0 : i64, scratch_operands = 0 : i64, tpu.core_type = #tpu.core_type<tc>, window_params = [{transform_indices = @transform_0, window_bounds = array<i64: 8, 32>}, {transform_indices = @transform_1, window_bounds = array<i64: 8, 32>}, {pipeline_mode = #tpu.pipeline_mode<synchronous>, transform_indices = @transform_2, window_bounds = array<i64: 1, 32>}, {pipeline_mode = #tpu.pipeline_mode<synchronous>, transform_indices = @transform_3, window_bounds = array<i64: 1, 32>}, {transform_indices = @transform_4, window_bounds = array<i64: 8, 32>}]} {
    %c0 = arith.constant 0 : index
    %c0_0 = arith.constant 0 : index
    %0 = vector.load %arg1[%c0, %c0_0] : memref<8x32xf32, #tpu.memory_space<vmem>>, vector<8x32xf32>
    %c0_1 = arith.constant 0 : index
    %c0_2 = arith.constant 0 : index
    %1 = vector.load %arg2[%c0_1, %c0_2] : memref<8x32xf32, #tpu.memory_space<vmem>>, vector<8x32xf32>
    %2 = arith.addf %0, %1 : vector<8x32xf32>
    %cst = arith.constant dense<0.000000e+00> : vector<8xf32>
    %3 = vector.multi_reduction <add>, %2, %cst [1] : vector<8x32xf32> to vector<8xf32>
    %4 = vector.shape_cast %3 : vector<8xf32> to vector<8x1xf32>
    %cst_3 = arith.constant 3.200000e+01 : f32
    %5 = vector.broadcast %cst_3 : f32 to vector<8x1xf32>
    %6 = arith.divf %4, %5 : vector<8x1xf32>
    %7 = vector.broadcast %6 : vector<8x1xf32> to vector<8x32xf32>
    %8 = arith.subf %2, %7 : vector<8x32xf32>
    %9 = arith.mulf %8, %8 : vector<8x32xf32>
    %cst_4 = arith.constant dense<0.000000e+00> : vector<8xf32>
    %10 = vector.multi_reduction <add>, %9, %cst_4 [1] : vector<8x32xf32> to vector<8xf32>
    %11 = vector.shape_cast %10 : vector<8xf32> to vector<8x1xf32>
    %cst_5 = arith.constant 3.200000e+01 : f32
    %12 = vector.broadcast %cst_5 : f32 to vector<8x1xf32>
    %13 = arith.divf %11, %12 : vector<8x1xf32>
    %cst_6 = arith.constant 9.99999996E-13 : f32
    %14 = vector.broadcast %cst_6 : f32 to vector<8x1xf32>
    %15 = arith.addf %13, %14 : vector<8x1xf32>
    %16 = math.rsqrt %15 : vector<8x1xf32>
    %17 = vector.broadcast %16 : vector<8x1xf32> to vector<8x32xf32>
    %18 = arith.mulf %8, %17 : vector<8x32xf32>
    %c0_7 = arith.constant 0 : index
    %c0_8 = arith.constant 0 : index
    %19 = vector.load %arg3[%c0_7, %c0_8] : memref<1x32xf32, #tpu.memory_space<vmem>>, vector<1x32xf32>
    %20 = vector.broadcast %19 : vector<1x32xf32> to vector<8x32xf32>
    %21 = arith.mulf %18, %20 : vector<8x32xf32>
    %c0_9 = arith.constant 0 : index
    %c0_10 = arith.constant 0 : index
    %22 = vector.load %arg4[%c0_9, %c0_10] : memref<1x32xf32, #tpu.memory_space<vmem>>, vector<1x32xf32>
    %23 = vector.broadcast %22 : vector<1x32xf32> to vector<8x32xf32>
    %24 = arith.addf %21, %23 : vector<8x32xf32>
    %c0_11 = arith.constant 0 : index
    %c0_12 = arith.constant 0 : index
    %25 = vector.load %arg5[%c0_11, %c0_12] : memref<8x32xf32, #tpu.memory_space<vmem>>, vector<8x32xf32>
    tpu.vector_store %arg5[%c0_11, %c0_12], %24 {strides = array<i32>} : memref<8x32xf32, #tpu.memory_space<vmem>>, vector<8x32xf32>,
    return
  }
  func.func @transform_0(%arg0: i32) -> (i32, i32) {
    %c0_i32 = arith.constant 0 : i32
    %c0_i32_0 = arith.constant 0 : i32
    return %arg0, %c0_i32 : i32, i32
  }
  func.func @transform_1(%arg0: i32) -> (i32, i32) {
    %c0_i32 = arith.constant 0 : i32
    %c0_i32_0 = arith.constant 0 : i32
    return %arg0, %c0_i32 : i32, i32
  }
  func.func @transform_2(%arg0: i32) -> (i32, i32) {
    %c0_i32 = arith.constant 0 : i32
    %c0_i32_0 = arith.constant 0 : i32
    %c0_i32_1 = arith.constant 0 : i32
    return %c0_i32, %c0_i32_0 : i32, i32
  }
  func.func @transform_3(%arg0: i32) -> (i32, i32) {
    %c0_i32 = arith.constant 0 : i32
    %c0_i32_0 = arith.constant 0 : i32
    %c0_i32_1 = arith.constant 0 : i32
    return %c0_i32, %c0_i32_0 : i32, i32
  }
  func.func @transform_4(%arg0: i32) -> (i32, i32) {
    %c0_i32 = arith.constant 0 : i32
    %c0_i32_0 = arith.constant 0 : i32
    return %arg0, %c0_i32 : i32, i32
  }
}

module attributes {stable_mosaic.version = 11 : i64} {
  func.func @_linear_kernel(%arg0: i32, %arg1: memref<16x32xf32, #tpu.memory_space<vmem>>, %arg2: memref<64x32xf32, #tpu.memory_space<vmem>>, %arg3: memref<1x64xf32, #tpu.memory_space<vmem>>, %arg4: memref<16x64xf32, #tpu.memory_space<vmem>>) attributes {dimension_semantics = [#tpu.dimension_semantics<parallel>], iteration_bounds = array<i64: 2>, scalar_prefetch = 0 : i64, scratch_operands = 0 : i64, tpu.core_type = #tpu.core_type<tc>, window_params = [{transform_indices = @transform_0, window_bounds = array<i64: 16, 32>}, {pipeline_mode = #tpu.pipeline_mode<synchronous>, transform_indices = @transform_1, window_bounds = array<i64: 64, 32>}, {pipeline_mode = #tpu.pipeline_mode<synchronous>, transform_indices = @transform_2, window_bounds = array<i64: 1, 64>}, {transform_indices = @transform_3, window_bounds = array<i64: 16, 64>}]} {
    %c0 = arith.constant 0 : index
    %c0_0 = arith.constant 0 : index
    %0 = vector.load %arg1[%c0, %c0_0] : memref<16x32xf32, #tpu.memory_space<vmem>>, vector<16x32xf32>
    %c0_1 = arith.constant 0 : index
    %c0_2 = arith.constant 0 : index
    %1 = vector.load %arg2[%c0_1, %c0_2] : memref<64x32xf32, #tpu.memory_space<vmem>>, vector<64x32xf32>
    %cst = arith.constant dense<0.000000e+00> : vector<16x64xf32>
    %2 = tpu.matmul %0, %1, %cst {dimension_numbers = #tpu.dot_dimension_numbers<[1], [1], [0], [0], [0, 0, 1, 0], [], []>} : vector<16x32xf32>, vector<64x32xf32>, vector<16x64xf32> -> vector<16x64xf32>
    %c0_3 = arith.constant 0 : index
    %c0_4 = arith.constant 0 : index
    %3 = vector.load %arg3[%c0_3, %c0_4] : memref<1x64xf32, #tpu.memory_space<vmem>>, vector<1x64xf32>
    %4 = vector.broadcast %3 : vector<1x64xf32> to vector<16x64xf32>
    %5 = arith.addf %2, %4 : vector<16x64xf32>
    %c0_5 = arith.constant 0 : index
    %c0_6 = arith.constant 0 : index
    %6 = vector.load %arg4[%c0_5, %c0_6] : memref<16x64xf32, #tpu.memory_space<vmem>>, vector<16x64xf32>
    tpu.vector_store %arg4[%c0_5, %c0_6], %5 {strides = array<i32>} : memref<16x64xf32, #tpu.memory_space<vmem>>, vector<16x64xf32>,
    return
  }
  func.func @transform_0(%arg0: i32) -> (i32, i32) {
    %c0_i32 = arith.constant 0 : i32
    %c0_i32_0 = arith.constant 0 : i32
    return %arg0, %c0_i32 : i32, i32
  }
  func.func @transform_1(%arg0: i32) -> (i32, i32) {
    %c0_i32 = arith.constant 0 : i32
    %c0_i32_0 = arith.constant 0 : i32
    %c0_i32_1 = arith.constant 0 : i32
    return %c0_i32, %c0_i32_0 : i32, i32
  }
  func.func @transform_2(%arg0: i32) -> (i32, i32) {
    %c0_i32 = arith.constant 0 : i32
    %c0_i32_0 = arith.constant 0 : i32
    %c0_i32_1 = arith.constant 0 : i32
    return %c0_i32, %c0_i32_0 : i32, i32
  }
  func.func @transform_3(%arg0: i32) -> (i32, i32) {
    %c0_i32 = arith.constant 0 : i32
    %c0_i32_0 = arith.constant 0 : i32
    return %arg0, %c0_i32 : i32, i32
  }
}

module attributes {stable_mosaic.version = 11 : i64} {
  func.func @_attn_kernel(%arg0: i32, %arg1: memref<1x8x32xf32, #tpu.memory_space<vmem>>, %arg2: memref<1x16x32xf32, #tpu.memory_space<vmem>>, %arg3: memref<1x16x32xf32, #tpu.memory_space<vmem>>, %arg4: memref<1x8x16xi32, #tpu.memory_space<vmem>>, %arg5: memref<1x8x32xf32, #tpu.memory_space<vmem>>, %arg6: memref<1x4x8x16xf32, #tpu.memory_space<vmem>>) attributes {dimension_semantics = [#tpu.dimension_semantics<parallel>], iteration_bounds = array<i64: 2>, scalar_prefetch = 0 : i64, scratch_operands = 0 : i64, tpu.core_type = #tpu.core_type<tc>, window_params = [{transform_indices = @transform_0, window_bounds = array<i64: 1, 8, 32>}, {transform_indices = @transform_1, window_bounds = array<i64: 1, 16, 32>}, {transform_indices = @transform_2, window_bounds = array<i64: 1, 16, 32>}, {transform_indices = @transform_3, window_bounds = array<i64: 1, 8, 16>}, {transform_indices = @transform_4, window_bounds = array<i64: 1, 8, 32>}, {transform_indices = @transform_5, window_bounds = array<i64: 1, 4, 8, 16>}]} {
    %c0 = arith.constant 0 : index
    %c0_0 = arith.constant 0 : index
    %c0_1 = arith.constant 0 : index
    %0 = vector.load %arg1[%c0, %c0_0, %c0_1] : memref<1x8x32xf32, #tpu.memory_space<vmem>>, vector<1x8x32xf32>
    %1 = vector.shape_cast %0 : vector<1x8x32xf32> to vector<8x32xf32>
    %c0_2 = arith.constant 0 : index
    %c0_3 = arith.constant 0 : index
    %c0_4 = arith.constant 0 : index
    %2 = vector.load %arg2[%c0_2, %c0_3, %c0_4] : memref<1x16x32xf32, #tpu.memory_space<vmem>>, vector<1x16x32xf32>
    %3 = vector.shape_cast %2 : vector<1x16x32xf32> to vector<16x32xf32>
    %c0_5 = arith.constant 0 : index
    %c0_6 = arith.constant 0 : index
    %c0_7 = arith.constant 0 : index
    %4 = vector.load %arg3[%c0_5, %c0_6, %c0_7] : memref<1x16x32xf32, #tpu.memory_space<vmem>>, vector<1x16x32xf32>
    %5 = vector.shape_cast %4 : vector<1x16x32xf32> to vector<16x32xf32>
    %c0_8 = arith.constant 0 : index
    %c0_9 = arith.constant 0 : index
    %c0_10 = arith.constant 0 : index
    %6 = vector.load %arg4[%c0_8, %c0_9, %c0_10] : memref<1x8x16xi32, #tpu.memory_space<vmem>>, vector<1x8x16xi32>
    %7 = vector.shape_cast %6 : vector<1x8x16xi32> to vector<8x16xi32>
    %c0_i32 = arith.constant 0 : i32
    %8 = vector.broadcast %c0_i32 : i32 to vector<8x16xi32>
    %9 = arith.cmpi ne, %7, %8 : vector<8x16xi32>
    %10 = vector.extract_strided_slice %1 {offsets = [0, 0], sizes = [8, 8], strides = [1, 1]} : vector<8x32xf32> to vector<8x8xf32>
    %11 = vector.extract_strided_slice %3 {offsets = [0, 0], sizes = [16, 8], strides = [1, 1]} : vector<16x32xf32> to vector<16x8xf32>
    %12 = vector.extract_strided_slice %5 {offsets = [0, 0], sizes = [16, 8], strides = [1, 1]} : vector<16x32xf32> to vector<16x8xf32>
    %cst = arith.constant dense<0.000000e+00> : vector<8x16xf32>
    %13 = tpu.matmul %10, %11, %cst {dimension_numbers = #tpu.dot_dimension_numbers<[1], [1], [0], [0], [0, 0, 1, 0], [], []>} : vector<8x8xf32>, vector<16x8xf32>, vector<8x16xf32> -> vector<8x16xf32>
    %cst_11 = arith.constant 0.353553385 : f32
    %14 = vector.broadcast %cst_11 : f32 to vector<8x16xf32>
    %15 = arith.mulf %13, %14 : vector<8x16xf32>
    %cst_12 = arith.constant -1.000000e+09 : f32
    %16 = vector.broadcast %cst_12 : f32 to vector<8x16xf32>
    %17 = arith.select %9, %16, %15 : vector<8x16xi1>, vector<8x16xf32>
    %cst_13 = arith.constant dense<0xFF800000> : vector<8xf32>
    %18 = vector.multi_reduction <maximumf>, %17, %cst_13 [1] : vector<8x16xf32> to vector<8xf32>
    %19 = vector.shape_cast %18 : vector<8xf32> to vector<8x1xf32>
    %20 = vector.broadcast %19 : vector<8x1xf32> to vector<8x16xf32>
    %21 = arith.subf %17, %20 : vector<8x16xf32>
    %22 = math.exp %21 : vector<8x16xf32>
    %cst_14 = arith.constant dense<0.000000e+00> : vector<8xf32>
    %23 = vector.multi_reduction <add>, %22, %cst_14 [1] : vector<8x16xf32> to vector<8xf32>
    %24 = vector.shape_cast %23 : vector<8xf32> to vector<8x1xf32>
    %25 = tpu.reciprocal %24 {approx = true} : vector<8x1xf32> -> vector<8x1xf32>
    %26 = vector.broadcast %25 : vector<8x1xf32> to vector<8x16xf32>
    %27 = arith.mulf %22, %26 : vector<8x16xf32>
    %cst_15 = arith.constant dense<0.000000e+00> : vector<8x8xf32>
    %28 = tpu.matmul %27, %12, %cst_15 {dimension_numbers = #tpu.dot_dimension_numbers<[1], [0], [0], [1], [0, 0, 1, 1], [], []>} : vector<8x16xf32>, vector<16x8xf32>, vector<8x8xf32> -> vector<8x8xf32>
    %c0_16 = arith.constant 0 : index
    %c0_17 = arith.constant 0 : index
    %c0_18 = arith.constant 0 : index
    %c0_19 = arith.constant 0 : index
    %29 = vector.load %arg6[%c0_16, %c0_17, %c0_18, %c0_19] : memref<1x4x8x16xf32, #tpu.memory_space<vmem>>, vector<1x1x8x16xf32>
    %30 = vector.shape_cast %29 : vector<1x1x8x16xf32> to vector<8x16xf32>
    %31 = vector.shape_cast %27 : vector<8x16xf32> to vector<1x1x8x16xf32>
    tpu.vector_store %arg6[%c0_16, %c0_17, %c0_18, %c0_19], %31 {strides = array<i32>} : memref<1x4x8x16xf32, #tpu.memory_space<vmem>>, vector<1x1x8x16xf32>,
    %32 = vector.extract_strided_slice %1 {offsets = [0, 8], sizes = [8, 8], strides = [1, 1]} : vector<8x32xf32> to vector<8x8xf32>
    %33 = vector.extract_strided_slice %3 {offsets = [0, 8], sizes = [16, 8], strides = [1, 1]} : vector<16x32xf32> to vector<16x8xf32>
    %34 = vector.extract_strided_slice %5 {offsets = [0, 8], sizes = [16, 8], strides = [1, 1]} : vector<16x32xf32> to vector<16x8xf32>
    %cst_20 = arith.constant dense<0.000000e+00> : vector<8x16xf32>
    %35 = tpu.matmul %32, %33, %cst_20 {dimension_numbers = #tpu.dot_dimension_numbers<[1], [1], [0], [0], [0, 0, 1, 0], [], []>} : vector<8x8xf32>, vector<16x8xf32>, vector<8x16xf32> -> vector<8x16xf32>
    %cst_21 = arith.constant 0.353553385 : f32
    %36 = vector.broadcast %cst_21 : f32 to vector<8x16xf32>
    %37 = arith.mulf %35, %36 : vector<8x16xf32>
    %cst_22 = arith.constant -1.000000e+09 : f32
    %38 = vector.broadcast %cst_22 : f32 to vector<8x16xf32>
    %39 = arith.select %9, %38, %37 : vector<8x16xi1>, vector<8x16xf32>
    %cst_23 = arith.constant dense<0xFF800000> : vector<8xf32>
    %40 = vector.multi_reduction <maximumf>, %39, %cst_23 [1] : vector<8x16xf32> to vector<8xf32>
    %41 = vector.shape_cast %40 : vector<8xf32> to vector<8x1xf32>
    %42 = vector.broadcast %41 : vector<8x1xf32> to vector<8x16xf32>
    %43 = arith.subf %39, %42 : vector<8x16xf32>
    %44 = math.exp %43 : vector<8x16xf32>
    %cst_24 = arith.constant dense<0.000000e+00> : vector<8xf32>
    %45 = vector.multi_reduction <add>, %44, %cst_24 [1] : vector<8x16xf32> to vector<8xf32>
    %46 = vector.shape_cast %45 : vector<8xf32> to vector<8x1xf32>
    %47 = tpu.reciprocal %46 {approx = true} : vector<8x1xf32> -> vector<8x1xf32>
    %48 = vector.broadcast %47 : vector<8x1xf32> to vector<8x16xf32>
    %49 = arith.mulf %44, %48 : vector<8x16xf32>
    %cst_25 = arith.constant dense<0.000000e+00> : vector<8x8xf32>
    %50 = tpu.matmul %49, %34, %cst_25 {dimension_numbers = #tpu.dot_dimension_numbers<[1], [0], [0], [1], [0, 0, 1, 1], [], []>} : vector<8x16xf32>, vector<16x8xf32>, vector<8x8xf32> -> vector<8x8xf32>
    %c0_26 = arith.constant 0 : index
    %c1 = arith.constant 1 : index
    %c0_27 = arith.constant 0 : index
    %c0_28 = arith.constant 0 : index
    %51 = vector.load %arg6[%c0_26, %c1, %c0_27, %c0_28] : memref<1x4x8x16xf32, #tpu.memory_space<vmem>>, vector<1x1x8x16xf32>
    %52 = vector.shape_cast %51 : vector<1x1x8x16xf32> to vector<8x16xf32>
    %53 = vector.shape_cast %49 : vector<8x16xf32> to vector<1x1x8x16xf32>
    tpu.vector_store %arg6[%c0_26, %c1, %c0_27, %c0_28], %53 {strides = array<i32>} : memref<1x4x8x16xf32, #tpu.memory_space<vmem>>, vector<1x1x8x16xf32>,
    %54 = vector.extract_strided_slice %1 {offsets = [0, 16], sizes = [8, 8], strides = [1, 1]} : vector<8x32xf32> to vector<8x8xf32>
    %55 = vector.extract_strided_slice %3 {offsets = [0, 16], sizes = [16, 8], strides = [1, 1]} : vector<16x32xf32> to vector<16x8xf32>
    %56 = vector.extract_strided_slice %5 {offsets = [0, 16], sizes = [16, 8], strides = [1, 1]} : vector<16x32xf32> to vector<16x8xf32>
    %cst_29 = arith.constant dense<0.000000e+00> : vector<8x16xf32>
    %57 = tpu.matmul %54, %55, %cst_29 {dimension_numbers = #tpu.dot_dimension_numbers<[1], [1], [0], [0], [0, 0, 1, 0], [], []>} : vector<8x8xf32>, vector<16x8xf32>, vector<8x16xf32> -> vector<8x16xf32>
    %cst_30 = arith.constant 0.353553385 : f32
    %58 = vector.broadcast %cst_30 : f32 to vector<8x16xf32>
    %59 = arith.mulf %57, %58 : vector<8x16xf32>
    %cst_31 = arith.constant -1.000000e+09 : f32
    %60 = vector.broadcast %cst_31 : f32 to vector<8x16xf32>
    %61 = arith.select %9, %60, %59 : vector<8x16xi1>, vector<8x16xf32>
    %cst_32 = arith.constant dense<0xFF800000> : vector<8xf32>
    %62 = vector.multi_reduction <maximumf>, %61, %cst_32 [1] : vector<8x16xf32> to vector<8xf32>
    %63 = vector.shape_cast %62 : vector<8xf32> to vector<8x1xf32>
    %64 = vector.broadcast %63 : vector<8x1xf32> to vector<8x16xf32>
    %65 = arith.subf %61, %64 : vector<8x16xf32>
    %66 = math.exp %65 : vector<8x16xf32>
    %cst_33 = arith.constant dense<0.000000e+00> : vector<8xf32>
    %67 = vector.multi_reduction <add>, %66, %cst_33 [1] : vector<8x16xf32> to vector<8xf32>
    %68 = vector.shape_cast %67 : vector<8xf32> to vector<8x1xf32>
    %69 = tpu.reciprocal %68 {approx = true} : vector<8x1xf32> -> vector<8x1xf32>
    %70 = vector.broadcast %69 : vector<8x1xf32> to vector<8x16xf32>
    %71 = arith.mulf %66, %70 : vector<8x16xf32>
    %cst_34 = arith.constant dense<0.000000e+00> : vector<8x8xf32>
    %72 = tpu.matmul %71, %56, %cst_34 {dimension_numbers = #tpu.dot_dimension_numbers<[1], [0], [0], [1], [0, 0, 1, 1], [], []>} : vector<8x16xf32>, vector<16x8xf32>, vector<8x8xf32> -> vector<8x8xf32>
    %c0_35 = arith.constant 0 : index
    %c2 = arith.constant 2 : index
    %c0_36 = arith.constant 0 : index
    %c0_37 = arith.constant 0 : index
    %73 = vector.load %arg6[%c0_35, %c2, %c0_36, %c0_37] : memref<1x4x8x16xf32, #tpu.memory_space<vmem>>, vector<1x1x8x16xf32>
    %74 = vector.shape_cast %73 : vector<1x1x8x16xf32> to vector<8x16xf32>
    %75 = vector.shape_cast %71 : vector<8x16xf32> to vector<1x1x8x16xf32>
    tpu.vector_store %arg6[%c0_35, %c2, %c0_36, %c0_37], %75 {strides = array<i32>} : memref<1x4x8x16xf32, #tpu.memory_space<vmem>>, vector<1x1x8x16xf32>,
    %76 = vector.extract_strided_slice %1 {offsets = [0, 24], sizes = [8, 8], strides = [1, 1]} : vector<8x32xf32> to vector<8x8xf32>
    %77 = vector.extract_strided_slice %3 {offsets = [0, 24], sizes = [16, 8], strides = [1, 1]} : vector<16x32xf32> to vector<16x8xf32>
    %78 = vector.extract_strided_slice %5 {offsets = [0, 24], sizes = [16, 8], strides = [1, 1]} : vector<16x32xf32> to vector<16x8xf32>
    %cst_38 = arith.constant dense<0.000000e+00> : vector<8x16xf32>
    %79 = tpu.matmul %76, %77, %cst_38 {dimension_numbers = #tpu.dot_dimension_numbers<[1], [1], [0], [0], [0, 0, 1, 0], [], []>} : vector<8x8xf32>, vector<16x8xf32>, vector<8x16xf32> -> vector<8x16xf32>
    %cst_39 = arith.constant 0.353553385 : f32
    %80 = vector.broadcast %cst_39 : f32 to vector<8x16xf32>
    %81 = arith.mulf %79, %80 : vector<8x16xf32>
    %cst_40 = arith.constant -1.000000e+09 : f32
    %82 = vector.broadcast %cst_40 : f32 to vector<8x16xf32>
    %83 = arith.select %9, %82, %81 : vector<8x16xi1>, vector<8x16xf32>
    %cst_41 = arith.constant dense<0xFF800000> : vector<8xf32>
    %84 = vector.multi_reduction <maximumf>, %83, %cst_41 [1] : vector<8x16xf32> to vector<8xf32>
    %85 = vector.shape_cast %84 : vector<8xf32> to vector<8x1xf32>
    %86 = vector.broadcast %85 : vector<8x1xf32> to vector<8x16xf32>
    %87 = arith.subf %83, %86 : vector<8x16xf32>
    %88 = math.exp %87 : vector<8x16xf32>
    %cst_42 = arith.constant dense<0.000000e+00> : vector<8xf32>
    %89 = vector.multi_reduction <add>, %88, %cst_42 [1] : vector<8x16xf32> to vector<8xf32>
    %90 = vector.shape_cast %89 : vector<8xf32> to vector<8x1xf32>
    %91 = tpu.reciprocal %90 {approx = true} : vector<8x1xf32> -> vector<8x1xf32>
    %92 = vector.broadcast %91 : vector<8x1xf32> to vector<8x16xf32>
    %93 = arith.mulf %88, %92 : vector<8x16xf32>
    %cst_43 = arith.constant dense<0.000000e+00> : vector<8x8xf32>
    %94 = tpu.matmul %93, %78, %cst_43 {dimension_numbers = #tpu.dot_dimension_numbers<[1], [0], [0], [1], [0, 0, 1, 1], [], []>} : vector<8x16xf32>, vector<16x8xf32>, vector<8x8xf32> -> vector<8x8xf32>
    %c0_44 = arith.constant 0 : index
    %c3 = arith.constant 3 : index
    %c0_45 = arith.constant 0 : index
    %c0_46 = arith.constant 0 : index
    %95 = vector.load %arg6[%c0_44, %c3, %c0_45, %c0_46] : memref<1x4x8x16xf32, #tpu.memory_space<vmem>>, vector<1x1x8x16xf32>
    %96 = vector.shape_cast %95 : vector<1x1x8x16xf32> to vector<8x16xf32>
    %97 = vector.shape_cast %93 : vector<8x16xf32> to vector<1x1x8x16xf32>
    tpu.vector_store %arg6[%c0_44, %c3, %c0_45, %c0_46], %97 {strides = array<i32>} : memref<1x4x8x16xf32, #tpu.memory_space<vmem>>, vector<1x1x8x16xf32>,
    %98 = tpu.concatenate %28, %50, %72, %94 in 1 : vector<8x8xf32>, vector<8x8xf32>, vector<8x8xf32>, vector<8x8xf32> -> vector<8x32xf32>
    %c0_47 = arith.constant 0 : index
    %c0_48 = arith.constant 0 : index
    %c0_49 = arith.constant 0 : index
    %99 = vector.load %arg5[%c0_47, %c0_48, %c0_49] : memref<1x8x32xf32, #tpu.memory_space<vmem>>, vector<1x8x32xf32>
    %100 = vector.shape_cast %99 : vector<1x8x32xf32> to vector<8x32xf32>
    %101 = vector.shape_cast %98 : vector<8x32xf32> to vector<1x8x32xf32>
    tpu.vector_store %arg5[%c0_47, %c0_48, %c0_49], %101 {strides = array<i32>} : memref<1x8x32xf32, #tpu.memory_space<vmem>>, vector<1x8x32xf32>,
    return
  }
  func.func @transform_0(%arg0: i32) -> (i32, i32, i32) {
    %c0_i32 = arith.constant 0 : i32
    %c0_i32_0 = arith.constant 0 : i32
    %c0_i32_1 = arith.constant 0 : i32
    return %arg0, %c0_i32, %c0_i32_0 : i32, i32, i32
  }
  func.func @transform_1(%arg0: i32) -> (i32, i32, i32) {
    %c0_i32 = arith.constant 0 : i32
    %c0_i32_0 = arith.constant 0 : i32
    %c0_i32_1 = arith.constant 0 : i32
    return %arg0, %c0_i32, %c0_i32_0 : i32, i32, i32
  }
  func.func @transform_2(%arg0: i32) -> (i32, i32, i32) {
    %c0_i32 = arith.constant 0 : i32
    %c0_i32_0 = arith.constant 0 : i32
    %c0_i32_1 = arith.constant 0 : i32
    return %arg0, %c0_i32, %c0_i32_0 : i32, i32, i32
  }
  func.func @transform_3(%arg0: i32) -> (i32, i32, i32) {
    %c0_i32 = arith.constant 0 : i32
    %c0_i32_0 = arith.constant 0 : i32
    %c0_i32_1 = arith.constant 0 : i32
    return %arg0, %c0_i32, %c0_i32_0 : i32, i32, i32
  }
  func.func @transform_4(%arg0: i32) -> (i32, i32, i32) {
    %c0_i32 = arith.constant 0 : i32
    %c0_i32_0 = arith.constant 0 : i32
    %c0_i32_1 = arith.constant 0 : i32
    return %arg0, %c0_i32, %c0_i32_0 : i32, i32, i32
  }
  func.func @transform_5(%arg0: i32) -> (i32, i32, i32, i32) {
    %c0_i32 = arith.constant 0 : i32
    %c0_i32_0 = arith.constant 0 : i32
    %c0_i32_1 = arith.constant 0 : i32
    %c0_i32_2 = arith.constant 0 : i32
    return %arg0, %c0_i32, %c0_i32_0, %c0_i32_1 : i32, i32, i32, i32
  }
}

module attributes {stable_mosaic.version = 11 : i64} {
  func.func @_ffn_kernel(%arg0: i32, %arg1: memref<8x32xf32, #tpu.memory_space<vmem>>, %arg2: memref<64x32xf32, #tpu.memory_space<vmem>>, %arg3: memref<1x64xf32, #tpu.memory_space<vmem>>, %arg4: memref<32x64xf32, #tpu.memory_space<vmem>>, %arg5: memref<1x32xf32, #tpu.memory_space<vmem>>, %arg6: memref<8x32xf32, #tpu.memory_space<vmem>>) attributes {dimension_semantics = [#tpu.dimension_semantics<parallel>], iteration_bounds = array<i64: 2>, scalar_prefetch = 0 : i64, scratch_operands = 0 : i64, tpu.core_type = #tpu.core_type<tc>, window_params = [{transform_indices = @transform_0, window_bounds = array<i64: 8, 32>}, {pipeline_mode = #tpu.pipeline_mode<synchronous>, transform_indices = @transform_1, window_bounds = array<i64: 64, 32>}, {pipeline_mode = #tpu.pipeline_mode<synchronous>, transform_indices = @transform_2, window_bounds = array<i64: 1, 64>}, {pipeline_mode = #tpu.pipeline_mode<synchronous>, transform_indices = @transform_3, window_bounds = array<i64: 32, 64>}, {pipeline_mode = #tpu.pipeline_mode<synchronous>, transform_indices = @transform_4, window_bounds = array<i64: 1, 32>}, {transform_indices = @transform_5, window_bounds = array<i64: 8, 32>}]} {
    %c0 = arith.constant 0 : index
    %c0_0 = arith.constant 0 : index
    %0 = vector.load %arg1[%c0, %c0_0] : memref<8x32xf32, #tpu.memory_space<vmem>>, vector<8x32xf32>
    %c0_1 = arith.constant 0 : index
    %c0_2 = arith.constant 0 : index
    %1 = vector.load %arg2[%c0_1, %c0_2] : memref<64x32xf32, #tpu.memory_space<vmem>>, vector<64x32xf32>
    %cst = arith.constant dense<0.000000e+00> : vector<8x64xf32>
    %2 = tpu.matmul %0, %1, %cst {dimension_numbers = #tpu.dot_dimension_numbers<[1], [1], [0], [0], [0, 0, 1, 0], [], []>} : vector<8x32xf32>, vector<64x32xf32>, vector<8x64xf32> -> vector<8x64xf32>
    %c0_3 = arith.constant 0 : index
    %c0_4 = arith.constant 0 : index
    %3 = vector.load %arg3[%c0_3, %c0_4] : memref<1x64xf32, #tpu.memory_space<vmem>>, vector<1x64xf32>
    %4 = vector.broadcast %3 : vector<1x64xf32> to vector<8x64xf32>
    %5 = arith.addf %2, %4 : vector<8x64xf32>
    %cst_5 = arith.constant 5.000000e-01 : f32
    %6 = vector.broadcast %cst_5 : f32 to vector<8x64xf32>
    %7 = arith.mulf %6, %5 : vector<8x64xf32>
    %cst_6 = arith.constant 0.707106769 : f32
    %8 = vector.broadcast %cst_6 : f32 to vector<8x64xf32>
    %9 = arith.mulf %5, %8 : vector<8x64xf32>
    %10 = math.erf %9 : vector<8x64xf32>
    %cst_7 = arith.constant 1.000000e+00 : f32
    %11 = vector.broadcast %cst_7 : f32 to vector<8x64xf32>
    %12 = arith.addf %11, %10 : vector<8x64xf32>
    %13 = arith.mulf %7, %12 : vector<8x64xf32>
    %c0_8 = arith.constant 0 : index
    %c0_9 = arith.constant 0 : index
    %14 = vector.load %arg4[%c0_8, %c0_9] : memref<32x64xf32, #tpu.memory_space<vmem>>, vector<32x64xf32>
    %cst_10 = arith.constant dense<0.000000e+00> : vector<8x32xf32>
    %15 = tpu.matmul %13, %14, %cst_10 {dimension_numbers = #tpu.dot_dimension_numbers<[1], [1], [0], [0], [0, 0, 1, 0], [], []>} : vector<8x64xf32>, vector<32x64xf32>, vector<8x32xf32> -> vector<8x32xf32>
    %c0_11 = arith.constant 0 : index
    %c0_12 = arith.constant 0 : index
    %16 = vector.load %arg5[%c0_11, %c0_12] : memref<1x32xf32, #tpu.memory_space<vmem>>, vector<1x32xf32>
    %17 = vector.broadcast %16 : vector<1x32xf32> to vector<8x32xf32>
    %18 = arith.addf %15, %17 : vector<8x32xf32>
    %c0_13 = arith.constant 0 : index
    %c0_14 = arith.constant 0 : index
    %19 = vector.load %arg6[%c0_13, %c0_14] : memref<8x32xf32, #tpu.memory_space<vmem>>, vector<8x32xf32>
    tpu.vector_store %arg6[%c0_13, %c0_14], %18 {strides = array<i32>} : memref<8x32xf32, #tpu.memory_space<vmem>>, vector<8x32xf32>,
    return
  }
  func.func @transform_0(%arg0: i32) -> (i32, i32) {
    %c0_i32 = arith.constant 0 : i32
    %c0_i32_0 = arith.constant 0 : i32
    return %arg0, %c0_i32 : i32, i32
  }
  func.func @transform_1(%arg0: i32) -> (i32, i32) {
    %c0_i32 = arith.constant 0 : i32
    %c0_i32_0 = arith.constant 0 : i32
    %c0_i32_1 = arith.constant 0 : i32
    return %c0_i32, %c0_i32_0 : i32, i32
  }
  func.func @transform_2(%arg0: i32) -> (i32, i32) {
    %c0_i32 = arith.constant 0 : i32
    %c0_i32_0 = arith.constant 0 : i32
    %c0_i32_1 = arith.constant 0 : i32
    return %c0_i32, %c0_i32_0 : i32, i32
  }
  func.func @transform_3(%arg0: i32) -> (i32, i32) {
    %c0_i32 = arith.constant 0 : i32
    %c0_i32_0 = arith.constant 0 : i32
    %c0_i32_1 = arith.constant 0 : i32
    return %c0_i32, %c0_i32_0 : i32, i32
  }
  func.func @transform_4(%arg0: i32) -> (i32, i32) {
    %c0_i32 = arith.constant 0 : i32
    %c0_i32_0 = arith.constant 0 : i32
    %c0_i32_1 = arith.constant 0 : i32
    return %c0_i32, %c0_i32_0 : i32, i32
  }
  func.func @transform_5(%arg0: i32) -> (i32, i32) {
    %c0_i32 = arith.constant 0 : i32
    %c0_i32_0 = arith.constant 0 : i32
    return %arg0, %c0_i32 : i32, i32
  }
}

module attributes {stable_mosaic.version = 11 : i64} {
  func.func @_add_ln_kernel(%arg0: i32, %arg1: memref<8x32xf32, #tpu.memory_space<vmem>>, %arg2: memref<8x32xf32, #tpu.memory_space<vmem>>, %arg3: memref<1x32xf32, #tpu.memory_space<vmem>>, %arg4: memref<1x32xf32, #tpu.memory_space<vmem>>, %arg5: memref<8x32xf32, #tpu.memory_space<vmem>>) attributes {dimension_semantics = [#tpu.dimension_semantics<parallel>], iteration_bounds = array<i64: 2>, scalar_prefetch = 0 : i64, scratch_operands = 0 : i64, tpu.core_type = #tpu.core_type<tc>, window_params = [{transform_indices = @transform_0, window_bounds = array<i64: 8, 32>}, {transform_indices = @transform_1, window_bounds = array<i64: 8, 32>}, {pipeline_mode = #tpu.pipeline_mode<synchronous>, transform_indices = @transform_2, window_bounds = array<i64: 1, 32>}, {pipeline_mode = #tpu.pipeline_mode<synchronous>, transform_indices = @transform_3, window_bounds = array<i64: 1, 32>}, {transform_indices = @transform_4, window_bounds = array<i64: 8, 32>}]} {
    %c0 = arith.constant 0 : index
    %c0_0 = arith.constant 0 : index
    %0 = vector.load %arg1[%c0, %c0_0] : memref<8x32xf32, #tpu.memory_space<vmem>>, vector<8x32xf32>
    %c0_1 = arith.constant 0 : index
    %c0_2 = arith.constant 0 : index
    %1 = vector.load %arg2[%c0_1, %c0_2] : memref<8x32xf32, #tpu.memory_space<vmem>>, vector<8x32xf32>
    %2 = arith.addf %0, %1 : vector<8x32xf32>
    %cst = arith.constant dense<0.000000e+00> : vector<8xf32>
    %3 = vector.multi_reduction <add>, %2, %cst [1] : vector<8x32xf32> to vector<8xf32>
    %4 = vector.shape_cast %3 : vector<8xf32> to vector<8x1xf32>
    %cst_3 = arith.constant 3.200000e+01 : f32
    %5 = vector.broadcast %cst_3 : f32 to vector<8x1xf32>
    %6 = arith.divf %4, %5 : vector<8x1xf32>
    %7 = vector.broadcast %6 : vector<8x1xf32> to vector<8x32xf32>
    %8 = arith.subf %2, %7 : vector<8x32xf32>
    %9 = arith.mulf %8, %8 : vector<8x32xf32>
    %cst_4 = arith.constant dense<0.000000e+00> : vector<8xf32>
    %10 = vector.multi_reduction <add>, %9, %cst_4 [1] : vector<8x32xf32> to vector<8xf32>
    %11 = vector.shape_cast %10 : vector<8xf32> to vector<8x1xf32>
    %cst_5 = arith.constant 3.200000e+01 : f32
    %12 = vector.broadcast %cst_5 : f32 to vector<8x1xf32>
    %13 = arith.divf %11, %12 : vector<8x1xf32>
    %cst_6 = arith.constant 9.99999996E-13 : f32
    %14 = vector.broadcast %cst_6 : f32 to vector<8x1xf32>
    %15 = arith.addf %13, %14 : vector<8x1xf32>
    %16 = math.rsqrt %15 : vector<8x1xf32>
    %17 = vector.broadcast %16 : vector<8x1xf32> to vector<8x32xf32>
    %18 = arith.mulf %8, %17 : vector<8x32xf32>
    %c0_7 = arith.constant 0 : index
    %c0_8 = arith.constant 0 : index
    %19 = vector.load %arg3[%c0_7, %c0_8] : memref<1x32xf32, #tpu.memory_space<vmem>>, vector<1x32xf32>
    %20 = vector.broadcast %19 : vector<1x32xf32> to vector<8x32xf32>
    %21 = arith.mulf %18, %20 : vector<8x32xf32>
    %c0_9 = arith.constant 0 : index
    %c0_10 = arith.constant 0 : index
    %22 = vector.load %arg4[%c0_9, %c0_10] : memref<1x32xf32, #tpu.memory_space<vmem>>, vector<1x32xf32>
    %23 = vector.broadcast %22 : vector<1x32xf32> to vector<8x32xf32>
    %24 = arith.addf %21, %23 : vector<8x32xf32>
    %c0_11 = arith.constant 0 : index
    %c0_12 = arith.constant 0 : index
    %25 = vector.load %arg5[%c0_11, %c0_12] : memref<8x32xf32, #tpu.memory_space<vmem>>, vector<8x32xf32>
    tpu.vector_store %arg5[%c0_11, %c0_12], %24 {strides = array<i32>} : memref<8x32xf32, #tpu.memory_space<vmem>>, vector<8x32xf32>,
    return
  }
  func.func @transform_0(%arg0: i32) -> (i32, i32) {
    %c0_i32 = arith.constant 0 : i32
    %c0_i32_0 = arith.constant 0 : i32
    return %arg0, %c0_i32 : i32, i32
  }
  func.func @transform_1(%arg0: i32) -> (i32, i32) {
    %c0_i32 = arith.constant 0 : i32
    %c0_i32_0 = arith.constant 0 : i32
    return %arg0, %c0_i32 : i32, i32
  }
  func.func @transform_2(%arg0: i32) -> (i32, i32) {
    %c0_i32 = arith.constant 0 : i32
    %c0_i32_0 = arith.constant 0 : i32
    %c0_i32_1 = arith.constant 0 : i32
    return %c0_i32, %c0_i32_0 : i32, i32
  }
  func.func @transform_3(%arg0: i32) -> (i32, i32) {
    %c0_i32 = arith.constant 0 : i32
    %c0_i32_0 = arith.constant 0 : i32
    %c0_i32_1 = arith.constant 0 : i32
    return %c0_i32, %c0_i32_0 : i32, i32
  }
  func.func @transform_4(%arg0: i32) -> (i32, i32) {
    %c0_i32 = arith.constant 0 : i32
    %c0_i32_0 = arith.constant 0 : i32
    return %arg0, %c0_i32 : i32, i32
  }
}

</mosaic_0001>

<llo_original>
// kernel: tpu_custom_call.1
$region0: #{tpu_custom_call.1}
  #allocation0 [shape = 'u32[]', space=smem, size = 0x4, offset = 0x4, fixed_abs, tag = 'smem constant byte address 0x4 - core index']
  #allocation1 [shape = 'u32[144,128]{1,0:T(1,128)}', space=vmem, size = 0x12000, scoped, tag = 'internal scratch']
  %s0 = inlined_call_operand.hbm [shape: f32[16,128], index: 0, kind: input, shape index: {}]
  %s1 = inlined_call_operand.hbm [shape: f32[8,128], index: 1, kind: input, shape index: {}]
  %s2 = inlined_call_operand.hbm [shape: f32[16,128], index: 2, kind: output, shape index: {}]
  %s3 = sld [smem:[#allocation0]]
  $region49: #{tpu_custom_call.1} parent=0
    _
  %s5 = ssub.s32 1, %s3
  %s6 = scalar_select 0, %s5, %s3
  $region1: #{tpu_custom_call.1} parent=0
    #allocation2 [shape = 'u8[8192]{0}', space=vmem, size = 0x2000, scoped, tag = 'input window, operand 0']
    #allocation3 [shape = 's32[2]{0}', space=sflag, size = 0x8, scoped, tag = 'scoped memory for tpu_custom_call.1']
    #allocation4 [shape = 's32[2]{0}', space=sflag, size = 0x8, scoped, tag = 'scoped memory for tpu_custom_call.1']
    #allocation5 [shape = 'u8[4096]{0}', space=vmem, size = 0x1000, scoped, tag = 'input window, operand 1, single buffered']
    #allocation6 [shape = 's32[1]{0}', space=sflag, size = 0x4, scoped, tag = 'scoped memory for tpu_custom_call.1']
    #allocation7 [shape = 'u8[8192]{0}', space=vmem, size = 0x2000, scoped, tag = 'output window, operand 0']
    %7 = vsyncpa [#allocation3], 0
    %s8 = scalar_lea.sflag [#allocation3], 1
    %9 = vsyncpa %s8, 0
    %10 = vsyncpa [#allocation6], 0
    %11 = vsyncpa [#allocation4], 0
    %s12 = scalar_lea.sflag [#allocation4], 1
    %13 = vsyncpa %s12, 0
    loop: start=0, step=1, limit=4
    $region2: #{tpu_custom_call.1} parent=1 // loop_pre_header
      _
    $region3: #{tpu_custom_call.1} parent=1 // loop_header
      %s15 = sphi 0, %s19
      %p16 = scmp.ge.s32.totalorder %s15, 4
      %s25 = sphi 0, %s27
      %s28 = sphi 0, %s25
      %s29 = sphi 0, %s28
      %s45 = sphi 0, %s29
      %s49 = sphi 0, %s49
      %s51 = sphi 0, %s49
      %s52 = sphi 0, %s51
      %s66 = sphi 0, %s52
      %s72 = sphi 0, %s74
      %s75 = sphi 0, %s72
      %s76 = sphi 0, %s75
      %s92 = sphi 0, %s76
    $region4: #{tpu_custom_call.1} parent=1 // loop_header_branch
      %18 = sbr.rel (%p16) target = $region8
    $region5: #{tpu_custom_call.1} parent=1 // loop_body
      %s20 = ssub.s32 %s15, 1
      %s21 = ssub.s32 %s15, 2
      %s22 = sadd.s32 %s15, 1
      %s23 = ssub.s32 %s15, %s22
      %p24 = scmp.eq.s32.totalorder %s23, 0
      %s26 = sadd.s32 %s25, 1
      %s27 = scalar_select %p24, %s25, %s26
      %p30 = pneg %p24
      %p31 = scmp.eq.s32.totalorder %s15, 1
      %p32 = por %p30, %p31
      %p33 = scmp.ne.s32.totalorder %s25, %s28
      %p34 = scmp.eq.s32.totalorder %s15, 0
      %p35 = por %p33, %p34
      %p36 = scmp.ne.s32.totalorder %s25, %s28
      %p37 = scmp.eq.s32.totalorder %s20, 1
      %p38 = por %p36, %p37
      %p39 = scmp.ne.s32.totalorder %s28, %s29
      %p40 = scmp.eq.s32.totalorder %s20, 0
      %p41 = por %p39, %p40
      %p42 = scmp.ne.s32.totalorder %s28, %s29
      %p43 = scmp.eq.s32.totalorder %s21, 1
      %p44 = por %p42, %p43
      %p46 = scmp.ne.s32.totalorder %s29, %s45
      %p47 = scmp.eq.s32.totalorder %s21, 0
      %p48 = por %p46, %p47
      %s50 = sadd.s32 %s49, 1
      %p53 = scmp.eq.s32.totalorder %s15, 1
      %p54 = scmp.ne.s32.totalorder %s49, %s51
      %p55 = scmp.eq.s32.totalorder %s15, 0
      %p56 = por %p54, %p55
      %p57 = scmp.ne.s32.totalorder %s49, %s51
      %p58 = scmp.eq.s32.totalorder %s20, 1
      %p59 = por %p57, %p58
      %p60 = scmp.ne.s32.totalorder %s51, %s52
      %p61 = scmp.eq.s32.totalorder %s20, 0
      %p62 = por %p60, %p61
      %p63 = scmp.ne.s32.totalorder %s51, %s52
      %p64 = scmp.eq.s32.totalorder %s21, 1
      %p65 = por %p63, %p64
      %p67 = scmp.ne.s32.totalorder %s52, %s66
      %p68 = scmp.eq.s32.totalorder %s21, 0
      %p69 = por %p67, %p68
      %s70 = ssub.s32 %s15, %s22
      %p71 = scmp.eq.s32.totalorder %s70, 0
      %s73 = sadd.s32 %s72, 1
      %s74 = scalar_select %p71, %s72, %s73
      %p77 = pneg %p71
      %p78 = scmp.eq.s32.totalorder %s15, 1
      %p79 = por %p77, %p78
      %p80 = scmp.ne.s32.totalorder %s72, %s75
      %p81 = scmp.eq.s32.totalorder %s15, 0
      %p82 = por %p80, %p81
      %p83 = scmp.ne.s32.totalorder %s72, %s75
      %p84 = scmp.eq.s32.totalorder %s20, 1
      %p85 = por %p83, %p84
      %p86 = scmp.ne.s32.totalorder %s75, %s76
      %p87 = scmp.eq.s32.totalorder %s20, 0
      %p88 = por %p86, %p87
      %p89 = scmp.ne.s32.totalorder %s75, %s76
      %p90 = scmp.eq.s32.totalorder %s21, 1
      %p91 = por %p89, %p90
      %p93 = scmp.ne.s32.totalorder %s76, %s92
      %p94 = scmp.eq.s32.totalorder %s21, 0
      %p95 = por %p93, %p94
      %p96 = scmp.le.s32.totalorder 1, %s15
      %p97 = scmp.lt.s32.totalorder %s15, 3
      %p98 = pnand %p96, %p97
      %p99 = pneg %p98
      // Predicated region
      $region9: #{tpu_custom_call.1} parent=5 // pred_check
        _
      $region10: #{tpu_custom_call.1} parent=5 // pred_check_branch
        %101 = sbr.rel (%p98) target = $region12
      $region11: #{tpu_custom_call.1} parent=5 // pred_region
        %s102 = ssub.s32 %s15, 1
        // Predicated region
        $region13: #{tpu_custom_call.1} parent=11 // pred_check
          %p103 = pneg %p62
        $region14: #{tpu_custom_call.1} parent=11 // pred_check_branch
          %105 = sbr.rel (%p103) target = $region16
        $region15: #{tpu_custom_call.1} parent=11 // pred_region
          %s107 = ssub.s32 128, 128
          %108 = vsyncadd [#allocation6], %s107
          %s110 = sshll.u32 [#allocation5], 4
          %s111 = int_to_ptr.vmem [resolvable:$true] %s110
          %113 = dma.hbm_to_vmem [thread:$0]  %s1, 128, %s111, [#allocation6]
        $region16: #{tpu_custom_call.1} parent=11 // pred_fallthru
          _
      $region12: #{tpu_custom_call.1} parent=5 // pred_fallthru
        _
      %p114 = scmp.lt.s32.totalorder %s15, 2
      // Predicated region
      $region17: #{tpu_custom_call.1} parent=5 // pred_check
        %p115 = pneg %p114
      $region18: #{tpu_custom_call.1} parent=5 // pred_check_branch
        %117 = sbr.rel (%p115) target = $region20
      $region19: #{tpu_custom_call.1} parent=5 // pred_region
        // Predicated region
        $region21: #{tpu_custom_call.1} parent=19 // pred_check
          %p118 = pneg %p35
        $region22: #{tpu_custom_call.1} parent=19 // pred_check_branch
          %120 = sbr.rel (%p118) target = $region24
        $region23: #{tpu_custom_call.1} parent=19 // pred_region
          %s121 = sand.u32 %s25, 1
          %s122 = scalar_lea.sflag [#allocation3], %s121
          %s123 = sand.u32 %s25, 1
          %s124 = smul.addr %s123, 8
          %s125 = scalar_lea.vmem [#allocation2], %s124
          %s127 = ssub.s32 128, 128
          %128 = vsyncadd %s122, %s127
          %s129 = smul.addr %s15, 128
          %s130 = scalar_lea.hbm %s0, %s129
          %s132 = sshll.u32 %s125, 4
          %s133 = int_to_ptr.vmem [resolvable:$true] %s132
          %135 = dma.hbm_to_vmem [thread:$0]  %s130, 128, %s133, %s122
        $region24: #{tpu_custom_call.1} parent=19 // pred_fallthru
          _
      $region20: #{tpu_custom_call.1} parent=5 // pred_fallthru
        _
      %p136 = scmp.le.s32.totalorder 1, %s15
      %p137 = scmp.lt.s32.totalorder %s15, 3
      %p138 = pnand %p136, %p137
      %p139 = pneg %p138
      // Predicated region
      $region25: #{tpu_custom_call.1} parent=5 // pred_check
        _
      $region26: #{tpu_custom_call.1} parent=5 // pred_check_branch
        %141 = sbr.rel (%p138) target = $region28
      $region27: #{tpu_custom_call.1} parent=5 // pred_region
        %s142 = ssub.s32 %s15, 1
        %s143 = sand.u32 %s28, 1
        %s144 = scalar_lea.sflag [#allocation3], %s143
        %s145 = sand.u32 %s28, 1
        %s146 = smul.addr %s145, 8
        %s147 = scalar_lea.vmem [#allocation2], %s146
        // Predicated region
        $region29: #{tpu_custom_call.1} parent=27 // pred_check
          %p148 = pneg %p41
        $region30: #{tpu_custom_call.1} parent=27 // pred_check_branch
          %150 = sbr.rel (%p148) target = $region32
        $region31: #{tpu_custom_call.1} parent=27 // pred_region
          %151 = dma.done %s144, 128
        $region32: #{tpu_custom_call.1} parent=27 // pred_fallthru
          _
        // Predicated region
        $region33: #{tpu_custom_call.1} parent=27 // pred_check
          %p152 = pneg %p62
        $region34: #{tpu_custom_call.1} parent=27 // pred_check_branch
          %154 = sbr.rel (%p152) target = $region36
        $region35: #{tpu_custom_call.1} parent=27 // pred_region
          %155 = dma.done [#allocation6], 128
        $region36: #{tpu_custom_call.1} parent=27 // pred_fallthru
          _
        %s156 = sand.u32 %s28, 1
        %s157 = scalar_lea.sflag [#allocation3], %s156
        %s158 = sand.u32 %s28, 1
        %s159 = smul.addr %s158, 8
        %s160 = scalar_lea.vmem [#allocation2], %s159
        %p161 = pneg %p41
        %p162 = pneg %p38
        %p163 = pneg %p62
        %p164 = pneg %p59
        %p165 = pneg %p88
        %p166 = pneg %p85
        %s167 = sand.u32 %s75, 1
        %s168 = scalar_lea.sflag [#allocation4], %s167
        %s169 = sand.u32 %s75, 1
        %s170 = smul.addr %s169, 8
        %s171 = scalar_lea.vmem [#allocation7], %s170
        %v172 = vld [vmem:[%s147] sm:$0xff]
        %v173 = vld [vmem:[#allocation5] sm:$0xff]
        %v174 = vadd.f32 %v172, %v173
        %175 = vst [vmem:[%s171] sm:$0xff] %v174
        %s176 = sand.u32 %s75, 1
        %s177 = scalar_lea.sflag [#allocation4], %s176
        %s178 = sand.u32 %s75, 1
        %s179 = smul.addr %s178, 8
        %s180 = scalar_lea.vmem [#allocation7], %s179
        // Predicated region
        $region37: #{tpu_custom_call.1} parent=27 // pred_check
          %p181 = pneg %p85
        $region38: #{tpu_custom_call.1} parent=27 // pred_check_branch
          %183 = sbr.rel (%p181) target = $region40
        $region39: #{tpu_custom_call.1} parent=27 // pred_region
          %s185 = ssub.s32 128, 128
          %186 = vsyncadd %s177, %s185
          %s187 = smul.addr %s20, 128
          %s188 = scalar_lea.hbm %s2, %s187
          %s190 = sshll.u32 %s180, 4
          %s191 = int_to_ptr.vmem [resolvable:$true] %s190
          %193 = dma.vmem_to_hbm [thread:$0]  %s191, 128, %s188, %s177
        $region40: #{tpu_custom_call.1} parent=27 // pred_fallthru
          _
      $region28: #{tpu_custom_call.1} parent=5 // pred_fallthru
        _
      %p194 = scmp.le.s32.totalorder 2, %s15
      // Predicated region
      $region41: #{tpu_custom_call.1} parent=5 // pred_check
        %p195 = pneg %p194
      $region42: #{tpu_custom_call.1} parent=5 // pred_check_branch
        %197 = sbr.rel (%p195) target = $region44
      $region43: #{tpu_custom_call.1} parent=5 // pred_region
        %s198 = ssub.s32 %s15, 2
        // Predicated region
        $region45: #{tpu_custom_call.1} parent=43 // pred_check
          %p199 = pneg %p91
        $region46: #{tpu_custom_call.1} parent=43 // pred_check_branch
          %201 = sbr.rel (%p199) target = $region48
        $region47: #{tpu_custom_call.1} parent=43 // pred_region
          %s202 = sand.u32 %s76, 1
          %s203 = scalar_lea.sflag [#allocation4], %s202
          %s204 = sand.u32 %s76, 1
          %s205 = smul.addr %s204, 8
          %s206 = scalar_lea.vmem [#allocation7], %s205
          %207 = dma.done %s203, 128
        $region48: #{tpu_custom_call.1} parent=43 // pred_fallthru
          _
      $region44: #{tpu_custom_call.1} parent=5 // pred_fallthru
        _
    $region6: #{tpu_custom_call.1} parent=1 // loop_footer
      %s19 = sadd.s32 1, %s15
    $region7: #{tpu_custom_call.1} parent=1 // loop_footer_branch
      %14 = sbr.rel target = $region3
    $region8: #{tpu_custom_call.1} parent=1 // loop_exit
      _
    %208 = vsyncpa [#allocation3], 1
    %s209 = scalar_lea.sflag [#allocation3], 1
    %210 = vsyncpa %s209, 1
    %211 = vsyncpa [#allocation6], 1
    %212 = vsyncpa [#allocation4], 1
    %s213 = scalar_lea.sflag [#allocation4], 1
    %214 = vsyncpa %s213, 1

// kernel: decoder_forward.11
$region0: #{decoder_forward.11}
  #allocation0 [shape = 'u32[]', space=smem, size = 0x4, offset = 0x4, fixed_abs, tag = 'smem constant byte address 0x4 - core index']
  #allocation1 [shape = 'u32[144,128]{1,0:T(1,128)}', space=vmem, size = 0x12000, scoped, tag = 'internal scratch']
  %s0 = inlined_call_operand.vmem [shape: f32[16,32], index: 0, kind: input, shape index: {}]
  %s1 = inlined_call_operand.vmem [shape: f32[96,32], index: 1, kind: input, shape index: {}]
  %s2 = inlined_call_operand.vmem [shape: f32[1,96], index: 2, kind: input, shape index: {}]
  %s3 = inlined_call_operand.vmem [shape: f32[16,96], index: 3, kind: output, shape index: {}]
  %s4 = sld [smem:[#allocation0]]
  $region45: #{decoder_forward.11} parent=0
    _
  %s6 = ssub.s32 1, %s4
  %s7 = scalar_select 0, %s6, %s4
  loop: start=0, step=1, limit=4
  $region2: #{decoder_forward.11} parent=0 // loop_pre_header
    _
  $region3: #{decoder_forward.11} parent=0 // loop_header
    %s9 = sphi 0, %s13
    %p10 = scmp.ge.s32.totalorder %s9, 4
    %s19 = sphi 0, %s21
    %s22 = sphi 0, %s19
    %s23 = sphi 0, %s22
    %s39 = sphi 0, %s23
    %s43 = sphi 0, %s43
    %s45 = sphi 0, %s43
    %s46 = sphi 0, %s45
    %s60 = sphi 0, %s46
    %s64 = sphi 0, %s64
    %s66 = sphi 0, %s64
    %s67 = sphi 0, %s66
    %s81 = sphi 0, %s67
    %s87 = sphi 0, %s89
    %s90 = sphi 0, %s87
    %s91 = sphi 0, %s90
    %s107 = sphi 0, %s91
  $region4: #{decoder_forward.11} parent=0 // loop_header_branch
    %12 = sbr.rel (%p10) target = $region8
  $region5: #{decoder_forward.11} parent=0 // loop_body
    %s14 = ssub.s32 %s9, 1
    %s15 = ssub.s32 %s9, 2
    %s16 = sadd.s32 %s9, 1
    %s17 = ssub.s32 %s9, %s16
    %p18 = scmp.eq.s32.totalorder %s17, 0
    %s20 = sadd.s32 %s19, 1
    %s21 = scalar_select %p18, %s19, %s20
    %p24 = pneg %p18
    %p25 = scmp.eq.s32.totalorder %s9, 1
    %p26 = por %p24, %p25
    %p27 = scmp.ne.s32.totalorder %s19, %s22
    %p28 = scmp.eq.s32.totalorder %s9, 0
    %p29 = por %p27, %p28
    %p30 = scmp.ne.s32.totalorder %s19, %s22
    %p31 = scmp.eq.s32.totalorder %s14, 1
    %p32 = por %p30, %p31
    %p33 = scmp.ne.s32.totalorder %s22, %s23
    %p34 = scmp.eq.s32.totalorder %s14, 0
    %p35 = por %p33, %p34
    %p36 = scmp.ne.s32.totalorder %s22, %s23
    %p37 = scmp.eq.s32.totalorder %s15, 1
    %p38 = por %p36, %p37
    %p40 = scmp.ne.s32.totalorder %s23, %s39
    %p41 = scmp.eq.s32.totalorder %s15, 0
    %p42 = por %p40, %p41
    %s44 = sadd.s32 %s43, 1
    %p47 = scmp.eq.s32.totalorder %s9, 1
    %p48 = scmp.ne.s32.totalorder %s43, %s45
    %p49 = scmp.eq.s32.totalorder %s9, 0
    %p50 = por %p48, %p49
    %p51 = scmp.ne.s32.totalorder %s43, %s45
    %p52 = scmp.eq.s32.totalorder %s14, 1
    %p53 = por %p51, %p52
    %p54 = scmp.ne.s32.totalorder %s45, %s46
    %p55 = scmp.eq.s32.totalorder %s14, 0
    %p56 = por %p54, %p55
    %p57 = scmp.ne.s32.totalorder %s45, %s46
    %p58 = scmp.eq.s32.totalorder %s15, 1
    %p59 = por %p57, %p58
    %p61 = scmp.ne.s32.totalorder %s46, %s60
    %p62 = scmp.eq.s32.totalorder %s15, 0
    %p63 = por %p61, %p62
    %s65 = sadd.s32 %s64, 1
    %p68 = scmp.eq.s32.totalorder %s9, 1
    %p69 = scmp.ne.s32.totalorder %s64, %s66
    %p70 = scmp.eq.s32.totalorder %s9, 0
    %p71 = por %p69, %p70
    %p72 = scmp.ne.s32.totalorder %s64, %s66
    %p73 = scmp.eq.s32.totalorder %s14, 1
    %p74 = por %p72, %p73
    %p75 = scmp.ne.s32.totalorder %s66, %s67
    %p76 = scmp.eq.s32.totalorder %s14, 0
    %p77 = por %p75, %p76
    %p78 = scmp.ne.s32.totalorder %s66, %s67
    %p79 = scmp.eq.s32.totalorder %s15, 1
    %p80 = por %p78, %p79
    %p82 = scmp.ne.s32.totalorder %s67, %s81
    %p83 = scmp.eq.s32.totalorder %s15, 0
    %p84 = por %p82, %p83
    %s85 = ssub.s32 %s9, %s16
    %p86 = scmp.eq.s32.totalorder %s85, 0
    %s88 = sadd.s32 %s87, 1
    %s89 = scalar_select %p86, %s87, %s88
    %p92 = pneg %p86
    %p93 = scmp.eq.s32.totalorder %s9, 1
    %p94 = por %p92, %p93
    %p95 = scmp.ne.s32.totalorder %s87, %s90
    %p96 = scmp.eq.s32.totalorder %s9, 0
    %p97 = por %p95, %p96
    %p98 = scmp.ne.s32.totalorder %s87, %s90
    %p99 = scmp.eq.s32.totalorder %s14, 1
    %p100 = por %p98, %p99
    %p101 = scmp.ne.s32.totalorder %s90, %s91
    %p102 = scmp.eq.s32.totalorder %s14, 0
    %p103 = por %p101, %p102
    %p104 = scmp.ne.s32.totalorder %s90, %s91
    %p105 = scmp.eq.s32.totalorder %s15, 1
    %p106 = por %p104, %p105
    %p108 = scmp.ne.s32.totalorder %s91, %s107
    %p109 = scmp.eq.s32.totalorder %s15, 0
    %p110 = por %p108, %p109
    %p111 = scmp.le.s32.totalorder 1, %s9
    %p112 = scmp.lt.s32.totalorder %s9, 3
    %p113 = pnand %p111, %p112
    %p114 = pneg %p113
    // Predicated region
    $region9: #{decoder_forward.11} parent=5 // pred_check
      _
    $region10: #{decoder_forward.11} parent=5 // pred_check_branch
      %116 = sbr.rel (%p113) target = $region12
    $region11: #{decoder_forward.11} parent=5 // pred_region
      %s117 = ssub.s32 %s9, 1
      // Predicated region
      $region13: #{decoder_forward.11} parent=11 // pred_check
        %p118 = pneg %p56
      $region14: #{decoder_forward.11} parent=11 // pred_check_branch
        %120 = sbr.rel (%p118) target = $region16
      $region15: #{decoder_forward.11} parent=11 // pred_region
        _
      $region16: #{decoder_forward.11} parent=11 // pred_fallthru
        _
      // Predicated region
      $region17: #{decoder_forward.11} parent=11 // pred_check
        %p121 = pneg %p77
      $region18: #{decoder_forward.11} parent=11 // pred_check_branch
        %123 = sbr.rel (%p121) target = $region20
      $region19: #{decoder_forward.11} parent=11 // pred_region
        _
      $region20: #{decoder_forward.11} parent=11 // pred_fallthru
        _
    $region12: #{decoder_forward.11} parent=5 // pred_fallthru
      _
    %p124 = scmp.lt.s32.totalorder %s9, 2
    // Predicated region
    $region21: #{decoder_forward.11} parent=5 // pred_check
      %p125 = pneg %p124
    $region22: #{decoder_forward.11} parent=5 // pred_check_branch
      %127 = sbr.rel (%p125) target = $region24
    $region23: #{decoder_forward.11} parent=5 // pred_region
      // Predicated region
      $region25: #{decoder_forward.11} parent=23 // pred_check
        %p128 = pneg %p29
      $region26: #{decoder_forward.11} parent=23 // pred_check_branch
        %130 = sbr.rel (%p128) target = $region28
      $region27: #{decoder_forward.11} parent=23 // pred_region
        %p131 = scmp.lt.s32.totalorder %s9, 1
        %s132 = scalar_select %p131, %s9, 1
        %s133 = smul.addr %s132, 8
        %s134 = scalar_lea.vmem %s0, %s133
      $region28: #{decoder_forward.11} parent=23 // pred_fallthru
        _
    $region24: #{decoder_forward.11} parent=5 // pred_fallthru
      _
    %p135 = scmp.le.s32.totalorder 1, %s9
    %p136 = scmp.lt.s32.totalorder %s9, 3
    %p137 = pnand %p135, %p136
    %p138 = pneg %p137
    // Predicated region
    $region29: #{decoder_forward.11} parent=5 // pred_check
      _
    $region30: #{decoder_forward.11} parent=5 // pred_check_branch
      %140 = sbr.rel (%p137) target = $region32
    $region31: #{decoder_forward.11} parent=5 // pred_region
      %s141 = ssub.s32 %s9, 1
      %p142 = scmp.lt.s32.totalorder %s14, 1
      %s143 = scalar_select %p142, %s14, 1
      %s144 = smul.addr %s143, 8
      %s145 = scalar_lea.vmem %s0, %s144
      %p146 = pneg %p35
      %p147 = pneg %p32
      %p148 = pneg %p56
      %p149 = pneg %p53
      %p150 = pneg %p77
      %p151 = pneg %p74
      %p152 = pneg %p103
      %p153 = pneg %p100
      %p154 = scmp.lt.s32.totalorder %s14, 1
      %s155 = scalar_select %p154, %s14, 1
      %s156 = smul.addr %s155, 8
      %s157 = scalar_lea.vmem %s3, %s156
      %p158 = scmp.lt.s32.totalorder %s14, 1
      %s159 = scalar_select %p158, %s14, 1
      %s160 = smul.addr %s159, 8
      %s161 = scalar_lea.vmem %s0, %s160
      %p162 = scmp.lt.s32.totalorder %s14, 1
      %s163 = scalar_select %p162, %s14, 1
      %s164 = smul.addr %s163, 8
      %s165 = scalar_lea.vmem %s3, %s164
      %v166 = vld [vmem:[%s161] sm:$0xff]
      %v167 = vld [vmem:[%s1] sm:$0xff]
      %v168 = vld [vmem:[%s1 + $0x8] sm:$0xff]
      %v169 = vld [vmem:[%s1 + $0x10] sm:$0xff]
      %v170 = vld [vmem:[%s1 + $0x18] sm:$0xff]
      %v171 = vld [vmem:[%s1 + $0x20] sm:$0xff]
      %v172 = vld [vmem:[%s1 + $0x28] sm:$0xff]
      %v173 = vld [vmem:[%s1 + $0x30] sm:$0xff]
      %v174 = vld [vmem:[%s1 + $0x38] sm:$0xff]
      %v175 = vld [vmem:[%s1 + $0x40] sm:$0xff]
      %v176 = vld [vmem:[%s1 + $0x48] sm:$0xff]
      %v177 = vld [vmem:[%s1 + $0x50] sm:$0xff]
      %v178 = vld [vmem:[%s1 + $0x58] sm:$0xff]
      %v179 = vld [vmem:[%s2] sm:$0x1]
      %v181 = vlaneseq
      %v182 = vshrl.u32 %v181, 7
      %v183 = vsub.s32 0, %v182
      %v184 = vrot.slane %v179, %v183
      %vm186 = vcmask 261120
      %v188 = vsel %vm186, %v166, 0
      %v191 = vsel %vm186, %v167, 0
      %v194 = vsel %vm186, %v168, 0
      %v197 = vsel %vm186, %v169, 0
      %v200 = vsel %vm186, %v170, 0
      %v203 = vsel %vm186, %v171, 0
      %v206 = vsel %vm186, %v172, 0
      %v209 = vsel %vm186, %v173, 0
      %v212 = vsel %vm186, %v174, 0
      %v215 = vsel %vm186, %v175, 0
      %v218 = vsel %vm186, %v176, 0
      %v221 = vsel %vm186, %v177, 0
      %v224 = vsel %vm186, %v178, 0
      %226 = vmatprep.subr.mxu0 0.0
      %227 = vmatpush1.xpose.msra.mxu0 %v191
      %228 = vmatprep.subr.mxu0 0.0
      %229 = vmatpush1.xpose.msra.mxu0 %v194
      %230 = vmatprep.subr.mxu0 0.0
      %231 = vmatpush1.xpose.msra.mxu0 %v197
      %232 = vmatprep.subr.mxu0 0.0
      %233 = vmatpush1.xpose.msra.mxu0 %v200
      %234 = vmatprep.subr.mxu0 0.0
      %235 = vmatpush1.xpose.msra.mxu0 %v203
      %236 = vmatprep.subr.mxu0 0.0
      %237 = vmatpush1.xpose.msra.mxu0 %v206
      %238 = vmatprep.subr.mxu0 0.0
      %239 = vmatpush1.xpose.msra.mxu0 %v209
      %240 = vmatprep.subr.mxu0 0.0
      %241 = vmatpush1.xpose.msra.mxu0 %v212
      %242 = vmatprep.subr.mxu0 0.0
      %243 = vmatpush1.xpose.msra.mxu0 %v215
      %244 = vmatprep.subr.mxu0 0.0
      %245 = vmatpush1.xpose.msra.mxu0 %v218
      %246 = vmatprep.subr.mxu0 0.0
      %247 = vmatpush1.xpose.msra.mxu0 %v221
      %248 = vmatprep.subr.mxu0 0.0
      %249 = vmatpush1.xpose.msra.mxu0 %v224
      %250 = vmatprep.subr.mxu0 0.0
      %251 = vmatpush1.xpose.msra.mxu0 0.0
      %252 = vmatprep.subr.mxu0 0.0
      %253 = vmatpush1.xpose.msra.mxu0 0.0
      %254 = vmatprep.subr.mxu0 0.0
      %255 = vmatpush1.xpose.msra.mxu0 0.0
      %256 = vmatprep.subr.mxu0 0.0
      %257 = vmatpush1.xpose.msra.mxu0 0.0
      %258 = vmatprep.subr.mxu0 0.0
      %259 = vmatpush1.xpose.msra.mxu0 0.0
      %260 = vmatprep.subr.mxu0 0.0
      %261 = vmatpush1.xpose.msra.mxu0 0.0
      %262 = vmatprep.subr.mxu0 0.0
      %263 = vmatpush1.xpose.msra.mxu0 0.0
      %264 = vmatprep.subr.mxu0 0.0
      %265 = vmatpush1.xpose.msra.mxu0 0.0
      %266 = vmatprep.subr.mxu0 0.0
      %267 = vmatpush1.xpose.msra.mxu0 0.0
      %268 = vmatprep.subr.mxu0 0.0
      %269 = vmatpush1.xpose.msra.mxu0 0.0
      %270 = vmatprep.subr.mxu0 0.0
      %271 = vmatpush1.xpose.msra.mxu0 0.0
      %272 = vmatprep.subr.mxu0 0.0
      %273 = vmatpush1.xpose.msra.mxu0 0.0
      %274 = vmatprep.subr.mxu0 0.0
      %275 = vmatpush1.xpose.msra.mxu0 0.0
      %276 = vmatprep.subr.mxu0 0.0
      %277 = vmatpush1.xpose.msra.mxu0 0.0
      %278 = vmatprep.subr.mxu0 0.0
      %279 = vmatpush1.xpose.msra.mxu0 0.0
      %280 = vmatprep.subr.mxu0 0.0
      %281 = vmatpush1.xpose.msra.mxu0 0.0
      %282 = vmatprep.subr.mxu0 0.0
      %283 = vmatpush1.xpose.msra.mxu0 0.0
      %284 = vmatprep.subr.mxu0 0.0
      %285 = vmatpush1.xpose.msra.mxu0 0.0
      %286 = vmatprep.subr.mxu0 0.0
      %287 = vmatpush1.xpose.msra.mxu0 0.0
      %288 = vmatprep.subr.mxu0 0.0
      %289 = vmatpush1.xpose.msra.mxu0 0.0
      %290 = vmatprep.mubr.f32.mxu0 0.0
      %291 = vmatmul.mubr.f32.gmra.mrb[0].mxu0 %v188
      %v292 = vpop.f32.mrb[0].mxu0
      %v293 = vadd.f32 %v184, %v292
      %v294 = vpop.f32.mrb[0].mxu0
      %295 = vdwg.mxu0
      %vm296 = vcmask 785408
      %297 = vst.msk [vmem:[%s165] sm:$0xff] %vm296, %v293
      %p298 = scmp.lt.s32.totalorder %s14, 1
      %s299 = scalar_select %p298, %s14, 1
      %s300 = smul.addr %s299, 8
      %s301 = scalar_lea.vmem %s3, %s300
      // Predicated region
      $region33: #{decoder_forward.11} parent=31 // pred_check
        %p302 = pneg %p100
      $region34: #{decoder_forward.11} parent=31 // pred_check_branch
        %304 = sbr.rel (%p302) target = $region36
      $region35: #{decoder_forward.11} parent=31 // pred_region
        _
      $region36: #{decoder_forward.11} parent=31 // pred_fallthru
        _
    $region32: #{decoder_forward.11} parent=5 // pred_fallthru
      _
    %p305 = scmp.le.s32.totalorder 2, %s9
    // Predicated region
    $region37: #{decoder_forward.11} parent=5 // pred_check
      %p306 = pneg %p305
    $region38: #{decoder_forward.11} parent=5 // pred_check_branch
      %308 = sbr.rel (%p306) target = $region40
    $region39: #{decoder_forward.11} parent=5 // pred_region
      %s309 = ssub.s32 %s9, 2
      // Predicated region
      $region41: #{decoder_forward.11} parent=39 // pred_check
        %p310 = pneg %p106
      $region42: #{decoder_forward.11} parent=39 // pred_check_branch
        %312 = sbr.rel (%p310) target = $region44
      $region43: #{decoder_forward.11} parent=39 // pred_region
        %p313 = scmp.lt.s32.totalorder %s15, 1
        %s314 = scalar_select %p313, %s15, 1
        %s315 = smul.addr %s314, 8
        %s316 = scalar_lea.vmem %s3, %s315
      $region44: #{decoder_forward.11} parent=39 // pred_fallthru
        _
    $region40: #{decoder_forward.11} parent=5 // pred_fallthru
      _
  $region6: #{decoder_forward.11} parent=0 // loop_footer
    %s13 = sadd.s32 1, %s9
  $region7: #{decoder_forward.11} parent=0 // loop_footer_branch
    %8 = sbr.rel target = $region3
  $region8: #{decoder_forward.11} parent=0 // loop_exit
    _

// kernel: decoder_forward.13
$region0: #{decoder_forward.13}
  #allocation0 [shape = 'u32[]', space=smem, size = 0x4, offset = 0x4, fixed_abs, tag = 'smem constant byte address 0x4 - core index']
  #allocation1 [shape = 'u32[144,128]{1,0:T(1,128)}', space=vmem, size = 0x12000, scoped, tag = 'internal scratch']
  %s0 = inlined_call_operand.vmem [shape: f32[16,32], index: 0, kind: input, shape index: {}]
  %s1 = inlined_call_operand.vmem [shape: f32[32,32], index: 1, kind: input, shape index: {}]
  %s2 = inlined_call_operand.vmem [shape: f32[1,32], index: 2, kind: input, shape index: {}]
  %s3 = inlined_call_operand.vmem [shape: f32[16,32], index: 3, kind: output, shape index: {}]
  %s4 = sld [smem:[#allocation0]]
  $region45: #{decoder_forward.13} parent=0
    _
  %s6 = ssub.s32 1, %s4
  %s7 = scalar_select 0, %s6, %s4
  loop: start=0, step=1, limit=4
  $region2: #{decoder_forward.13} parent=0 // loop_pre_header
    _
  $region3: #{decoder_forward.13} parent=0 // loop_header
    %s9 = sphi 0, %s13
    %p10 = scmp.ge.s32.totalorder %s9, 4
    %s19 = sphi 0, %s21
    %s22 = sphi 0, %s19
    %s23 = sphi 0, %s22
    %s39 = sphi 0, %s23
    %s43 = sphi 0, %s43
    %s45 = sphi 0, %s43
    %s46 = sphi 0, %s45
    %s60 = sphi 0, %s46
    %s64 = sphi 0, %s64
    %s66 = sphi 0, %s64
    %s67 = sphi 0, %s66
    %s81 = sphi 0, %s67
    %s87 = sphi 0, %s89
    %s90 = sphi 0, %s87
    %s91 = sphi 0, %s90
    %s107 = sphi 0, %s91
  $region4: #{decoder_forward.13} parent=0 // loop_header_branch
    %12 = sbr.rel (%p10) target = $region8
  $region5: #{decoder_forward.13} parent=0 // loop_body
    %s14 = ssub.s32 %s9, 1
    %s15 = ssub.s32 %s9, 2
    %s16 = sadd.s32 %s9, 1
    %s17 = ssub.s32 %s9, %s16
    %p18 = scmp.eq.s32.totalorder %s17, 0
    %s20 = sadd.s32 %s19, 1
    %s21 = scalar_select %p18, %s19, %s20
    %p24 = pneg %p18
    %p25 = scmp.eq.s32.totalorder %s9, 1
    %p26 = por %p24, %p25
    %p27 = scmp.ne.s32.totalorder %s19, %s22
    %p28 = scmp.eq.s32.totalorder %s9, 0
    %p29 = por %p27, %p28
    %p30 = scmp.ne.s32.totalorder %s19, %s22
    %p31 = scmp.eq.s32.totalorder %s14, 1
    %p32 = por %p30, %p31
    %p33 = scmp.ne.s32.totalorder %s22, %s23
    %p34 = scmp.eq.s32.totalorder %s14, 0
    %p35 = por %p33, %p34
    %p36 = scmp.ne.s32.totalorder %s22, %s23
    %p37 = scmp.eq.s32.totalorder %s15, 1
    %p38 = por %p36, %p37
    %p40 = scmp.ne.s32.totalorder %s23, %s39
    %p41 = scmp.eq.s32.totalorder %s15, 0
    %p42 = por %p40, %p41
    %s44 = sadd.s32 %s43, 1
    %p47 = scmp.eq.s32.totalorder %s9, 1
    %p48 = scmp.ne.s32.totalorder %s43, %s45
    %p49 = scmp.eq.s32.totalorder %s9, 0
    %p50 = por %p48, %p49
    %p51 = scmp.ne.s32.totalorder %s43, %s45
    %p52 = scmp.eq.s32.totalorder %s14, 1
    %p53 = por %p51, %p52
    %p54 = scmp.ne.s32.totalorder %s45, %s46
    %p55 = scmp.eq.s32.totalorder %s14, 0
    %p56 = por %p54, %p55
    %p57 = scmp.ne.s32.totalorder %s45, %s46
    %p58 = scmp.eq.s32.totalorder %s15, 1
    %p59 = por %p57, %p58
    %p61 = scmp.ne.s32.totalorder %s46, %s60
    %p62 = scmp.eq.s32.totalorder %s15, 0
    %p63 = por %p61, %p62
    %s65 = sadd.s32 %s64, 1
    %p68 = scmp.eq.s32.totalorder %s9, 1
    %p69 = scmp.ne.s32.totalorder %s64, %s66
    %p70 = scmp.eq.s32.totalorder %s9, 0
    %p71 = por %p69, %p70
    %p72 = scmp.ne.s32.totalorder %s64, %s66
    %p73 = scmp.eq.s32.totalorder %s14, 1
    %p74 = por %p72, %p73
    %p75 = scmp.ne.s32.totalorder %s66, %s67
    %p76 = scmp.eq.s32.totalorder %s14, 0
    %p77 = por %p75, %p76
    %p78 = scmp.ne.s32.totalorder %s66, %s67
    %p79 = scmp.eq.s32.totalorder %s15, 1
    %p80 = por %p78, %p79
    %p82 = scmp.ne.s32.totalorder %s67, %s81
    %p83 = scmp.eq.s32.totalorder %s15, 0
    %p84 = por %p82, %p83
    %s85 = ssub.s32 %s9, %s16
    %p86 = scmp.eq.s32.totalorder %s85, 0
    %s88 = sadd.s32 %s87, 1
    %s89 = scalar_select %p86, %s87, %s88
    %p92 = pneg %p86
    %p93 = scmp.eq.s32.totalorder %s9, 1
    %p94 = por %p92, %p93
    %p95 = scmp.ne.s32.totalorder %s87, %s90
    %p96 = scmp.eq.s32.totalorder %s9, 0
    %p97 = por %p95, %p96
    %p98 = scmp.ne.s32.totalorder %s87, %s90
    %p99 = scmp.eq.s32.totalorder %s14, 1
    %p100 = por %p98, %p99
    %p101 = scmp.ne.s32.totalorder %s90, %s91
    %p102 = scmp.eq.s32.totalorder %s14, 0
    %p103 = por %p101, %p102
    %p104 = scmp.ne.s32.totalorder %s90, %s91
    %p105 = scmp.eq.s32.totalorder %s15, 1
    %p106 = por %p104, %p105
    %p108 = scmp.ne.s32.totalorder %s91, %s107
    %p109 = scmp.eq.s32.totalorder %s15, 0
    %p110 = por %p108, %p109
    %p111 = scmp.le.s32.totalorder 1, %s9
    %p112 = scmp.lt.s32.totalorder %s9, 3
    %p113 = pnand %p111, %p112
    %p114 = pneg %p113
    // Predicated region
    $region9: #{decoder_forward.13} parent=5 // pred_check
      _
    $region10: #{decoder_forward.13} parent=5 // pred_check_branch
      %116 = sbr.rel (%p113) target = $region12
    $region11: #{decoder_forward.13} parent=5 // pred_region
      %s117 = ssub.s32 %s9, 1
      // Predicated region
      $region13: #{decoder_forward.13} parent=11 // pred_check
        %p118 = pneg %p56
      $region14: #{decoder_forward.13} parent=11 // pred_check_branch
        %120 = sbr.rel (%p118) target = $region16
      $region15: #{decoder_forward.13} parent=11 // pred_region
        _
      $region16: #{decoder_forward.13} parent=11 // pred_fallthru
        _
      // Predicated region
      $region17: #{decoder_forward.13} parent=11 // pred_check
        %p121 = pneg %p77
      $region18: #{decoder_forward.13} parent=11 // pred_check_branch
        %123 = sbr.rel (%p121) target = $region20
      $region19: #{decoder_forward.13} parent=11 // pred_region
        _
      $region20: #{decoder_forward.13} parent=11 // pred_fallthru
        _
    $region12: #{decoder_forward.13} parent=5 // pred_fallthru
      _
    %p124 = scmp.lt.s32.totalorder %s9, 2
    // Predicated region
    $region21: #{decoder_forward.13} parent=5 // pred_check
      %p125 = pneg %p124
    $region22: #{decoder_forward.13} parent=5 // pred_check_branch
      %127 = sbr.rel (%p125) target = $region24
    $region23: #{decoder_forward.13} parent=5 // pred_region
      // Predicated region
      $region25: #{decoder_forward.13} parent=23 // pred_check
        %p128 = pneg %p29
      $region26: #{decoder_forward.13} parent=23 // pred_check_branch
        %130 = sbr.rel (%p128) target = $region28
      $region27: #{decoder_forward.13} parent=23 // pred_region
        %p131 = scmp.lt.s32.totalorder %s9, 1
        %s132 = scalar_select %p131, %s9, 1
        %s133 = smul.addr %s132, 8
        %s134 = scalar_lea.vmem %s0, %s133
      $region28: #{decoder_forward.13} parent=23 // pred_fallthru
        _
    $region24: #{decoder_forward.13} parent=5 // pred_fallthru
      _
    %p135 = scmp.le.s32.totalorder 1, %s9
    %p136 = scmp.lt.s32.totalorder %s9, 3
    %p137 = pnand %p135, %p136
    %p138 = pneg %p137
    // Predicated region
    $region29: #{decoder_forward.13} parent=5 // pred_check
      _
    $region30: #{decoder_forward.13} parent=5 // pred_check_branch
      %140 = sbr.rel (%p137) target = $region32
    $region31: #{decoder_forward.13} parent=5 // pred_region
      %s141 = ssub.s32 %s9, 1
      %p142 = scmp.lt.s32.totalorder %s14, 1
      %s143 = scalar_select %p142, %s14, 1
      %s144 = smul.addr %s143, 8
      %s145 = scalar_lea.vmem %s0, %s144
      %p146 = pneg %p35
      %p147 = pneg %p32
      %p148 = pneg %p56
      %p149 = pneg %p53
      %p150 = pneg %p77
      %p151 = pneg %p74
      %p152 = pneg %p103
      %p153 = pneg %p100
      %p154 = scmp.lt.s32.totalorder %s14, 1
      %s155 = scalar_select %p154, %s14, 1
      %s156 = smul.addr %s155, 8
      %s157 = scalar_lea.vmem %s3, %s156
      %p158 = scmp.lt.s32.totalorder %s14, 1
      %s159 = scalar_select %p158, %s14, 1
      %s160 = smul.addr %s159, 8
      %s161 = scalar_lea.vmem %s0, %s160
      %p162 = scmp.lt.s32.totalorder %s14, 1
      %s163 = scalar_select %p162, %s14, 1
      %s164 = smul.addr %s163, 8
      %s165 = scalar_lea.vmem %s3, %s164
      %v166 = vld [vmem:[%s161] sm:$0xff]
      %v167 = vld [vmem:[%s1] sm:$0xff]
      %v168 = vld [vmem:[%s1 + $0x8] sm:$0xff]
      %v169 = vld [vmem:[%s1 + $0x10] sm:$0xff]
      %v170 = vld [vmem:[%s1 + $0x18] sm:$0xff]
      %v171 = vld [vmem:[%s2] sm:$0x1]
      %v173 = vlaneseq
      %v174 = vshrl.u32 %v173, 7
      %v175 = vsub.s32 0, %v174
      %v176 = vrot.slane %v171, %v175
      %vm178 = vcmask 261120
      %v180 = vsel %vm178, %v166, 0
      %v183 = vsel %vm178, %v167, 0
      %v186 = vsel %vm178, %v168, 0
      %v189 = vsel %vm178, %v169, 0
      %v192 = vsel %vm178, %v170, 0
      %194 = vmatprep.subr.mxu0 0.0
      %195 = vmatpush1.xpose.msra.mxu0 %v183
      %196 = vmatprep.subr.mxu0 0.0
      %197 = vmatpush1.xpose.msra.mxu0 %v186
      %198 = vmatprep.subr.mxu0 0.0
      %199 = vmatpush1.xpose.msra.mxu0 %v189
      %200 = vmatprep.subr.mxu0 0.0
      %201 = vmatpush1.xpose.msra.mxu0 %v192
      %202 = vmatprep.subr.mxu0 0.0
      %203 = vmatpush1.xpose.msra.mxu0 0.0
      %204 = vmatprep.subr.mxu0 0.0
      %205 = vmatpush1.xpose.msra.mxu0 0.0
      %206 = vmatprep.subr.mxu0 0.0
      %207 = vmatpush1.xpose.msra.mxu0 0.0
      %208 = vmatprep.subr.mxu0 0.0
      %209 = vmatpush1.xpose.msra.mxu0 0.0
      %210 = vmatprep.subr.mxu0 0.0
      %211 = vmatpush1.xpose.msra.mxu0 0.0
      %212 = vmatprep.subr.mxu0 0.0
      %213 = vmatpush1.xpose.msra.mxu0 0.0
      %214 = vmatprep.subr.mxu0 0.0
      %215 = vmatpush1.xpose.msra.mxu0 0.0
      %216 = vmatprep.subr.mxu0 0.0
      %217 = vmatpush1.xpose.msra.mxu0 0.0
      %218 = vmatprep.subr.mxu0 0.0
      %219 = vmatpush1.xpose.msra.mxu0 0.0
      %220 = vmatprep.subr.mxu0 0.0
      %221 = vmatpush1.xpose.msra.mxu0 0.0
      %222 = vmatprep.subr.mxu0 0.0
      %223 = vmatpush1.xpose.msra.mxu0 0.0
      %224 = vmatprep.subr.mxu0 0.0
      %225 = vmatpush1.xpose.msra.mxu0 0.0
      %226 = vmatprep.subr.mxu0 0.0
      %227 = vmatpush1.xpose.msra.mxu0 0.0
      %228 = vmatprep.subr.mxu0 0.0
      %229 = vmatpush1.xpose.msra.mxu0 0.0
      %230 = vmatprep.subr.mxu0 0.0
      %231 = vmatpush1.xpose.msra.mxu0 0.0
      %232 = vmatprep.subr.mxu0 0.0
      %233 = vmatpush1.xpose.msra.mxu0 0.0
      %234 = vmatprep.subr.mxu0 0.0
      %235 = vmatpush1.xpose.msra.mxu0 0.0
      %236 = vmatprep.subr.mxu0 0.0
      %237 = vmatpush1.xpose.msra.mxu0 0.0
      %238 = vmatprep.subr.mxu0 0.0
      %239 = vmatpush1.xpose.msra.mxu0 0.0
      %240 = vmatprep.subr.mxu0 0.0
      %241 = vmatpush1.xpose.msra.mxu0 0.0
      %242 = vmatprep.subr.mxu0 0.0
      %243 = vmatpush1.xpose.msra.mxu0 0.0
      %244 = vmatprep.subr.mxu0 0.0
      %245 = vmatpush1.xpose.msra.mxu0 0.0
      %246 = vmatprep.subr.mxu0 0.0
      %247 = vmatpush1.xpose.msra.mxu0 0.0
      %248 = vmatprep.subr.mxu0 0.0
      %249 = vmatpush1.xpose.msra.mxu0 0.0
      %250 = vmatprep.subr.mxu0 0.0
      %251 = vmatpush1.xpose.msra.mxu0 0.0
      %252 = vmatprep.subr.mxu0 0.0
      %253 = vmatpush1.xpose.msra.mxu0 0.0
      %254 = vmatprep.subr.mxu0 0.0
      %255 = vmatpush1.xpose.msra.mxu0 0.0
      %256 = vmatprep.subr.mxu0 0.0
      %257 = vmatpush1.xpose.msra.mxu0 0.0
      %258 = vmatprep.mubr.f32.mxu0 0.0
      %259 = vmatmul.mubr.f32.gmra.mrb[0].mxu0 %v180
      %v260 = vpop.f32.mrb[0].mxu0
      %v261 = vadd.f32 %v176, %v260
      %v262 = vpop.f32.mrb[0].mxu0
      %263 = vdwg.mxu0
      %264 = vst.msk [vmem:[%s165] sm:$0xff] %vm178, %v261
      %p265 = scmp.lt.s32.totalorder %s14, 1
      %s266 = scalar_select %p265, %s14, 1
      %s267 = smul.addr %s266, 8
      %s268 = scalar_lea.vmem %s3, %s267
      // Predicated region
      $region33: #{decoder_forward.13} parent=31 // pred_check
        %p269 = pneg %p100
      $region34: #{decoder_forward.13} parent=31 // pred_check_branch
        %271 = sbr.rel (%p269) target = $region36
      $region35: #{decoder_forward.13} parent=31 // pred_region
        _
      $region36: #{decoder_forward.13} parent=31 // pred_fallthru
        _
    $region32: #{decoder_forward.13} parent=5 // pred_fallthru
      _
    %p272 = scmp.le.s32.totalorder 2, %s9
    // Predicated region
    $region37: #{decoder_forward.13} parent=5 // pred_check
      %p273 = pneg %p272
    $region38: #{decoder_forward.13} parent=5 // pred_check_branch
      %275 = sbr.rel (%p273) target = $region40
    $region39: #{decoder_forward.13} parent=5 // pred_region
      %s276 = ssub.s32 %s9, 2
      // Predicated region
      $region41: #{decoder_forward.13} parent=39 // pred_check
        %p277 = pneg %p106
      $region42: #{decoder_forward.13} parent=39 // pred_check_branch
        %279 = sbr.rel (%p277) target = $region44
      $region43: #{decoder_forward.13} parent=39 // pred_region
        %p280 = scmp.lt.s32.totalorder %s15, 1
        %s281 = scalar_select %p280, %s15, 1
        %s282 = smul.addr %s281, 8
        %s283 = scalar_lea.vmem %s3, %s282
      $region44: #{decoder_forward.13} parent=39 // pred_fallthru
        _
    $region40: #{decoder_forward.13} parent=5 // pred_fallthru
      _
  $region6: #{decoder_forward.13} parent=0 // loop_footer
    %s13 = sadd.s32 1, %s9
  $region7: #{decoder_forward.13} parent=0 // loop_footer_branch
    %8 = sbr.rel target = $region3
  $region8: #{decoder_forward.13} parent=0 // loop_exit
    _

// kernel: decoder_forward.12
$region0: #{decoder_forward.12}
  #allocation0 [shape = 'u32[]', space=smem, size = 0x4, offset = 0x4, fixed_abs, tag = 'smem constant byte address 0x4 - core index']
  #allocation1 [shape = 'u32[144,128]{1,0:T(1,128)}', space=vmem, size = 0x12000, scoped, tag = 'internal scratch']
  %s0 = inlined_call_operand.vmem [shape: f32[2,8,32], index: 0, kind: input, shape index: {}]
  %s1 = inlined_call_operand.vmem [shape: f32[2,8,32], index: 1, kind: input, shape index: {}]
  %s2 = inlined_call_operand.vmem [shape: f32[2,8,32], index: 2, kind: input, shape index: {}]
  %s3 = inlined_call_operand.vmem [shape: s32[2,8,8], index: 3, kind: input, shape index: {}]
  %s4 = inlined_call_operand.vmem [shape: f32[2,8,32], index: 4, kind: output, shape index: {0}]
  %s5 = inlined_call_operand.hbm [shape: f32[2,4,8,8], index: 5, kind: output, shape index: {1}]
  %6 = xla_tuple %s4, %s5
  %s7 = sld [smem:[#allocation0]]
  $region57: #{decoder_forward.12} parent=0
    _
  %s9 = ssub.s32 1, %s7
  %s10 = scalar_select 0, %s9, %s7
  $region1: #{decoder_forward.12} parent=0
    #allocation2 [shape = 'u8[32768]{0}', space=vmem, size = 0x8000, scoped, tag = 'output window, operand 1']
    #allocation3 [shape = 's32[2]{0}', space=sflag, size = 0x8, scoped, tag = 'scoped memory for decoder_forward.12']
    %11 = vsyncpa [#allocation3], 0
    %s12 = scalar_lea.sflag [#allocation3], 1
    %13 = vsyncpa %s12, 0
    loop: start=0, step=1, limit=4
    $region2: #{decoder_forward.12} parent=1 // loop_pre_header
      _
    $region3: #{decoder_forward.12} parent=1 // loop_header
      %s15 = sphi 0, %s19
      %p16 = scmp.ge.s32.totalorder %s15, 4
      %s25 = sphi 0, %s27
      %s28 = sphi 0, %s25
      %s29 = sphi 0, %s28
      %s45 = sphi 0, %s29
      %s51 = sphi 0, %s53
      %s54 = sphi 0, %s51
      %s55 = sphi 0, %s54
      %s71 = sphi 0, %s55
      %s77 = sphi 0, %s79
      %s80 = sphi 0, %s77
      %s81 = sphi 0, %s80
      %s97 = sphi 0, %s81
      %s103 = sphi 0, %s105
      %s106 = sphi 0, %s103
      %s107 = sphi 0, %s106
      %s123 = sphi 0, %s107
      %s129 = sphi 0, %s131
      %s132 = sphi 0, %s129
      %s133 = sphi 0, %s132
      %s149 = sphi 0, %s133
      %s155 = sphi 0, %s157
      %s158 = sphi 0, %s155
      %s159 = sphi 0, %s158
      %s175 = sphi 0, %s159
    $region4: #{decoder_forward.12} parent=1 // loop_header_branch
      %18 = sbr.rel (%p16) target = $region8
    $region5: #{decoder_forward.12} parent=1 // loop_body
      %s20 = ssub.s32 %s15, 1
      %s21 = ssub.s32 %s15, 2
      %s22 = sadd.s32 %s15, 1
      %s23 = ssub.s32 %s15, %s22
      %p24 = scmp.eq.s32.totalorder %s23, 0
      %s26 = sadd.s32 %s25, 1
      %s27 = scalar_select %p24, %s25, %s26
      %p30 = pneg %p24
      %p31 = scmp.eq.s32.totalorder %s15, 1
      %p32 = por %p30, %p31
      %p33 = scmp.ne.s32.totalorder %s25, %s28
      %p34 = scmp.eq.s32.totalorder %s15, 0
      %p35 = por %p33, %p34
      %p36 = scmp.ne.s32.totalorder %s25, %s28
      %p37 = scmp.eq.s32.totalorder %s20, 1
      %p38 = por %p36, %p37
      %p39 = scmp.ne.s32.totalorder %s28, %s29
      %p40 = scmp.eq.s32.totalorder %s20, 0
      %p41 = por %p39, %p40
      %p42 = scmp.ne.s32.totalorder %s28, %s29
      %p43 = scmp.eq.s32.totalorder %s21, 1
      %p44 = por %p42, %p43
      %p46 = scmp.ne.s32.totalorder %s29, %s45
      %p47 = scmp.eq.s32.totalorder %s21, 0
      %p48 = por %p46, %p47
      %s49 = ssub.s32 %s15, %s22
      %p50 = scmp.eq.s32.totalorder %s49, 0
      %s52 = sadd.s32 %s51, 1
      %s53 = scalar_select %p50, %s51, %s52
      %p56 = pneg %p50
      %p57 = scmp.eq.s32.totalorder %s15, 1
      %p58 = por %p56, %p57
      %p59 = scmp.ne.s32.totalorder %s51, %s54
      %p60 = scmp.eq.s32.totalorder %s15, 0
      %p61 = por %p59, %p60
      %p62 = scmp.ne.s32.totalorder %s51, %s54
      %p63 = scmp.eq.s32.totalorder %s20, 1
      %p64 = por %p62, %p63
      %p65 = scmp.ne.s32.totalorder %s54, %s55
      %p66 = scmp.eq.s32.totalorder %s20, 0
      %p67 = por %p65, %p66
      %p68 = scmp.ne.s32.totalorder %s54, %s55
      %p69 = scmp.eq.s32.totalorder %s21, 1
      %p70 = por %p68, %p69
      %p72 = scmp.ne.s32.totalorder %s55, %s71
      %p73 = scmp.eq.s32.totalorder %s21, 0
      %p74 = por %p72, %p73
      %s75 = ssub.s32 %s15, %s22
      %p76 = scmp.eq.s32.totalorder %s75, 0
      %s78 = sadd.s32 %s77, 1
      %s79 = scalar_select %p76, %s77, %s78
      %p82 = pneg %p76
      %p83 = scmp.eq.s32.totalorder %s15, 1
      %p84 = por %p82, %p83
      %p85 = scmp.ne.s32.totalorder %s77, %s80
      %p86 = scmp.eq.s32.totalorder %s15, 0
      %p87 = por %p85, %p86
      %p88 = scmp.ne.s32.totalorder %s77, %s80
      %p89 = scmp.eq.s32.totalorder %s20, 1
      %p90 = por %p88, %p89
      %p91 = scmp.ne.s32.totalorder %s80, %s81
      %p92 = scmp.eq.s32.totalorder %s20, 0
      %p93 = por %p91, %p92
      %p94 = scmp.ne.s32.totalorder %s80, %s81
      %p95 = scmp.eq.s32.totalorder %s21, 1
      %p96 = por %p94, %p95
      %p98 = scmp.ne.s32.totalorder %s81, %s97
      %p99 = scmp.eq.s32.totalorder %s21, 0
      %p100 = por %p98, %p99
      %s101 = ssub.s32 %s15, %s22
      %p102 = scmp.eq.s32.totalorder %s101, 0
      %s104 = sadd.s32 %s103, 1
      %s105 = scalar_select %p102, %s103, %s104
      %p108 = pneg %p102
      %p109 = scmp.eq.s32.totalorder %s15, 1
      %p110 = por %p108, %p109
      %p111 = scmp.ne.s32.totalorder %s103, %s106
      %p112 = scmp.eq.s32.totalorder %s15, 0
      %p113 = por %p111, %p112
      %p114 = scmp.ne.s32.totalorder %s103, %s106
      %p115 = scmp.eq.s32.totalorder %s20, 1
      %p116 = por %p114, %p115
      %p117 = scmp.ne.s32.totalorder %s106, %s107
      %p118 = scmp.eq.s32.totalorder %s20, 0
      %p119 = por %p117, %p118
      %p120 = scmp.ne.s32.totalorder %s106, %s107
      %p121 = scmp.eq.s32.totalorder %s21, 1
      %p122 = por %p120, %p121
      %p124 = scmp.ne.s32.totalorder %s107, %s123
      %p125 = scmp.eq.s32.totalorder %s21, 0
      %p126 = por %p124, %p125
      %s127 = ssub.s32 %s15, %s22
      %p128 = scmp.eq.s32.totalorder %s127, 0
      %s130 = sadd.s32 %s129, 1
      %s131 = scalar_select %p128, %s129, %s130
      %p134 = pneg %p128
      %p135 = scmp.eq.s32.totalorder %s15, 1
      %p136 = por %p134, %p135
      %p137 = scmp.ne.s32.totalorder %s129, %s132
      %p138 = scmp.eq.s32.totalorder %s15, 0
      %p139 = por %p137, %p138
      %p140 = scmp.ne.s32.totalorder %s129, %s132
      %p141 = scmp.eq.s32.totalorder %s20, 1
      %p142 = por %p140, %p141
      %p143 = scmp.ne.s32.totalorder %s132, %s133
      %p144 = scmp.eq.s32.totalorder %s20, 0
      %p145 = por %p143, %p144
      %p146 = scmp.ne.s32.totalorder %s132, %s133
      %p147 = scmp.eq.s32.totalorder %s21, 1
      %p148 = por %p146, %p147
      %p150 = scmp.ne.s32.totalorder %s133, %s149
      %p151 = scmp.eq.s32.totalorder %s21, 0
      %p152 = por %p150, %p151
      %s153 = ssub.s32 %s15, %s22
      %p154 = scmp.eq.s32.totalorder %s153, 0
      %s156 = sadd.s32 %s155, 1
      %s157 = scalar_select %p154, %s155, %s156
      %p160 = pneg %p154
      %p161 = scmp.eq.s32.totalorder %s15, 1
      %p162 = por %p160, %p161
      %p163 = scmp.ne.s32.totalorder %s155, %s158
      %p164 = scmp.eq.s32.totalorder %s15, 0
      %p165 = por %p163, %p164
      %p166 = scmp.ne.s32.totalorder %s155, %s158
      %p167 = scmp.eq.s32.totalorder %s20, 1
      %p168 = por %p166, %p167
      %p169 = scmp.ne.s32.totalorder %s158, %s159
      %p170 = scmp.eq.s32.totalorder %s20, 0
      %p171 = por %p169, %p170
      %p172 = scmp.ne.s32.totalorder %s158, %s159
      %p173 = scmp.eq.s32.totalorder %s21, 1
      %p174 = por %p172, %p173
      %p176 = scmp.ne.s32.totalorder %s159, %s175
      %p177 = scmp.eq.s32.totalorder %s21, 0
      %p178 = por %p176, %p177
      %p179 = scmp.le.s32.totalorder 1, %s15
      %p180 = scmp.lt.s32.totalorder %s15, 3
      %p181 = pnand %p179, %p180
      %p182 = pneg %p181
      // Predicated region
      $region9: #{decoder_forward.12} parent=5 // pred_check
        _
      $region10: #{decoder_forward.12} parent=5 // pred_check_branch
        %184 = sbr.rel (%p181) target = $region12
      $region11: #{decoder_forward.12} parent=5 // pred_region
        %s185 = ssub.s32 %s15, 1
      $region12: #{decoder_forward.12} parent=5 // pred_fallthru
        _
      %p186 = scmp.lt.s32.totalorder %s15, 2
      // Predicated region
      $region13: #{decoder_forward.12} parent=5 // pred_check
        %p187 = pneg %p186
      $region14: #{decoder_forward.12} parent=5 // pred_check_branch
        %189 = sbr.rel (%p187) target = $region16
      $region15: #{decoder_forward.12} parent=5 // pred_region
        // Predicated region
        $region17: #{decoder_forward.12} parent=15 // pred_check
          %p190 = pneg %p35
        $region18: #{decoder_forward.12} parent=15 // pred_check_branch
          %192 = sbr.rel (%p190) target = $region20
        $region19: #{decoder_forward.12} parent=15 // pred_region
          %p193 = scmp.lt.s32.totalorder %s15, 1
          %s194 = scalar_select %p193, %s15, 1
          %s195 = smul.addr %s194, 8
          %s196 = scalar_lea.vmem %s0, %s195
        $region20: #{decoder_forward.12} parent=15 // pred_fallthru
          _
        // Predicated region
        $region21: #{decoder_forward.12} parent=15 // pred_check
          %p197 = pneg %p61
        $region22: #{decoder_forward.12} parent=15 // pred_check_branch
          %199 = sbr.rel (%p197) target = $region24
        $region23: #{decoder_forward.12} parent=15 // pred_region
          %p200 = scmp.lt.s32.totalorder %s15, 1
          %s201 = scalar_select %p200, %s15, 1
          %s202 = smul.addr %s201, 8
          %s203 = scalar_lea.vmem %s1, %s202
        $region24: #{decoder_forward.12} parent=15 // pred_fallthru
          _
        // Predicated region
        $region25: #{decoder_forward.12} parent=15 // pred_check
          %p204 = pneg %p87
        $region26: #{decoder_forward.12} parent=15 // pred_check_branch
          %206 = sbr.rel (%p204) target = $region28
        $region27: #{decoder_forward.12} parent=15 // pred_region
          %p207 = scmp.lt.s32.totalorder %s15, 1
          %s208 = scalar_select %p207, %s15, 1
          %s209 = smul.addr %s208, 8
          %s210 = scalar_lea.vmem %s2, %s209
        $region28: #{decoder_forward.12} parent=15 // pred_fallthru
          _
        // Predicated region
        $region29: #{decoder_forward.12} parent=15 // pred_check
          %p211 = pneg %p113
        $region30: #{decoder_forward.12} parent=15 // pred_check_branch
          %213 = sbr.rel (%p211) target = $region32
        $region31: #{decoder_forward.12} parent=15 // pred_region
          %p214 = scmp.lt.s32.totalorder %s15, 1
          %s215 = scalar_select %p214, %s15, 1
          %s216 = smul.addr %s215, 8
          %s217 = scalar_lea.vmem %s3, %s216
        $region32: #{decoder_forward.12} parent=15 // pred_fallthru
          _
      $region16: #{decoder_forward.12} parent=5 // pred_fallthru
        _
      %p218 = scmp.le.s32.totalorder 1, %s15
      %p219 = scmp.lt.s32.totalorder %s15, 3
      %p220 = pnand %p218, %p219
      %p221 = pneg %p220
      // Predicated region
      $region33: #{decoder_forward.12} parent=5 // pred_check
        _
      $region34: #{decoder_forward.12} parent=5 // pred_check_branch
        %223 = sbr.rel (%p220) target = $region36
      $region35: #{decoder_forward.12} parent=5 // pred_region
        %s224 = ssub.s32 %s15, 1
        %p225 = scmp.lt.s32.totalorder %s20, 1
        %s226 = scalar_select %p225, %s20, 1
        %s227 = smul.addr %s226, 8
        %s228 = scalar_lea.vmem %s0, %s227
        %p229 = pneg %p41
        %p230 = pneg %p38
        %p231 = scmp.lt.s32.totalorder %s20, 1
        %s232 = scalar_select %p231, %s20, 1
        %s233 = smul.addr %s232, 8
        %s234 = scalar_lea.vmem %s1, %s233
        %p235 = pneg %p67
        %p236 = pneg %p64
        %p237 = scmp.lt.s32.totalorder %s20, 1
        %s238 = scalar_select %p237, %s20, 1
        %s239 = smul.addr %s238, 8
        %s240 = scalar_lea.vmem %s2, %s239
        %p241 = pneg %p93
        %p242 = pneg %p90
        %p243 = scmp.lt.s32.totalorder %s20, 1
        %s244 = scalar_select %p243, %s20, 1
        %s245 = smul.addr %s244, 8
        %s246 = scalar_lea.vmem %s3, %s245
        %p247 = pneg %p119
        %p248 = pneg %p116
        %p249 = pneg %p145
        %p250 = pneg %p142
        %p251 = scmp.lt.s32.totalorder %s20, 1
        %s252 = scalar_select %p251, %s20, 1
        %s253 = smul.addr %s252, 8
        %s254 = scalar_lea.vmem %s4, %s253
        %p255 = pneg %p171
        %p256 = pneg %p168
        %s257 = sand.u32 %s158, 1
        %s258 = scalar_lea.sflag [#allocation3], %s257
        %s259 = sand.u32 %s158, 1
        %s260 = smul.addr %s259, 32
        %s261 = scalar_lea.vmem [#allocation2], %s260
        %p262 = scmp.lt.s32.totalorder %s20, 1
        %s263 = scalar_select %p262, %s20, 1
        %s264 = smul.addr %s263, 8
        %s265 = scalar_lea.vmem %s0, %s264
        %p266 = scmp.lt.s32.totalorder %s20, 1
        %s267 = scalar_select %p266, %s20, 1
        %s268 = smul.addr %s267, 8
        %s269 = scalar_lea.vmem %s1, %s268
        %p270 = scmp.lt.s32.totalorder %s20, 1
        %s271 = scalar_select %p270, %s20, 1
        %s272 = smul.addr %s271, 8
        %s273 = scalar_lea.vmem %s2, %s272
        %p274 = scmp.lt.s32.totalorder %s20, 1
        %s275 = scalar_select %p274, %s20, 1
        %s276 = smul.addr %s275, 8
        %s277 = scalar_lea.vmem %s3, %s276
        %p278 = scmp.lt.s32.totalorder %s20, 1
        %s279 = scalar_select %p278, %s20, 1
        %s280 = smul.addr %s279, 8
        %s281 = scalar_lea.vmem %s4, %s280
        %v282 = vld [vmem:[%s265] sm:$0xff]
        %v283 = vld [vmem:[%s269] sm:$0xff]
        %v284 = vld [vmem:[%s273] sm:$0xff]
        %v285 = vld [vmem:[%s277] sm:$0xff]
        %vm286 = vcmp.ne.s32.totalorder %v285, 0
        %vm287 = vcmask 64512
        %v289 = vsel %vm287, %v282, 0
        %v292 = vsel %vm287, %v283, 0
        %294 = vmatprep.subr.mxu0 0.0
        %295 = vmatpush1.xpose.msra.mxu0 %v292
        %296 = vmatprep.subr.mxu0 0.0
        %297 = vmatpush1.xpose.msra.mxu0 0.0
        %298 = vmatprep.subr.mxu0 0.0
        %299 = vmatpush1.xpose.msra.mxu0 0.0
        %300 = vmatprep.subr.mxu0 0.0
        %301 = vmatpush1.xpose.msra.mxu0 0.0
        %302 = vmatprep.subr.mxu0 0.0
        %303 = vmatpush1.xpose.msra.mxu0 0.0
        %304 = vmatprep.subr.mxu0 0.0
        %305 = vmatpush1.xpose.msra.mxu0 0.0
        %306 = vmatprep.subr.mxu0 0.0
        %307 = vmatpush1.xpose.msra.mxu0 0.0
        %308 = vmatprep.subr.mxu0 0.0
        %309 = vmatpush1.xpose.msra.mxu0 0.0
        %310 = vmatprep.subr.mxu0 0.0
        %311 = vmatpush1.xpose.msra.mxu0 0.0
        %312 = vmatprep.subr.mxu0 0.0
        %313 = vmatpush1.xpose.msra.mxu0 0.0
        %314 = vmatprep.subr.mxu0 0.0
        %315 = vmatpush1.xpose.msra.mxu0 0.0
        %316 = vmatprep.subr.mxu0 0.0
        %317 = vmatpush1.xpose.msra.mxu0 0.0
        %318 = vmatprep.subr.mxu0 0.0
        %319 = vmatpush1.xpose.msra.mxu0 0.0
        %320 = vmatprep.subr.mxu0 0.0
        %321 = vmatpush1.xpose.msra.mxu0 0.0
        %322 = vmatprep.subr.mxu0 0.0
        %323 = vmatpush1.xpose.msra.mxu0 0.0
        %324 = vmatprep.subr.mxu0 0.0
        %325 = vmatpush1.xpose.msra.mxu0 0.0
        %326 = vmatprep.subr.mxu0 0.0
        %327 = vmatpush1.xpose.msra.mxu0 0.0
        %328 = vmatprep.subr.mxu0 0.0
        %329 = vmatpush1.xpose.msra.mxu0 0.0
        %330 = vmatprep.subr.mxu0 0.0
        %331 = vmatpush1.xpose.msra.mxu0 0.0
        %332 = vmatprep.subr.mxu0 0.0
        %333 = vmatpush1.xpose.msra.mxu0 0.0
        %334 = vmatprep.subr.mxu0 0.0
        %335 = vmatpush1.xpose.msra.mxu0 0.0
        %336 = vmatprep.subr.mxu0 0.0
        %337 = vmatpush1.xpose.msra.mxu0 0.0
        %338 = vmatprep.subr.mxu0 0.0
        %339 = vmatpush1.xpose.msra.mxu0 0.0
        %340 = vmatprep.subr.mxu0 0.0
        %341 = vmatpush1.xpose.msra.mxu0 0.0
        %342 = vmatprep.subr.mxu0 0.0
        %343 = vmatpush1.xpose.msra.mxu0 0.0
        %344 = vmatprep.subr.mxu0 0.0
        %345 = vmatpush1.xpose.msra.mxu0 0.0
        %346 = vmatprep.subr.mxu0 0.0
        %347 = vmatpush1.xpose.msra.mxu0 0.0
        %348 = vmatprep.subr.mxu0 0.0
        %349 = vmatpush1.xpose.msra.mxu0 0.0
        %350 = vmatprep.subr.mxu0 0.0
        %351 = vmatpush1.xpose.msra.mxu0 0.0
        %352 = vmatprep.subr.mxu0 0.0
        %353 = vmatpush1.xpose.msra.mxu0 0.0
        %354 = vmatprep.subr.mxu0 0.0
        %355 = vmatpush1.xpose.msra.mxu0 0.0
        %356 = vmatprep.subr.mxu0 0.0
        %357 = vmatpush1.xpose.msra.mxu0 0.0
        %358 = vmatprep.mubr.f32.mxu0 0.0
        %359 = vmatmul.mubr.f32.gmra.mrb[0].mxu0 %v289
        %v360 = vpop.f32.mrb[0].mxu0
        %v361 = vadd.f32 0.0, %v360
        %v362 = vpop.f32.mrb[0].mxu0
        %363 = vdwg.mxu0
        %v364 = vmul.f32 %v361, 0.35355338
        %v365 = vsel %vm286, -1e+09, %v364
        %v366 = vsel %vm287, %v365, -inf
        %367 = vmax.xlane.f32.xlu0 %v366
        %v368 = vpop.xlane.xlu0 %367
        %v369 = vsub.f32 %v365, %v368
        %v370 = vmul.f32 %v369, 1.442695
        %v371 = vpow.pop %v370
        %v372 = vsel %vm287, %v371, 0.0
        %373 = vadd.xlane.f32.xlu0 %v372
        %v374 = vpop.xlane.xlu0 %373
        %v375 = vrcp.pop %v374
        %v376 = vmul.f32 %v371, %v375
        %v378 = vsel %vm287, %v376, 0
        %380 = vmatprep.subr.mxu0 0.0
        %381 = vmatpush1.msra.mxu0 %v284
        %382 = vmatprep.subr.mxu0 0.0
        %383 = vmatpush1.msra.mxu0 0.0
        %384 = vmatprep.subr.mxu0 0.0
        %385 = vmatpush1.msra.mxu0 0.0
        %386 = vmatprep.subr.mxu0 0.0
        %387 = vmatpush1.msra.mxu0 0.0
        %388 = vmatprep.subr.mxu0 0.0
        %389 = vmatpush1.msra.mxu0 0.0
        %390 = vmatprep.subr.mxu0 0.0
        %391 = vmatpush1.msra.mxu0 0.0
        %392 = vmatprep.subr.mxu0 0.0
        %393 = vmatpush1.msra.mxu0 0.0
        %394 = vmatprep.subr.mxu0 0.0
        %395 = vmatpush1.msra.mxu0 0.0
        %396 = vmatprep.subr.mxu0 0.0
        %397 = vmatpush1.msra.mxu0 0.0
        %398 = vmatprep.subr.mxu0 0.0
        %399 = vmatpush1.msra.mxu0 0.0
        %400 = vmatprep.subr.mxu0 0.0
        %401 = vmatpush1.msra.mxu0 0.0
        %402 = vmatprep.subr.mxu0 0.0
        %403 = vmatpush1.msra.mxu0 0.0
        %404 = vmatprep.subr.mxu0 0.0
        %405 = vmatpush1.msra.mxu0 0.0
        %406 = vmatprep.subr.mxu0 0.0
        %407 = vmatpush1.msra.mxu0 0.0
        %408 = vmatprep.subr.mxu0 0.0
        %409 = vmatpush1.msra.mxu0 0.0
        %410 = vmatprep.subr.mxu0 0.0
        %411 = vmatpush1.msra.mxu0 0.0
        %412 = vmatprep.subr.mxu0 0.0
        %413 = vmatpush1.msra.mxu0 0.0
        %414 = vmatprep.subr.mxu0 0.0
        %415 = vmatpush1.msra.mxu0 0.0
        %416 = vmatprep.subr.mxu0 0.0
        %417 = vmatpush1.msra.mxu0 0.0
        %418 = vmatprep.subr.mxu0 0.0
        %419 = vmatpush1.msra.mxu0 0.0
        %420 = vmatprep.subr.mxu0 0.0
        %421 = vmatpush1.msra.mxu0 0.0
        %422 = vmatprep.subr.mxu0 0.0
        %423 = vmatpush1.msra.mxu0 0.0
        %424 = vmatprep.subr.mxu0 0.0
        %425 = vmatpush1.msra.mxu0 0.0
        %426 = vmatprep.subr.mxu0 0.0
        %427 = vmatpush1.msra.mxu0 0.0
        %428 = vmatprep.subr.mxu0 0.0
        %429 = vmatpush1.msra.mxu0 0.0
        %430 = vmatprep.subr.mxu0 0.0
        %431 = vmatpush1.msra.mxu0 0.0
        %432 = vmatprep.subr.mxu0 0.0
        %433 = vmatpush1.msra.mxu0 0.0
        %434 = vmatprep.subr.mxu0 0.0
        %435 = vmatpush1.msra.mxu0 0.0
        %436 = vmatprep.subr.mxu0 0.0
        %437 = vmatpush1.msra.mxu0 0.0
        %438 = vmatprep.subr.mxu0 0.0
        %439 = vmatpush1.msra.mxu0 0.0
        %440 = vmatprep.subr.mxu0 0.0
        %441 = vmatpush1.msra.mxu0 0.0
        %442 = vmatprep.subr.mxu0 0.0
        %443 = vmatpush1.msra.mxu0 0.0
        %444 = vmatprep.mubr.f32.mxu0 0.0
        %445 = vmatmul.mubr.f32.gmra.mrb[0].mxu0 %v378
        %v446 = vpop.f32.mrb[0].mxu0
        %v447 = vadd.f32 0.0, %v446
        %v448 = vpop.f32.mrb[0].mxu0
        %449 = vdwg.mxu0
        %450 = vst.msk [vmem:[%s261] sm:$0xff] %vm287, %v376
        %451 = vrot.lane.b32.xlu0 %v282, 120
        %v452 = vpop.permute.xlu0 %451
        %453 = vrot.lane.b32.xlu0 %v283, 120
        %v454 = vpop.permute.xlu0 %453
        %v455 = vsel %vm287, %v452, 0
        %v457 = vsel %vm287, %v454, 0
        %459 = vmatprep.subr.mxu0 0.0
        %460 = vmatpush1.xpose.msra.mxu0 %v457
        %461 = vmatprep.subr.mxu0 0.0
        %462 = vmatpush1.xpose.msra.mxu0 0.0
        %463 = vmatprep.subr.mxu0 0.0
        %464 = vmatpush1.xpose.msra.mxu0 0.0
        %465 = vmatprep.subr.mxu0 0.0
        %466 = vmatpush1.xpose.msra.mxu0 0.0
        %467 = vmatprep.subr.mxu0 0.0
        %468 = vmatpush1.xpose.msra.mxu0 0.0
        %469 = vmatprep.subr.mxu0 0.0
        %470 = vmatpush1.xpose.msra.mxu0 0.0
        %471 = vmatprep.subr.mxu0 0.0
        %472 = vmatpush1.xpose.msra.mxu0 0.0
        %473 = vmatprep.subr.mxu0 0.0
        %474 = vmatpush1.xpose.msra.mxu0 0.0
        %475 = vmatprep.subr.mxu0 0.0
        %476 = vmatpush1.xpose.msra.mxu0 0.0
        %477 = vmatprep.subr.mxu0 0.0
        %478 = vmatpush1.xpose.msra.mxu0 0.0
        %479 = vmatprep.subr.mxu0 0.0
        %480 = vmatpush1.xpose.msra.mxu0 0.0
        %481 = vmatprep.subr.mxu0 0.0
        %482 = vmatpush1.xpose.msra.mxu0 0.0
        %483 = vmatprep.subr.mxu0 0.0
        %484 = vmatpush1.xpose.msra.mxu0 0.0
        %485 = vmatprep.subr.mxu0 0.0
        %486 = vmatpush1.xpose.msra.mxu0 0.0
        %487 = vmatprep.subr.mxu0 0.0
        %488 = vmatpush1.xpose.msra.mxu0 0.0
        %489 = vmatprep.subr.mxu0 0.0
        %490 = vmatpush1.xpose.msra.mxu0 0.0
        %491 = vmatprep.subr.mxu0 0.0
        %492 = vmatpush1.xpose.msra.mxu0 0.0
        %493 = vmatprep.subr.mxu0 0.0
        %494 = vmatpush1.xpose.msra.mxu0 0.0
        %495 = vmatprep.subr.mxu0 0.0
        %496 = vmatpush1.xpose.msra.mxu0 0.0
        %497 = vmatprep.subr.mxu0 0.0
        %498 = vmatpush1.xpose.msra.mxu0 0.0
        %499 = vmatprep.subr.mxu0 0.0
        %500 = vmatpush1.xpose.msra.mxu0 0.0
        %501 = vmatprep.subr.mxu0 0.0
        %502 = vmatpush1.xpose.msra.mxu0 0.0
        %503 = vmatprep.subr.mxu0 0.0
        %504 = vmatpush1.xpose.msra.mxu0 0.0
        %505 = vmatprep.subr.mxu0 0.0
        %506 = vmatpush1.xpose.msra.mxu0 0.0
        %507 = vmatprep.subr.mxu0 0.0
        %508 = vmatpush1.xpose.msra.mxu0 0.0
        %509 = vmatprep.subr.mxu0 0.0
        %510 = vmatpush1.xpose.msra.mxu0 0.0
        %511 = vmatprep.subr.mxu0 0.0
        %512 = vmatpush1.xpose.msra.mxu0 0.0
        %513 = vmatprep.subr.mxu0 0.0
        %514 = vmatpush1.xpose.msra.mxu0 0.0
        %515 = vmatprep.subr.mxu0 0.0
        %516 = vmatpush1.xpose.msra.mxu0 0.0
        %517 = vmatprep.subr.mxu0 0.0
        %518 = vmatpush1.xpose.msra.mxu0 0.0
        %519 = vmatprep.subr.mxu0 0.0
        %520 = vmatpush1.xpose.msra.mxu0 0.0
        %521 = vmatprep.subr.mxu0 0.0
        %522 = vmatpush1.xpose.msra.mxu0 0.0
        %523 = vmatprep.mubr.f32.mxu0 0.0
        %524 = vmatmul.mubr.f32.gmra.mrb[0].mxu0 %v455
        %v525 = vpop.f32.mrb[0].mxu0
        %v526 = vadd.f32 0.0, %v525
        %v527 = vpop.f32.mrb[0].mxu0
        %528 = vdwg.mxu0
        %v529 = vmul.f32 %v526, 0.35355338
        %v530 = vsel %vm286, -1e+09, %v529
        %v531 = vsel %vm287, %v530, -inf
        %532 = vmax.xlane.f32.xlu0 %v531
        %v533 = vpop.xlane.xlu0 %532
        %v534 = vsub.f32 %v530, %v533
        %v535 = vmul.f32 %v534, 1.442695
        %v536 = vpow.pop %v535
        %v537 = vsel %vm287, %v536, 0.0
        %538 = vadd.xlane.f32.xlu0 %v537
        %v539 = vpop.xlane.xlu0 %538
        %v540 = vrcp.pop %v539
        %v541 = vmul.f32 %v536, %v540
        %543 = vrot.lane.b32.xlu0 %v284, 120
        %v544 = vpop.permute.xlu0 %543
        %v547 = vsel %vm287, %v541, 0
        %549 = vmatprep.subr.mxu0 0.0
        %550 = vmatpush1.msra.mxu0 %v544
        %551 = vmatprep.subr.mxu0 0.0
        %552 = vmatpush1.msra.mxu0 0.0
        %553 = vmatprep.subr.mxu0 0.0
        %554 = vmatpush1.msra.mxu0 0.0
        %555 = vmatprep.subr.mxu0 0.0
        %556 = vmatpush1.msra.mxu0 0.0
        %557 = vmatprep.subr.mxu0 0.0
        %558 = vmatpush1.msra.mxu0 0.0
        %559 = vmatprep.subr.mxu0 0.0
        %560 = vmatpush1.msra.mxu0 0.0
        %561 = vmatprep.subr.mxu0 0.0
        %562 = vmatpush1.msra.mxu0 0.0
        %563 = vmatprep.subr.mxu0 0.0
        %564 = vmatpush1.msra.mxu0 0.0
        %565 = vmatprep.subr.mxu0 0.0
        %566 = vmatpush1.msra.mxu0 0.0
        %567 = vmatprep.subr.mxu0 0.0
        %568 = vmatpush1.msra.mxu0 0.0
        %569 = vmatprep.subr.mxu0 0.0
        %570 = vmatpush1.msra.mxu0 0.0
        %571 = vmatprep.subr.mxu0 0.0
        %572 = vmatpush1.msra.mxu0 0.0
        %573 = vmatprep.subr.mxu0 0.0
        %574 = vmatpush1.msra.mxu0 0.0
        %575 = vmatprep.subr.mxu0 0.0
        %576 = vmatpush1.msra.mxu0 0.0
        %577 = vmatprep.subr.mxu0 0.0
        %578 = vmatpush1.msra.mxu0 0.0
        %579 = vmatprep.subr.mxu0 0.0
        %580 = vmatpush1.msra.mxu0 0.0
        %581 = vmatprep.subr.mxu0 0.0
        %582 = vmatpush1.msra.mxu0 0.0
        %583 = vmatprep.subr.mxu0 0.0
        %584 = vmatpush1.msra.mxu0 0.0
        %585 = vmatprep.subr.mxu0 0.0
        %586 = vmatpush1.msra.mxu0 0.0
        %587 = vmatprep.subr.mxu0 0.0
        %588 = vmatpush1.msra.mxu0 0.0
        %589 = vmatprep.subr.mxu0 0.0
        %590 = vmatpush1.msra.mxu0 0.0
        %591 = vmatprep.subr.mxu0 0.0
        %592 = vmatpush1.msra.mxu0 0.0
        %593 = vmatprep.subr.mxu0 0.0
        %594 = vmatpush1.msra.mxu0 0.0
        %595 = vmatprep.subr.mxu0 0.0
        %596 = vmatpush1.msra.mxu0 0.0
        %597 = vmatprep.subr.mxu0 0.0
        %598 = vmatpush1.msra.mxu0 0.0
        %599 = vmatprep.subr.mxu0 0.0
        %600 = vmatpush1.msra.mxu0 0.0
        %601 = vmatprep.subr.mxu0 0.0
        %602 = vmatpush1.msra.mxu0 0.0
        %603 = vmatprep.subr.mxu0 0.0
        %604 = vmatpush1.msra.mxu0 0.0
        %605 = vmatprep.subr.mxu0 0.0
        %606 = vmatpush1.msra.mxu0 0.0
        %607 = vmatprep.subr.mxu0 0.0
        %608 = vmatpush1.msra.mxu0 0.0
        %609 = vmatprep.subr.mxu0 0.0
        %610 = vmatpush1.msra.mxu0 0.0
        %611 = vmatprep.subr.mxu0 0.0
        %612 = vmatpush1.msra.mxu0 0.0
        %613 = vmatprep.mubr.f32.mxu0 0.0
        %614 = vmatmul.mubr.f32.gmra.mrb[0].mxu0 %v547
        %v615 = vpop.f32.mrb[0].mxu0
        %v616 = vadd.f32 0.0, %v615
        %v617 = vpop.f32.mrb[0].mxu0
        %618 = vdwg.mxu0
        %s619 = scalar_lea.vmem %s261, 8 [#allocation2]
        %620 = vst.msk [vmem:[%s619] sm:$0xff] %vm287, %v541
        %621 = vrot.lane.b32.xlu0 %v282, 112
        %v622 = vpop.permute.xlu0 %621
        %623 = vrot.lane.b32.xlu0 %v283, 112
        %v624 = vpop.permute.xlu0 %623
        %v625 = vsel %vm287, %v622, 0
        %v627 = vsel %vm287, %v624, 0
        %629 = vmatprep.subr.mxu0 0.0
        %630 = vmatpush1.xpose.msra.mxu0 %v627
        %631 = vmatprep.subr.mxu0 0.0
        %632 = vmatpush1.xpose.msra.mxu0 0.0
        %633 = vmatprep.subr.mxu0 0.0
        %634 = vmatpush1.xpose.msra.mxu0 0.0
        %635 = vmatprep.subr.mxu0 0.0
        %636 = vmatpush1.xpose.msra.mxu0 0.0
        %637 = vmatprep.subr.mxu0 0.0
        %638 = vmatpush1.xpose.msra.mxu0 0.0
        %639 = vmatprep.subr.mxu0 0.0
        %640 = vmatpush1.xpose.msra.mxu0 0.0
        %641 = vmatprep.subr.mxu0 0.0
        %642 = vmatpush1.xpose.msra.mxu0 0.0
        %643 = vmatprep.subr.mxu0 0.0
        %644 = vmatpush1.xpose.msra.mxu0 0.0
        %645 = vmatprep.subr.mxu0 0.0
        %646 = vmatpush1.xpose.msra.mxu0 0.0
        %647 = vmatprep.subr.mxu0 0.0
        %648 = vmatpush1.xpose.msra.mxu0 0.0
        %649 = vmatprep.subr.mxu0 0.0
        %650 = vmatpush1.xpose.msra.mxu0 0.0
        %651 = vmatprep.subr.mxu0 0.0
        %652 = vmatpush1.xpose.msra.mxu0 0.0
        %653 = vmatprep.subr.mxu0 0.0
        %654 = vmatpush1.xpose.msra.mxu0 0.0
        %655 = vmatprep.subr.mxu0 0.0
        %656 = vmatpush1.xpose.msra.mxu0 0.0
        %657 = vmatprep.subr.mxu0 0.0
        %658 = vmatpush1.xpose.msra.mxu0 0.0
        %659 = vmatprep.subr.mxu0 0.0
        %660 = vmatpush1.xpose.msra.mxu0 0.0
        %661 = vmatprep.subr.mxu0 0.0
        %662 = vmatpush1.xpose.msra.mxu0 0.0
        %663 = vmatprep.subr.mxu0 0.0
        %664 = vmatpush1.xpose.msra.mxu0 0.0
        %665 = vmatprep.subr.mxu0 0.0
        %666 = vmatpush1.xpose.msra.mxu0 0.0
        %667 = vmatprep.subr.mxu0 0.0
        %668 = vmatpush1.xpose.msra.mxu0 0.0
        %669 = vmatprep.subr.mxu0 0.0
        %670 = vmatpush1.xpose.msra.mxu0 0.0
        %671 = vmatprep.subr.mxu0 0.0
        %672 = vmatpush1.xpose.msra.mxu0 0.0
        %673 = vmatprep.subr.mxu0 0.0
        %674 = vmatpush1.xpose.msra.mxu0 0.0
        %675 = vmatprep.subr.mxu0 0.0
        %676 = vmatpush1.xpose.msra.mxu0 0.0
        %677 = vmatprep.subr.mxu0 0.0
        %678 = vmatpush1.xpose.msra.mxu0 0.0
        %679 = vmatprep.subr.mxu0 0.0
        %680 = vmatpush1.xpose.msra.mxu0 0.0
        %681 = vmatprep.subr.mxu0 0.0
        %682 = vmatpush1.xpose.msra.mxu0 0.0
        %683 = vmatprep.subr.mxu0 0.0
        %684 = vmatpush1.xpose.msra.mxu0 0.0
        %685 = vmatprep.subr.mxu0 0.0
        %686 = vmatpush1.xpose.msra.mxu0 0.0
        %687 = vmatprep.subr.mxu0 0.0
        %688 = vmatpush1.xpose.msra.mxu0 0.0
        %689 = vmatprep.subr.mxu0 0.0
        %690 = vmatpush1.xpose.msra.mxu0 0.0
        %691 = vmatprep.subr.mxu0 0.0
        %692 = vmatpush1.xpose.msra.mxu0 0.0
        %693 = vmatprep.mubr.f32.mxu0 0.0
        %694 = vmatmul.mubr.f32.gmra.mrb[0].mxu0 %v625
        %v695 = vpop.f32.mrb[0].mxu0
        %v696 = vadd.f32 0.0, %v695
        %v697 = vpop.f32.mrb[0].mxu0
        %698 = vdwg.mxu0
        %v699 = vmul.f32 %v696, 0.35355338
        %v700 = vsel %vm286, -1e+09, %v699
        %v701 = vsel %vm287, %v700, -inf
        %702 = vmax.xlane.f32.xlu0 %v701
        %v703 = vpop.xlane.xlu0 %702
        %v704 = vsub.f32 %v700, %v703
        %v705 = vmul.f32 %v704, 1.442695
        %v706 = vpow.pop %v705
        %v707 = vsel %vm287, %v706, 0.0
        %708 = vadd.xlane.f32.xlu0 %v707
        %v709 = vpop.xlane.xlu0 %708
        %v710 = vrcp.pop %v709
        %v711 = vmul.f32 %v706, %v710
        %712 = vrot.lane.b32.xlu0 %v284, 112
        %v713 = vpop.permute.xlu0 %712
        %v716 = vsel %vm287, %v711, 0
        %718 = vmatprep.subr.mxu0 0.0
        %719 = vmatpush1.msra.mxu0 %v713
        %720 = vmatprep.subr.mxu0 0.0
        %721 = vmatpush1.msra.mxu0 0.0
        %722 = vmatprep.subr.mxu0 0.0
        %723 = vmatpush1.msra.mxu0 0.0
        %724 = vmatprep.subr.mxu0 0.0
        %725 = vmatpush1.msra.mxu0 0.0
        %726 = vmatprep.subr.mxu0 0.0
        %727 = vmatpush1.msra.mxu0 0.0
        %728 = vmatprep.subr.mxu0 0.0
        %729 = vmatpush1.msra.mxu0 0.0
        %730 = vmatprep.subr.mxu0 0.0
        %731 = vmatpush1.msra.mxu0 0.0
        %732 = vmatprep.subr.mxu0 0.0
        %733 = vmatpush1.msra.mxu0 0.0
        %734 = vmatprep.subr.mxu0 0.0
        %735 = vmatpush1.msra.mxu0 0.0
        %736 = vmatprep.subr.mxu0 0.0
        %737 = vmatpush1.msra.mxu0 0.0
        %738 = vmatprep.subr.mxu0 0.0
        %739 = vmatpush1.msra.mxu0 0.0
        %740 = vmatprep.subr.mxu0 0.0
        %741 = vmatpush1.msra.mxu0 0.0
        %742 = vmatprep.subr.mxu0 0.0
        %743 = vmatpush1.msra.mxu0 0.0
        %744 = vmatprep.subr.mxu0 0.0
        %745 = vmatpush1.msra.mxu0 0.0
        %746 = vmatprep.subr.mxu0 0.0
        %747 = vmatpush1.msra.mxu0 0.0
        %748 = vmatprep.subr.mxu0 0.0
        %749 = vmatpush1.msra.mxu0 0.0
        %750 = vmatprep.subr.mxu0 0.0
        %751 = vmatpush1.msra.mxu0 0.0
        %752 = vmatprep.subr.mxu0 0.0
        %753 = vmatpush1.msra.mxu0 0.0
        %754 = vmatprep.subr.mxu0 0.0
        %755 = vmatpush1.msra.mxu0 0.0
        %756 = vmatprep.subr.mxu0 0.0
        %757 = vmatpush1.msra.mxu0 0.0
        %758 = vmatprep.subr.mxu0 0.0
        %759 = vmatpush1.msra.mxu0 0.0
        %760 = vmatprep.subr.mxu0 0.0
        %761 = vmatpush1.msra.mxu0 0.0
        %762 = vmatprep.subr.mxu0 0.0
        %763 = vmatpush1.msra.mxu0 0.0
        %764 = vmatprep.subr.mxu0 0.0
        %765 = vmatpush1.msra.mxu0 0.0
        %766 = vmatprep.subr.mxu0 0.0
        %767 = vmatpush1.msra.mxu0 0.0
        %768 = vmatprep.subr.mxu0 0.0
        %769 = vmatpush1.msra.mxu0 0.0
        %770 = vmatprep.subr.mxu0 0.0
        %771 = vmatpush1.msra.mxu0 0.0
        %772 = vmatprep.subr.mxu0 0.0
        %773 = vmatpush1.msra.mxu0 0.0
        %774 = vmatprep.subr.mxu0 0.0
        %775 = vmatpush1.msra.mxu0 0.0
        %776 = vmatprep.subr.mxu0 0.0
        %777 = vmatpush1.msra.mxu0 0.0
        %778 = vmatprep.subr.mxu0 0.0
        %779 = vmatpush1.msra.mxu0 0.0
        %780 = vmatprep.subr.mxu0 0.0
        %781 = vmatpush1.msra.mxu0 0.0
        %782 = vmatprep.mubr.f32.mxu0 0.0
        %783 = vmatmul.mubr.f32.gmra.mrb[0].mxu0 %v716
        %v784 = vpop.f32.mrb[0].mxu0
        %v785 = vadd.f32 0.0, %v784
        %v786 = vpop.f32.mrb[0].mxu0
        %787 = vdwg.mxu0
        %s788 = scalar_lea.vmem %s261, 16 [#allocation2]
        %789 = vst.msk [vmem:[%s788] sm:$0xff] %vm287, %v711
        %790 = vrot.lane.b32.xlu0 %v282, 104
        %v791 = vpop.permute.xlu0 %790
        %792 = vrot.lane.b32.xlu0 %v283, 104
        %v793 = vpop.permute.xlu0 %792
        %v794 = vsel %vm287, %v791, 0
        %v796 = vsel %vm287, %v793, 0
        %798 = vmatprep.subr.mxu0 0.0
        %799 = vmatpush1.xpose.msra.mxu0 %v796
        %800 = vmatprep.subr.mxu0 0.0
        %801 = vmatpush1.xpose.msra.mxu0 0.0
        %802 = vmatprep.subr.mxu0 0.0
        %803 = vmatpush1.xpose.msra.mxu0 0.0
        %804 = vmatprep.subr.mxu0 0.0
        %805 = vmatpush1.xpose.msra.mxu0 0.0
        %806 = vmatprep.subr.mxu0 0.0
        %807 = vmatpush1.xpose.msra.mxu0 0.0
        %808 = vmatprep.subr.mxu0 0.0
        %809 = vmatpush1.xpose.msra.mxu0 0.0
        %810 = vmatprep.subr.mxu0 0.0
        %811 = vmatpush1.xpose.msra.mxu0 0.0
        %812 = vmatprep.subr.mxu0 0.0
        %813 = vmatpush1.xpose.msra.mxu0 0.0
        %814 = vmatprep.subr.mxu0 0.0
        %815 = vmatpush1.xpose.msra.mxu0 0.0
        %816 = vmatprep.subr.mxu0 0.0
        %817 = vmatpush1.xpose.msra.mxu0 0.0
        %818 = vmatprep.subr.mxu0 0.0
        %819 = vmatpush1.xpose.msra.mxu0 0.0
        %820 = vmatprep.subr.mxu0 0.0
        %821 = vmatpush1.xpose.msra.mxu0 0.0
        %822 = vmatprep.subr.mxu0 0.0
        %823 = vmatpush1.xpose.msra.mxu0 0.0
        %824 = vmatprep.subr.mxu0 0.0
        %825 = vmatpush1.xpose.msra.mxu0 0.0
        %826 = vmatprep.subr.mxu0 0.0
        %827 = vmatpush1.xpose.msra.mxu0 0.0
        %828 = vmatprep.subr.mxu0 0.0
        %829 = vmatpush1.xpose.msra.mxu0 0.0
        %830 = vmatprep.subr.mxu0 0.0
        %831 = vmatpush1.xpose.msra.mxu0 0.0
        %832 = vmatprep.subr.mxu0 0.0
        %833 = vmatpush1.xpose.msra.mxu0 0.0
        %834 = vmatprep.subr.mxu0 0.0
        %835 = vmatpush1.xpose.msra.mxu0 0.0
        %836 = vmatprep.subr.mxu0 0.0
        %837 = vmatpush1.xpose.msra.mxu0 0.0
        %838 = vmatprep.subr.mxu0 0.0
        %839 = vmatpush1.xpose.msra.mxu0 0.0
        %840 = vmatprep.subr.mxu0 0.0
        %841 = vmatpush1.xpose.msra.mxu0 0.0
        %842 = vmatprep.subr.mxu0 0.0
        %843 = vmatpush1.xpose.msra.mxu0 0.0
        %844 = vmatprep.subr.mxu0 0.0
        %845 = vmatpush1.xpose.msra.mxu0 0.0
        %846 = vmatprep.subr.mxu0 0.0
        %847 = vmatpush1.xpose.msra.mxu0 0.0
        %848 = vmatprep.subr.mxu0 0.0
        %849 = vmatpush1.xpose.msra.mxu0 0.0
        %850 = vmatprep.subr.mxu0 0.0
        %851 = vmatpush1.xpose.msra.mxu0 0.0
        %852 = vmatprep.subr.mxu0 0.0
        %853 = vmatpush1.xpose.msra.mxu0 0.0
        %854 = vmatprep.subr.mxu0 0.0
        %855 = vmatpush1.xpose.msra.mxu0 0.0
        %856 = vmatprep.subr.mxu0 0.0
        %857 = vmatpush1.xpose.msra.mxu0 0.0
        %858 = vmatprep.subr.mxu0 0.0
        %859 = vmatpush1.xpose.msra.mxu0 0.0
        %860 = vmatprep.subr.mxu0 0.0
        %861 = vmatpush1.xpose.msra.mxu0 0.0
        %862 = vmatprep.mubr.f32.mxu0 0.0
        %863 = vmatmul.mubr.f32.gmra.mrb[0].mxu0 %v794
        %v864 = vpop.f32.mrb[0].mxu0
        %v865 = vadd.f32 0.0, %v864
        %v866 = vpop.f32.mrb[0].mxu0
        %867 = vdwg.mxu0
        %v868 = vmul.f32 %v865, 0.35355338
        %v869 = vsel %vm286, -1e+09, %v868
        %v870 = vsel %vm287, %v869, -inf
        %871 = vmax.xlane.f32.xlu0 %v870
        %v872 = vpop.xlane.xlu0 %871
        %v873 = vsub.f32 %v869, %v872
        %v874 = vmul.f32 %v873, 1.442695
        %v875 = vpow.pop %v874
        %v876 = vsel %vm287, %v875, 0.0
        %877 = vadd.xlane.f32.xlu0 %v876
        %v878 = vpop.xlane.xlu0 %877
        %v879 = vrcp.pop %v878
        %v880 = vmul.f32 %v875, %v879
        %881 = vrot.lane.b32.xlu0 %v284, 104
        %v882 = vpop.permute.xlu0 %881
        %v885 = vsel %vm287, %v880, 0
        %887 = vmatprep.subr.mxu0 0.0
        %888 = vmatpush1.msra.mxu0 %v882
        %889 = vmatprep.subr.mxu0 0.0
        %890 = vmatpush1.msra.mxu0 0.0
        %891 = vmatprep.subr.mxu0 0.0
        %892 = vmatpush1.msra.mxu0 0.0
        %893 = vmatprep.subr.mxu0 0.0
        %894 = vmatpush1.msra.mxu0 0.0
        %895 = vmatprep.subr.mxu0 0.0
        %896 = vmatpush1.msra.mxu0 0.0
        %897 = vmatprep.subr.mxu0 0.0
        %898 = vmatpush1.msra.mxu0 0.0
        %899 = vmatprep.subr.mxu0 0.0
        %900 = vmatpush1.msra.mxu0 0.0
        %901 = vmatprep.subr.mxu0 0.0
        %902 = vmatpush1.msra.mxu0 0.0
        %903 = vmatprep.subr.mxu0 0.0
        %904 = vmatpush1.msra.mxu0 0.0
        %905 = vmatprep.subr.mxu0 0.0
        %906 = vmatpush1.msra.mxu0 0.0
        %907 = vmatprep.subr.mxu0 0.0
        %908 = vmatpush1.msra.mxu0 0.0
        %909 = vmatprep.subr.mxu0 0.0
        %910 = vmatpush1.msra.mxu0 0.0
        %911 = vmatprep.subr.mxu0 0.0
        %912 = vmatpush1.msra.mxu0 0.0
        %913 = vmatprep.subr.mxu0 0.0
        %914 = vmatpush1.msra.mxu0 0.0
        %915 = vmatprep.subr.mxu0 0.0
        %916 = vmatpush1.msra.mxu0 0.0
        %917 = vmatprep.subr.mxu0 0.0
        %918 = vmatpush1.msra.mxu0 0.0
        %919 = vmatprep.subr.mxu0 0.0
        %920 = vmatpush1.msra.mxu0 0.0
        %921 = vmatprep.subr.mxu0 0.0
        %922 = vmatpush1.msra.mxu0 0.0
        %923 = vmatprep.subr.mxu0 0.0
        %924 = vmatpush1.msra.mxu0 0.0
        %925 = vmatprep.subr.mxu0 0.0
        %926 = vmatpush1.msra.mxu0 0.0
        %927 = vmatprep.subr.mxu0 0.0
        %928 = vmatpush1.msra.mxu0 0.0
        %929 = vmatprep.subr.mxu0 0.0
        %930 = vmatpush1.msra.mxu0 0.0
        %931 = vmatprep.subr.mxu0 0.0
        %932 = vmatpush1.msra.mxu0 0.0
        %933 = vmatprep.subr.mxu0 0.0
        %934 = vmatpush1.msra.mxu0 0.0
        %935 = vmatprep.subr.mxu0 0.0
        %936 = vmatpush1.msra.mxu0 0.0
        %937 = vmatprep.subr.mxu0 0.0
        %938 = vmatpush1.msra.mxu0 0.0
        %939 = vmatprep.subr.mxu0 0.0
        %940 = vmatpush1.msra.mxu0 0.0
        %941 = vmatprep.subr.mxu0 0.0
        %942 = vmatpush1.msra.mxu0 0.0
        %943 = vmatprep.subr.mxu0 0.0
        %944 = vmatpush1.msra.mxu0 0.0
        %945 = vmatprep.subr.mxu0 0.0
        %946 = vmatpush1.msra.mxu0 0.0
        %947 = vmatprep.subr.mxu0 0.0
        %948 = vmatpush1.msra.mxu0 0.0
        %949 = vmatprep.subr.mxu0 0.0
        %950 = vmatpush1.msra.mxu0 0.0
        %951 = vmatprep.mubr.f32.mxu0 0.0
        %952 = vmatmul.mubr.f32.gmra.mrb[0].mxu0 %v885
        %v953 = vpop.f32.mrb[0].mxu0
        %v954 = vadd.f32 0.0, %v953
        %v955 = vpop.f32.mrb[0].mxu0
        %956 = vdwg.mxu0
        %s957 = scalar_lea.vmem %s261, 24 [#allocation2]
        %958 = vst.msk [vmem:[%s957] sm:$0xff] %vm287, %v880
        %960 = vrot.lane.b32.xlu0 %v616, 8
        %v961 = vpop.permute.xlu0 %960
        %964 = vrot.lane.b32.xlu0 %v785, 16
        %v965 = vpop.permute.xlu0 %964
        %968 = vrot.lane.b32.xlu0 %v954, 24
        %v969 = vpop.permute.xlu0 %968
        %v971 = vsel %vm287, %v447, %v961
        %vm972 = vcmask 130048
        %v973 = vsel %vm972, %v971, %v965
        %vm974 = vcmask 195584
        %v975 = vsel %vm974, %v973, %v969
        %vm976 = vcmask 261120
        %977 = vst.msk [vmem:[%s281] sm:$0xff] %vm976, %v975
        %p978 = scmp.lt.s32.totalorder %s20, 1
        %s979 = scalar_select %p978, %s20, 1
        %s980 = smul.addr %s979, 8
        %s981 = scalar_lea.vmem %s4, %s980
        %s982 = sand.u32 %s158, 1
        %s983 = scalar_lea.sflag [#allocation3], %s982
        %s984 = sand.u32 %s158, 1
        %s985 = smul.addr %s984, 32
        %s986 = scalar_lea.vmem [#allocation2], %s985
        // Predicated region
        $region37: #{decoder_forward.12} parent=35 // pred_check
          %p987 = pneg %p142
        $region38: #{decoder_forward.12} parent=35 // pred_check_branch
          %989 = sbr.rel (%p987) target = $region40
        $region39: #{decoder_forward.12} parent=35 // pred_region
          _
        $region40: #{decoder_forward.12} parent=35 // pred_fallthru
          _
        // Predicated region
        $region41: #{decoder_forward.12} parent=35 // pred_check
          %p990 = pneg %p168
        $region42: #{decoder_forward.12} parent=35 // pred_check_branch
          %992 = sbr.rel (%p990) target = $region44
        $region43: #{decoder_forward.12} parent=35 // pred_region
          %s994 = ssub.s32 512, 512
          %995 = vsyncadd %s983, %s994
          %s996 = smul.addr %s20, 4
          %s997 = smul.addr %s996, 128
          %s998 = scalar_lea.hbm %s5, %s997
          %s999 = sshll.u32 %s986, 4
          %s1000 = int_to_ptr.vmem [resolvable:$true] %s999
          %1005 = dma.vmem_to_hbm [thread:$0]  %s1000, 512, %s998, %s983, 128, 128, 8
        $region44: #{decoder_forward.12} parent=35 // pred_fallthru
          _
      $region36: #{decoder_forward.12} parent=5 // pred_fallthru
        _
      %p1006 = scmp.le.s32.totalorder 2, %s15
      // Predicated region
      $region45: #{decoder_forward.12} parent=5 // pred_check
        %p1007 = pneg %p1006
      $region46: #{decoder_forward.12} parent=5 // pred_check_branch
        %1009 = sbr.rel (%p1007) target = $region48
      $region47: #{decoder_forward.12} parent=5 // pred_region
        %s1010 = ssub.s32 %s15, 2
        // Predicated region
        $region49: #{decoder_forward.12} parent=47 // pred_check
          %p1011 = pneg %p148
        $region50: #{decoder_forward.12} parent=47 // pred_check_branch
          %1013 = sbr.rel (%p1011) target = $region52
        $region51: #{decoder_forward.12} parent=47 // pred_region
          %p1014 = scmp.lt.s32.totalorder %s21, 1
          %s1015 = scalar_select %p1014, %s21, 1
          %s1016 = smul.addr %s1015, 8
          %s1017 = scalar_lea.vmem %s4, %s1016
        $region52: #{decoder_forward.12} parent=47 // pred_fallthru
          _
        // Predicated region
        $region53: #{decoder_forward.12} parent=47 // pred_check
          %p1018 = pneg %p174
        $region54: #{decoder_forward.12} parent=47 // pred_check_branch
          %1020 = sbr.rel (%p1018) target = $region56
        $region55: #{decoder_forward.12} parent=47 // pred_region
          %s1021 = sand.u32 %s159, 1
          %s1022 = scalar_lea.sflag [#allocation3], %s1021
          %s1023 = sand.u32 %s159, 1
          %s1024 = smul.addr %s1023, 32
          %s1025 = scalar_lea.vmem [#allocation2], %s1024
          %1026 = dma.done %s1022, 512
        $region56: #{decoder_forward.12} parent=47 // pred_fallthru
          _
      $region48: #{decoder_forward.12} parent=5 // pred_fallthru
        _
    $region6: #{decoder_forward.12} parent=1 // loop_footer
      %s19 = sadd.s32 1, %s15
    $region7: #{decoder_forward.12} parent=1 // loop_footer_branch
      %14 = sbr.rel target = $region3
    $region8: #{decoder_forward.12} parent=1 // loop_exit
      _
    %1027 = vsyncpa [#allocation3], 1
    %s1028 = scalar_lea.sflag [#allocation3], 1
    %1029 = vsyncpa %s1028, 1

// kernel: decoder_forward.14
$region0: #{decoder_forward.14}
  #allocation0 [shape = 'u32[]', space=smem, size = 0x4, offset = 0x4, fixed_abs, tag = 'smem constant byte address 0x4 - core index']
  #allocation1 [shape = 'u32[144,128]{1,0:T(1,128)}', space=vmem, size = 0x12000, scoped, tag = 'internal scratch']
  %s0 = inlined_call_operand.vmem [shape: f32[16,32], index: 0, kind: input, shape index: {}]
  %s1 = inlined_call_operand.vmem [shape: f32[16,32], index: 1, kind: input, shape index: {}]
  %s2 = inlined_call_operand.vmem [shape: f32[1,32], index: 2, kind: input, shape index: {}]
  %s3 = inlined_call_operand.vmem [shape: f32[1,32], index: 3, kind: input, shape index: {}]
  %s4 = inlined_call_operand.vmem [shape: f32[16,32], index: 4, kind: output, shape index: {}]
  %s5 = sld [smem:[#allocation0]]
  $region49: #{decoder_forward.14} parent=0
    _
  %s7 = ssub.s32 1, %s5
  %s8 = scalar_select 0, %s7, %s5
  loop: start=0, step=1, limit=4
  $region2: #{decoder_forward.14} parent=0 // loop_pre_header
    _
  $region3: #{decoder_forward.14} parent=0 // loop_header
    %s10 = sphi 0, %s14
    %p11 = scmp.ge.s32.totalorder %s10, 4
    %s20 = sphi 0, %s22
    %s23 = sphi 0, %s20
    %s24 = sphi 0, %s23
    %s40 = sphi 0, %s24
    %s46 = sphi 0, %s48
    %s49 = sphi 0, %s46
    %s50 = sphi 0, %s49
    %s66 = sphi 0, %s50
    %s70 = sphi 0, %s70
    %s72 = sphi 0, %s70
    %s73 = sphi 0, %s72
    %s87 = sphi 0, %s73
    %s91 = sphi 0, %s91
    %s93 = sphi 0, %s91
    %s94 = sphi 0, %s93
    %s108 = sphi 0, %s94
    %s114 = sphi 0, %s116
    %s117 = sphi 0, %s114
    %s118 = sphi 0, %s117
    %s134 = sphi 0, %s118
  $region4: #{decoder_forward.14} parent=0 // loop_header_branch
    %13 = sbr.rel (%p11) target = $region8
  $region5: #{decoder_forward.14} parent=0 // loop_body
    %s15 = ssub.s32 %s10, 1
    %s16 = ssub.s32 %s10, 2
    %s17 = sadd.s32 %s10, 1
    %s18 = ssub.s32 %s10, %s17
    %p19 = scmp.eq.s32.totalorder %s18, 0
    %s21 = sadd.s32 %s20, 1
    %s22 = scalar_select %p19, %s20, %s21
    %p25 = pneg %p19
    %p26 = scmp.eq.s32.totalorder %s10, 1
    %p27 = por %p25, %p26
    %p28 = scmp.ne.s32.totalorder %s20, %s23
    %p29 = scmp.eq.s32.totalorder %s10, 0
    %p30 = por %p28, %p29
    %p31 = scmp.ne.s32.totalorder %s20, %s23
    %p32 = scmp.eq.s32.totalorder %s15, 1
    %p33 = por %p31, %p32
    %p34 = scmp.ne.s32.totalorder %s23, %s24
    %p35 = scmp.eq.s32.totalorder %s15, 0
    %p36 = por %p34, %p35
    %p37 = scmp.ne.s32.totalorder %s23, %s24
    %p38 = scmp.eq.s32.totalorder %s16, 1
    %p39 = por %p37, %p38
    %p41 = scmp.ne.s32.totalorder %s24, %s40
    %p42 = scmp.eq.s32.totalorder %s16, 0
    %p43 = por %p41, %p42
    %s44 = ssub.s32 %s10, %s17
    %p45 = scmp.eq.s32.totalorder %s44, 0
    %s47 = sadd.s32 %s46, 1
    %s48 = scalar_select %p45, %s46, %s47
    %p51 = pneg %p45
    %p52 = scmp.eq.s32.totalorder %s10, 1
    %p53 = por %p51, %p52
    %p54 = scmp.ne.s32.totalorder %s46, %s49
    %p55 = scmp.eq.s32.totalorder %s10, 0
    %p56 = por %p54, %p55
    %p57 = scmp.ne.s32.totalorder %s46, %s49
    %p58 = scmp.eq.s32.totalorder %s15, 1
    %p59 = por %p57, %p58
    %p60 = scmp.ne.s32.totalorder %s49, %s50
    %p61 = scmp.eq.s32.totalorder %s15, 0
    %p62 = por %p60, %p61
    %p63 = scmp.ne.s32.totalorder %s49, %s50
    %p64 = scmp.eq.s32.totalorder %s16, 1
    %p65 = por %p63, %p64
    %p67 = scmp.ne.s32.totalorder %s50, %s66
    %p68 = scmp.eq.s32.totalorder %s16, 0
    %p69 = por %p67, %p68
    %s71 = sadd.s32 %s70, 1
    %p74 = scmp.eq.s32.totalorder %s10, 1
    %p75 = scmp.ne.s32.totalorder %s70, %s72
    %p76 = scmp.eq.s32.totalorder %s10, 0
    %p77 = por %p75, %p76
    %p78 = scmp.ne.s32.totalorder %s70, %s72
    %p79 = scmp.eq.s32.totalorder %s15, 1
    %p80 = por %p78, %p79
    %p81 = scmp.ne.s32.totalorder %s72, %s73
    %p82 = scmp.eq.s32.totalorder %s15, 0
    %p83 = por %p81, %p82
    %p84 = scmp.ne.s32.totalorder %s72, %s73
    %p85 = scmp.eq.s32.totalorder %s16, 1
    %p86 = por %p84, %p85
    %p88 = scmp.ne.s32.totalorder %s73, %s87
    %p89 = scmp.eq.s32.totalorder %s16, 0
    %p90 = por %p88, %p89
    %s92 = sadd.s32 %s91, 1
    %p95 = scmp.eq.s32.totalorder %s10, 1
    %p96 = scmp.ne.s32.totalorder %s91, %s93
    %p97 = scmp.eq.s32.totalorder %s10, 0
    %p98 = por %p96, %p97
    %p99 = scmp.ne.s32.totalorder %s91, %s93
    %p100 = scmp.eq.s32.totalorder %s15, 1
    %p101 = por %p99, %p100
    %p102 = scmp.ne.s32.totalorder %s93, %s94
    %p103 = scmp.eq.s32.totalorder %s15, 0
    %p104 = por %p102, %p103
    %p105 = scmp.ne.s32.totalorder %s93, %s94
    %p106 = scmp.eq.s32.totalorder %s16, 1
    %p107 = por %p105, %p106
    %p109 = scmp.ne.s32.totalorder %s94, %s108
    %p110 = scmp.eq.s32.totalorder %s16, 0
    %p111 = por %p109, %p110
    %s112 = ssub.s32 %s10, %s17
    %p113 = scmp.eq.s32.totalorder %s112, 0
    %s115 = sadd.s32 %s114, 1
    %s116 = scalar_select %p113, %s114, %s115
    %p119 = pneg %p113
    %p120 = scmp.eq.s32.totalorder %s10, 1
    %p121 = por %p119, %p120
    %p122 = scmp.ne.s32.totalorder %s114, %s117
    %p123 = scmp.eq.s32.totalorder %s10, 0
    %p124 = por %p122, %p123
    %p125 = scmp.ne.s32.totalorder %s114, %s117
    %p126 = scmp.eq.s32.totalorder %s15, 1
    %p127 = por %p125, %p126
    %p128 = scmp.ne.s32.totalorder %s117, %s118
    %p129 = scmp.eq.s32.totalorder %s15, 0
    %p130 = por %p128, %p129
    %p131 = scmp.ne.s32.totalorder %s117, %s118
    %p132 = scmp.eq.s32.totalorder %s16, 1
    %p133 = por %p131, %p132
    %p135 = scmp.ne.s32.totalorder %s118, %s134
    %p136 = scmp.eq.s32.totalorder %s16, 0
    %p137 = por %p135, %p136
    %p138 = scmp.le.s32.totalorder 1, %s10
    %p139 = scmp.lt.s32.totalorder %s10, 3
    %p140 = pnand %p138, %p139
    %p141 = pneg %p140
    // Predicated region
    $region9: #{decoder_forward.14} parent=5 // pred_check
      _
    $region10: #{decoder_forward.14} parent=5 // pred_check_branch
      %143 = sbr.rel (%p140) target = $region12
    $region11: #{decoder_forward.14} parent=5 // pred_region
      %s144 = ssub.s32 %s10, 1
      // Predicated region
      $region13: #{decoder_forward.14} parent=11 // pred_check
        %p145 = pneg %p83
      $region14: #{decoder_forward.14} parent=11 // pred_check_branch
        %147 = sbr.rel (%p145) target = $region16
      $region15: #{decoder_forward.14} parent=11 // pred_region
        _
      $region16: #{decoder_forward.14} parent=11 // pred_fallthru
        _
      // Predicated region
      $region17: #{decoder_forward.14} parent=11 // pred_check
        %p148 = pneg %p104
      $region18: #{decoder_forward.14} parent=11 // pred_check_branch
        %150 = sbr.rel (%p148) target = $region20
      $region19: #{decoder_forward.14} parent=11 // pred_region
        _
      $region20: #{decoder_forward.14} parent=11 // pred_fallthru
        _
    $region12: #{decoder_forward.14} parent=5 // pred_fallthru
      _
    %p151 = scmp.lt.s32.totalorder %s10, 2
    // Predicated region
    $region21: #{decoder_forward.14} parent=5 // pred_check
      %p152 = pneg %p151
    $region22: #{decoder_forward.14} parent=5 // pred_check_branch
      %154 = sbr.rel (%p152) target = $region24
    $region23: #{decoder_forward.14} parent=5 // pred_region
      // Predicated region
      $region25: #{decoder_forward.14} parent=23 // pred_check
        %p155 = pneg %p30
      $region26: #{decoder_forward.14} parent=23 // pred_check_branch
        %157 = sbr.rel (%p155) target = $region28
      $region27: #{decoder_forward.14} parent=23 // pred_region
        %p158 = scmp.lt.s32.totalorder %s10, 1
        %s159 = scalar_select %p158, %s10, 1
        %s160 = smul.addr %s159, 8
        %s161 = scalar_lea.vmem %s0, %s160
      $region28: #{decoder_forward.14} parent=23 // pred_fallthru
        _
      // Predicated region
      $region29: #{decoder_forward.14} parent=23 // pred_check
        %p162 = pneg %p56
      $region30: #{decoder_forward.14} parent=23 // pred_check_branch
        %164 = sbr.rel (%p162) target = $region32
      $region31: #{decoder_forward.14} parent=23 // pred_region
        %p165 = scmp.lt.s32.totalorder %s10, 1
        %s166 = scalar_select %p165, %s10, 1
        %s167 = smul.addr %s166, 8
        %s168 = scalar_lea.vmem %s1, %s167
      $region32: #{decoder_forward.14} parent=23 // pred_fallthru
        _
    $region24: #{decoder_forward.14} parent=5 // pred_fallthru
      _
    %p169 = scmp.le.s32.totalorder 1, %s10
    %p170 = scmp.lt.s32.totalorder %s10, 3
    %p171 = pnand %p169, %p170
    %p172 = pneg %p171
    // Predicated region
    $region33: #{decoder_forward.14} parent=5 // pred_check
      _
    $region34: #{decoder_forward.14} parent=5 // pred_check_branch
      %174 = sbr.rel (%p171) target = $region36
    $region35: #{decoder_forward.14} parent=5 // pred_region
      %s175 = ssub.s32 %s10, 1
      %p176 = scmp.lt.s32.totalorder %s15, 1
      %s177 = scalar_select %p176, %s15, 1
      %s178 = smul.addr %s177, 8
      %s179 = scalar_lea.vmem %s0, %s178
      %p180 = pneg %p36
      %p181 = pneg %p33
      %p182 = scmp.lt.s32.totalorder %s15, 1
      %s183 = scalar_select %p182, %s15, 1
      %s184 = smul.addr %s183, 8
      %s185 = scalar_lea.vmem %s1, %s184
      %p186 = pneg %p62
      %p187 = pneg %p59
      %p188 = pneg %p83
      %p189 = pneg %p80
      %p190 = pneg %p104
      %p191 = pneg %p101
      %p192 = pneg %p130
      %p193 = pneg %p127
      %p194 = scmp.lt.s32.totalorder %s15, 1
      %s195 = scalar_select %p194, %s15, 1
      %s196 = smul.addr %s195, 8
      %s197 = scalar_lea.vmem %s4, %s196
      %p198 = scmp.lt.s32.totalorder %s15, 1
      %s199 = scalar_select %p198, %s15, 1
      %s200 = smul.addr %s199, 8
      %s201 = scalar_lea.vmem %s0, %s200
      %p202 = scmp.lt.s32.totalorder %s15, 1
      %s203 = scalar_select %p202, %s15, 1
      %s204 = smul.addr %s203, 8
      %s205 = scalar_lea.vmem %s1, %s204
      %p206 = scmp.lt.s32.totalorder %s15, 1
      %s207 = scalar_select %p206, %s15, 1
      %s208 = smul.addr %s207, 8
      %s209 = scalar_lea.vmem %s4, %s208
      %v210 = vld [vmem:[%s201] sm:$0xff]
      %v211 = vld [vmem:[%s205] sm:$0xff]
      %v212 = vadd.f32 %v210, %v211
      %vm213 = vcmask 261120
      %v214 = vsel %vm213, %v212, 0.0
      %215 = vadd.xlane.f32.xlu0 %v214
      %v216 = vpop.xlane.xlu0 %215
      %v217 = vrcp.pop 32.0
      %v218 = vmul.f32 %v216, %v217
      %v219 = vsub.f32 %v212, %v218
      %v220 = vmul.f32 %v219, %v219
      %v221 = vsel %vm213, %v220, 0.0
      %222 = vadd.xlane.f32.xlu0 %v221
      %v223 = vpop.xlane.xlu0 %222
      %v224 = vmul.f32 %v223, %v217
      %v225 = vadd.f32 %v224, 1e-12
      %v226 = vrsqrt.pop %v225
      %v227 = vmul.f32 %v219, %v226
      %v228 = vld [vmem:[%s2] sm:$0x1]
      %v230 = vlaneseq
      %v231 = vshrl.u32 %v230, 7
      %v232 = vsub.s32 0, %v231
      %v233 = vrot.slane %v228, %v232
      %v235 = vmul.f32 %v227, %v233
      %v236 = vld [vmem:[%s3] sm:$0x1]
      %v238 = vlaneseq
      %v239 = vshrl.u32 %v238, 7
      %v240 = vsub.s32 0, %v239
      %v241 = vrot.slane %v236, %v240
      %v243 = vadd.f32 %v235, %v241
      %244 = vst.msk [vmem:[%s209] sm:$0xff] %vm213, %v243
      %p245 = scmp.lt.s32.totalorder %s15, 1
      %s246 = scalar_select %p245, %s15, 1
      %s247 = smul.addr %s246, 8
      %s248 = scalar_lea.vmem %s4, %s247
      // Predicated region
      $region37: #{decoder_forward.14} parent=35 // pred_check
        %p249 = pneg %p127
      $region38: #{decoder_forward.14} parent=35 // pred_check_branch
        %251 = sbr.rel (%p249) target = $region40
      $region39: #{decoder_forward.14} parent=35 // pred_region
        _
      $region40: #{decoder_forward.14} parent=35 // pred_fallthru
        _
    $region36: #{decoder_forward.14} parent=5 // pred_fallthru
      _
    %p252 = scmp.le.s32.totalorder 2, %s10
    // Predicated region
    $region41: #{decoder_forward.14} parent=5 // pred_check
      %p253 = pneg %p252
    $region42: #{decoder_forward.14} parent=5 // pred_check_branch
      %255 = sbr.rel (%p253) target = $region44
    $region43: #{decoder_forward.14} parent=5 // pred_region
      %s256 = ssub.s32 %s10, 2
      // Predicated region
      $region45: #{decoder_forward.14} parent=43 // pred_check
        %p257 = pneg %p133
      $region46: #{decoder_forward.14} parent=43 // pred_check_branch
        %259 = sbr.rel (%p257) target = $region48
      $region47: #{decoder_forward.14} parent=43 // pred_region
        %p260 = scmp.lt.s32.totalorder %s16, 1
        %s261 = scalar_select %p260, %s16, 1
        %s262 = smul.addr %s261, 8
        %s263 = scalar_lea.vmem %s4, %s262
      $region48: #{decoder_forward.14} parent=43 // pred_fallthru
        _
    $region44: #{decoder_forward.14} parent=5 // pred_fallthru
      _
  $region6: #{decoder_forward.14} parent=0 // loop_footer
    %s14 = sadd.s32 1, %s10
  $region7: #{decoder_forward.14} parent=0 // loop_footer_branch
    %9 = sbr.rel target = $region3
  $region8: #{decoder_forward.14} parent=0 // loop_exit
    _

// kernel: decoder_forward.16
$region0: #{decoder_forward.16}
  #allocation0 [shape = 'u32[]', space=smem, size = 0x4, offset = 0x4, fixed_abs, tag = 'smem constant byte address 0x4 - core index']
  #allocation1 [shape = 'u32[144,128]{1,0:T(1,128)}', space=vmem, size = 0x12000, scoped, tag = 'internal scratch']
  %s0 = inlined_call_operand.vmem [shape: f32[32,32], index: 0, kind: input, shape index: {}]
  %s1 = inlined_call_operand.vmem [shape: f32[64,32], index: 1, kind: input, shape index: {}]
  %s2 = inlined_call_operand.vmem [shape: f32[1,64], index: 2, kind: input, shape index: {}]
  %s3 = inlined_call_operand.vmem [shape: f32[32,64], index: 3, kind: output, shape index: {}]
  %s4 = sld [smem:[#allocation0]]
  $region45: #{decoder_forward.16} parent=0
    _
  %s6 = ssub.s32 1, %s4
  %s7 = scalar_select 0, %s6, %s4
  loop: start=0, step=1, limit=4
  $region2: #{decoder_forward.16} parent=0 // loop_pre_header
    _
  $region3: #{decoder_forward.16} parent=0 // loop_header
    %s9 = sphi 0, %s13
    %p10 = scmp.ge.s32.totalorder %s9, 4
    %s19 = sphi 0, %s21
    %s22 = sphi 0, %s19
    %s23 = sphi 0, %s22
    %s39 = sphi 0, %s23
    %s43 = sphi 0, %s43
    %s45 = sphi 0, %s43
    %s46 = sphi 0, %s45
    %s60 = sphi 0, %s46
    %s64 = sphi 0, %s64
    %s66 = sphi 0, %s64
    %s67 = sphi 0, %s66
    %s81 = sphi 0, %s67
    %s87 = sphi 0, %s89
    %s90 = sphi 0, %s87
    %s91 = sphi 0, %s90
    %s107 = sphi 0, %s91
  $region4: #{decoder_forward.16} parent=0 // loop_header_branch
    %12 = sbr.rel (%p10) target = $region8
  $region5: #{decoder_forward.16} parent=0 // loop_body
    %s14 = ssub.s32 %s9, 1
    %s15 = ssub.s32 %s9, 2
    %s16 = sadd.s32 %s9, 1
    %s17 = ssub.s32 %s9, %s16
    %p18 = scmp.eq.s32.totalorder %s17, 0
    %s20 = sadd.s32 %s19, 1
    %s21 = scalar_select %p18, %s19, %s20
    %p24 = pneg %p18
    %p25 = scmp.eq.s32.totalorder %s9, 1
    %p26 = por %p24, %p25
    %p27 = scmp.ne.s32.totalorder %s19, %s22
    %p28 = scmp.eq.s32.totalorder %s9, 0
    %p29 = por %p27, %p28
    %p30 = scmp.ne.s32.totalorder %s19, %s22
    %p31 = scmp.eq.s32.totalorder %s14, 1
    %p32 = por %p30, %p31
    %p33 = scmp.ne.s32.totalorder %s22, %s23
    %p34 = scmp.eq.s32.totalorder %s14, 0
    %p35 = por %p33, %p34
    %p36 = scmp.ne.s32.totalorder %s22, %s23
    %p37 = scmp.eq.s32.totalorder %s15, 1
    %p38 = por %p36, %p37
    %p40 = scmp.ne.s32.totalorder %s23, %s39
    %p41 = scmp.eq.s32.totalorder %s15, 0
    %p42 = por %p40, %p41
    %s44 = sadd.s32 %s43, 1
    %p47 = scmp.eq.s32.totalorder %s9, 1
    %p48 = scmp.ne.s32.totalorder %s43, %s45
    %p49 = scmp.eq.s32.totalorder %s9, 0
    %p50 = por %p48, %p49
    %p51 = scmp.ne.s32.totalorder %s43, %s45
    %p52 = scmp.eq.s32.totalorder %s14, 1
    %p53 = por %p51, %p52
    %p54 = scmp.ne.s32.totalorder %s45, %s46
    %p55 = scmp.eq.s32.totalorder %s14, 0
    %p56 = por %p54, %p55
    %p57 = scmp.ne.s32.totalorder %s45, %s46
    %p58 = scmp.eq.s32.totalorder %s15, 1
    %p59 = por %p57, %p58
    %p61 = scmp.ne.s32.totalorder %s46, %s60
    %p62 = scmp.eq.s32.totalorder %s15, 0
    %p63 = por %p61, %p62
    %s65 = sadd.s32 %s64, 1
    %p68 = scmp.eq.s32.totalorder %s9, 1
    %p69 = scmp.ne.s32.totalorder %s64, %s66
    %p70 = scmp.eq.s32.totalorder %s9, 0
    %p71 = por %p69, %p70
    %p72 = scmp.ne.s32.totalorder %s64, %s66
    %p73 = scmp.eq.s32.totalorder %s14, 1
    %p74 = por %p72, %p73
    %p75 = scmp.ne.s32.totalorder %s66, %s67
    %p76 = scmp.eq.s32.totalorder %s14, 0
    %p77 = por %p75, %p76
    %p78 = scmp.ne.s32.totalorder %s66, %s67
    %p79 = scmp.eq.s32.totalorder %s15, 1
    %p80 = por %p78, %p79
    %p82 = scmp.ne.s32.totalorder %s67, %s81
    %p83 = scmp.eq.s32.totalorder %s15, 0
    %p84 = por %p82, %p83
    %s85 = ssub.s32 %s9, %s16
    %p86 = scmp.eq.s32.totalorder %s85, 0
    %s88 = sadd.s32 %s87, 1
    %s89 = scalar_select %p86, %s87, %s88
    %p92 = pneg %p86
    %p93 = scmp.eq.s32.totalorder %s9, 1
    %p94 = por %p92, %p93
    %p95 = scmp.ne.s32.totalorder %s87, %s90
    %p96 = scmp.eq.s32.totalorder %s9, 0
    %p97 = por %p95, %p96
    %p98 = scmp.ne.s32.totalorder %s87, %s90
    %p99 = scmp.eq.s32.totalorder %s14, 1
    %p100 = por %p98, %p99
    %p101 = scmp.ne.s32.totalorder %s90, %s91
    %p102 = scmp.eq.s32.totalorder %s14, 0
    %p103 = por %p101, %p102
    %p104 = scmp.ne.s32.totalorder %s90, %s91
    %p105 = scmp.eq.s32.totalorder %s15, 1
    %p106 = por %p104, %p105
    %p108 = scmp.ne.s32.totalorder %s91, %s107
    %p109 = scmp.eq.s32.totalorder %s15, 0
    %p110 = por %p108, %p109
    %p111 = scmp.le.s32.totalorder 1, %s9
    %p112 = scmp.lt.s32.totalorder %s9, 3
    %p113 = pnand %p111, %p112
    %p114 = pneg %p113
    // Predicated region
    $region9: #{decoder_forward.16} parent=5 // pred_check
      _
    $region10: #{decoder_forward.16} parent=5 // pred_check_branch
      %116 = sbr.rel (%p113) target = $region12
    $region11: #{decoder_forward.16} parent=5 // pred_region
      %s117 = ssub.s32 %s9, 1
      // Predicated region
      $region13: #{decoder_forward.16} parent=11 // pred_check
        %p118 = pneg %p56
      $region14: #{decoder_forward.16} parent=11 // pred_check_branch
        %120 = sbr.rel (%p118) target = $region16
      $region15: #{decoder_forward.16} parent=11 // pred_region
        _
      $region16: #{decoder_forward.16} parent=11 // pred_fallthru
        _
      // Predicated region
      $region17: #{decoder_forward.16} parent=11 // pred_check
        %p121 = pneg %p77
      $region18: #{decoder_forward.16} parent=11 // pred_check_branch
        %123 = sbr.rel (%p121) target = $region20
      $region19: #{decoder_forward.16} parent=11 // pred_region
        _
      $region20: #{decoder_forward.16} parent=11 // pred_fallthru
        _
    $region12: #{decoder_forward.16} parent=5 // pred_fallthru
      _
    %p124 = scmp.lt.s32.totalorder %s9, 2
    // Predicated region
    $region21: #{decoder_forward.16} parent=5 // pred_check
      %p125 = pneg %p124
    $region22: #{decoder_forward.16} parent=5 // pred_check_branch
      %127 = sbr.rel (%p125) target = $region24
    $region23: #{decoder_forward.16} parent=5 // pred_region
      // Predicated region
      $region25: #{decoder_forward.16} parent=23 // pred_check
        %p128 = pneg %p29
      $region26: #{decoder_forward.16} parent=23 // pred_check_branch
        %130 = sbr.rel (%p128) target = $region28
      $region27: #{decoder_forward.16} parent=23 // pred_region
        %s131 = smul.u32 2, %s9
        %p132 = scmp.lt.s32.totalorder %s131, 3
        %s133 = scalar_select %p132, %s131, 3
        %s134 = smul.addr %s133, 8
        %s135 = scalar_lea.vmem %s0, %s134
        %s136 = smul.u32 2, %s9
      $region28: #{decoder_forward.16} parent=23 // pred_fallthru
        _
    $region24: #{decoder_forward.16} parent=5 // pred_fallthru
      _
    %p137 = scmp.le.s32.totalorder 1, %s9
    %p138 = scmp.lt.s32.totalorder %s9, 3
    %p139 = pnand %p137, %p138
    %p140 = pneg %p139
    // Predicated region
    $region29: #{decoder_forward.16} parent=5 // pred_check
      _
    $region30: #{decoder_forward.16} parent=5 // pred_check_branch
      %142 = sbr.rel (%p139) target = $region32
    $region31: #{decoder_forward.16} parent=5 // pred_region
      %s143 = ssub.s32 %s9, 1
      %s144 = smul.u32 2, %s14
      %p145 = scmp.lt.s32.totalorder %s144, 3
      %s146 = scalar_select %p145, %s144, 3
      %s147 = smul.addr %s146, 8
      %s148 = scalar_lea.vmem %s0, %s147
      %p149 = pneg %p35
      %p150 = pneg %p32
      %p151 = pneg %p56
      %p152 = pneg %p53
      %p153 = pneg %p77
      %p154 = pneg %p74
      %p155 = pneg %p103
      %p156 = pneg %p100
      %s157 = smul.u32 2, %s14
      %p158 = scmp.lt.s32.totalorder %s157, 3
      %s159 = scalar_select %p158, %s157, 3
      %s160 = smul.addr %s159, 8
      %s161 = scalar_lea.vmem %s3, %s160
      %s162 = smul.u32 2, %s14
      %p163 = scmp.lt.s32.totalorder %s162, 3
      %s164 = scalar_select %p163, %s162, 3
      %s165 = smul.addr %s164, 8
      %s166 = scalar_lea.vmem %s0, %s165
      %s167 = smul.u32 2, %s14
      %s168 = smul.u32 2, %s14
      %p169 = scmp.lt.s32.totalorder %s168, 3
      %s170 = scalar_select %p169, %s168, 3
      %s171 = smul.addr %s170, 8
      %s172 = scalar_lea.vmem %s3, %s171
      %s173 = smul.u32 2, %s14
      %v174 = vld [vmem:[%s166] sm:$0xff]
      %v175 = vld [vmem:[%s166 + $0x8] sm:$0xff]
      %v176 = vld [vmem:[%s1] sm:$0xff]
      %v177 = vld [vmem:[%s1 + $0x8] sm:$0xff]
      %v178 = vld [vmem:[%s1 + $0x10] sm:$0xff]
      %v179 = vld [vmem:[%s1 + $0x18] sm:$0xff]
      %v180 = vld [vmem:[%s1 + $0x20] sm:$0xff]
      %v181 = vld [vmem:[%s1 + $0x28] sm:$0xff]
      %v182 = vld [vmem:[%s1 + $0x30] sm:$0xff]
      %v183 = vld [vmem:[%s1 + $0x38] sm:$0xff]
      %v184 = vld [vmem:[%s2] sm:$0x1]
      %v186 = vlaneseq
      %v187 = vshrl.u32 %v186, 7
      %v188 = vsub.s32 0, %v187
      %v189 = vrot.slane %v184, %v188
      %vm191 = vcmask 261120
      %v193 = vsel %vm191, %v174, 0
      %v196 = vsel %vm191, %v175, 0
      %v199 = vsel %vm191, %v176, 0
      %v202 = vsel %vm191, %v177, 0
      %v205 = vsel %vm191, %v178, 0
      %v208 = vsel %vm191, %v179, 0
      %v211 = vsel %vm191, %v180, 0
      %v214 = vsel %vm191, %v181, 0
      %v217 = vsel %vm191, %v182, 0
      %v220 = vsel %vm191, %v183, 0
      %222 = vmatprep.subr.mxu0 0.0
      %223 = vmatpush1.xpose.msra.mxu0 %v199
      %224 = vmatprep.subr.mxu0 0.0
      %225 = vmatpush1.xpose.msra.mxu0 %v202
      %226 = vmatprep.subr.mxu0 0.0
      %227 = vmatpush1.xpose.msra.mxu0 %v205
      %228 = vmatprep.subr.mxu0 0.0
      %229 = vmatpush1.xpose.msra.mxu0 %v208
      %230 = vmatprep.subr.mxu0 0.0
      %231 = vmatpush1.xpose.msra.mxu0 %v211
      %232 = vmatprep.subr.mxu0 0.0
      %233 = vmatpush1.xpose.msra.mxu0 %v214
      %234 = vmatprep.subr.mxu0 0.0
      %235 = vmatpush1.xpose.msra.mxu0 %v217
      %236 = vmatprep.subr.mxu0 0.0
      %237 = vmatpush1.xpose.msra.mxu0 %v220
      %238 = vmatprep.subr.mxu0 0.0
      %239 = vmatpush1.xpose.msra.mxu0 0.0
      %240 = vmatprep.subr.mxu0 0.0
      %241 = vmatpush1.xpose.msra.mxu0 0.0
      %242 = vmatprep.subr.mxu0 0.0
      %243 = vmatpush1.xpose.msra.mxu0 0.0
      %244 = vmatprep.subr.mxu0 0.0
      %245 = vmatpush1.xpose.msra.mxu0 0.0
      %246 = vmatprep.subr.mxu0 0.0
      %247 = vmatpush1.xpose.msra.mxu0 0.0
      %248 = vmatprep.subr.mxu0 0.0
      %249 = vmatpush1.xpose.msra.mxu0 0.0
      %250 = vmatprep.subr.mxu0 0.0
      %251 = vmatpush1.xpose.msra.mxu0 0.0
      %252 = vmatprep.subr.mxu0 0.0
      %253 = vmatpush1.xpose.msra.mxu0 0.0
      %254 = vmatprep.subr.mxu0 0.0
      %255 = vmatpush1.xpose.msra.mxu0 0.0
      %256 = vmatprep.subr.mxu0 0.0
      %257 = vmatpush1.xpose.msra.mxu0 0.0
      %258 = vmatprep.subr.mxu0 0.0
      %259 = vmatpush1.xpose.msra.mxu0 0.0
      %260 = vmatprep.subr.mxu0 0.0
      %261 = vmatpush1.xpose.msra.mxu0 0.0
      %262 = vmatprep.subr.mxu0 0.0
      %263 = vmatpush1.xpose.msra.mxu0 0.0
      %264 = vmatprep.subr.mxu0 0.0
      %265 = vmatpush1.xpose.msra.mxu0 0.0
      %266 = vmatprep.subr.mxu0 0.0
      %267 = vmatpush1.xpose.msra.mxu0 0.0
      %268 = vmatprep.subr.mxu0 0.0
      %269 = vmatpush1.xpose.msra.mxu0 0.0
      %270 = vmatprep.subr.mxu0 0.0
      %271 = vmatpush1.xpose.msra.mxu0 0.0
      %272 = vmatprep.subr.mxu0 0.0
      %273 = vmatpush1.xpose.msra.mxu0 0.0
      %274 = vmatprep.subr.mxu0 0.0
      %275 = vmatpush1.xpose.msra.mxu0 0.0
      %276 = vmatprep.subr.mxu0 0.0
      %277 = vmatpush1.xpose.msra.mxu0 0.0
      %278 = vmatprep.subr.mxu0 0.0
      %279 = vmatpush1.xpose.msra.mxu0 0.0
      %280 = vmatprep.subr.mxu0 0.0
      %281 = vmatpush1.xpose.msra.mxu0 0.0
      %282 = vmatprep.subr.mxu0 0.0
      %283 = vmatpush1.xpose.msra.mxu0 0.0
      %284 = vmatprep.subr.mxu0 0.0
      %285 = vmatpush1.xpose.msra.mxu0 0.0
      %286 = vmatprep.mubr.f32.mxu0 0.0
      %287 = vmatmul.mubr.f32.gmra.mrb[0].mxu0 %v193
      %v288 = vpop.f32.mrb[0].mxu0
      %v289 = vadd.f32 %v189, %v288
      %v290 = vpop.f32.mrb[0].mxu0
      %291 = vmatprep.mubr.f32.mxu0 0.0
      %292 = vmatmul.mubr.f32.gmra.mrb[0].mxu0 %v196
      %v293 = vpop.f32.mrb[0].mxu0
      %v294 = vadd.f32 %v189, %v293
      %v295 = vpop.f32.mrb[0].mxu0
      %296 = vdwg.mxu0
      %vm297 = vcmask 523264
      %298 = vst.msk [vmem:[%s172] sm:$0xff] %vm297, %v289
      %299 = vst.msk [vmem:[%s172 + $0x8] sm:$0xff] %vm297, %v294
      %s300 = smul.u32 2, %s14
      %p301 = scmp.lt.s32.totalorder %s300, 3
      %s302 = scalar_select %p301, %s300, 3
      %s303 = smul.addr %s302, 8
      %s304 = scalar_lea.vmem %s3, %s303
      // Predicated region
      $region33: #{decoder_forward.16} parent=31 // pred_check
        %p305 = pneg %p100
      $region34: #{decoder_forward.16} parent=31 // pred_check_branch
        %307 = sbr.rel (%p305) target = $region36
      $region35: #{decoder_forward.16} parent=31 // pred_region
        %s308 = smul.u32 2, %s14
      $region36: #{decoder_forward.16} parent=31 // pred_fallthru
        _
    $region32: #{decoder_forward.16} parent=5 // pred_fallthru
      _
    %p309 = scmp.le.s32.totalorder 2, %s9
    // Predicated region
    $region37: #{decoder_forward.16} parent=5 // pred_check
      %p310 = pneg %p309
    $region38: #{decoder_forward.16} parent=5 // pred_check_branch
      %312 = sbr.rel (%p310) target = $region40
    $region39: #{decoder_forward.16} parent=5 // pred_region
      %s313 = ssub.s32 %s9, 2
      // Predicated region
      $region41: #{decoder_forward.16} parent=39 // pred_check
        %p314 = pneg %p106
      $region42: #{decoder_forward.16} parent=39 // pred_check_branch
        %316 = sbr.rel (%p314) target = $region44
      $region43: #{decoder_forward.16} parent=39 // pred_region
        %s317 = smul.u32 2, %s15
        %p318 = scmp.lt.s32.totalorder %s317, 3
        %s319 = scalar_select %p318, %s317, 3
        %s320 = smul.addr %s319, 8
        %s321 = scalar_lea.vmem %s3, %s320
      $region44: #{decoder_forward.16} parent=39 // pred_fallthru
        _
    $region40: #{decoder_forward.16} parent=5 // pred_fallthru
      _
  $region6: #{decoder_forward.16} parent=0 // loop_footer
    %s13 = sadd.s32 1, %s9
  $region7: #{decoder_forward.16} parent=0 // loop_footer_branch
    %8 = sbr.rel target = $region3
  $region8: #{decoder_forward.16} parent=0 // loop_exit
    _

// kernel: decoder_forward.21
$region0: #{decoder_forward.21}
  #allocation0 [shape = 'u32[]', space=smem, size = 0x4, offset = 0x4, fixed_abs, tag = 'smem constant byte address 0x4 - core index']
  #allocation1 [shape = 'u32[144,128]{1,0:T(1,128)}', space=vmem, size = 0x12000, scoped, tag = 'internal scratch']
  %s0 = inlined_call_operand.vmem [shape: f32[16,32], index: 0, kind: input, shape index: {}]
  %s1 = inlined_call_operand.vmem [shape: f32[16,32], index: 1, kind: input, shape index: {}]
  %s2 = inlined_call_operand.vmem [shape: f32[1,32], index: 2, kind: input, shape index: {}]
  %s3 = inlined_call_operand.vmem [shape: f32[1,32], index: 3, kind: input, shape index: {}]
  %s4 = inlined_call_operand.hbm [shape: f32[16,32], index: 4, kind: output, shape index: {}]
  %s5 = sld [smem:[#allocation0]]
  $region49: #{decoder_forward.21} parent=0
    _
  %s7 = ssub.s32 1, %s5
  %s8 = scalar_select 0, %s7, %s5
  $region1: #{decoder_forward.21} parent=0
    #allocation2 [shape = 'u8[8192]{0}', space=vmem, size = 0x2000, scoped, tag = 'output window, operand 0']
    #allocation3 [shape = 's32[2]{0}', space=sflag, size = 0x8, scoped, tag = 'scoped memory for decoder_forward.21']
    %9 = vsyncpa [#allocation3], 0
    %s10 = scalar_lea.sflag [#allocation3], 1
    %11 = vsyncpa %s10, 0
    loop: start=0, step=1, limit=4
    $region2: #{decoder_forward.21} parent=1 // loop_pre_header
      _
    $region3: #{decoder_forward.21} parent=1 // loop_header
      %s13 = sphi 0, %s17
      %p14 = scmp.ge.s32.totalorder %s13, 4
      %s23 = sphi 0, %s25
      %s26 = sphi 0, %s23
      %s27 = sphi 0, %s26
      %s43 = sphi 0, %s27
      %s49 = sphi 0, %s51
      %s52 = sphi 0, %s49
      %s53 = sphi 0, %s52
      %s69 = sphi 0, %s53
      %s73 = sphi 0, %s73
      %s75 = sphi 0, %s73
      %s76 = sphi 0, %s75
      %s90 = sphi 0, %s76
      %s94 = sphi 0, %s94
      %s96 = sphi 0, %s94
      %s97 = sphi 0, %s96
      %s111 = sphi 0, %s97
      %s117 = sphi 0, %s119
      %s120 = sphi 0, %s117
      %s121 = sphi 0, %s120
      %s137 = sphi 0, %s121
    $region4: #{decoder_forward.21} parent=1 // loop_header_branch
      %16 = sbr.rel (%p14) target = $region8
    $region5: #{decoder_forward.21} parent=1 // loop_body
      %s18 = ssub.s32 %s13, 1
      %s19 = ssub.s32 %s13, 2
      %s20 = sadd.s32 %s13, 1
      %s21 = ssub.s32 %s13, %s20
      %p22 = scmp.eq.s32.totalorder %s21, 0
      %s24 = sadd.s32 %s23, 1
      %s25 = scalar_select %p22, %s23, %s24
      %p28 = pneg %p22
      %p29 = scmp.eq.s32.totalorder %s13, 1
      %p30 = por %p28, %p29
      %p31 = scmp.ne.s32.totalorder %s23, %s26
      %p32 = scmp.eq.s32.totalorder %s13, 0
      %p33 = por %p31, %p32
      %p34 = scmp.ne.s32.totalorder %s23, %s26
      %p35 = scmp.eq.s32.totalorder %s18, 1
      %p36 = por %p34, %p35
      %p37 = scmp.ne.s32.totalorder %s26, %s27
      %p38 = scmp.eq.s32.totalorder %s18, 0
      %p39 = por %p37, %p38
      %p40 = scmp.ne.s32.totalorder %s26, %s27
      %p41 = scmp.eq.s32.totalorder %s19, 1
      %p42 = por %p40, %p41
      %p44 = scmp.ne.s32.totalorder %s27, %s43
      %p45 = scmp.eq.s32.totalorder %s19, 0
      %p46 = por %p44, %p45
      %s47 = ssub.s32 %s13, %s20
      %p48 = scmp.eq.s32.totalorder %s47, 0
      %s50 = sadd.s32 %s49, 1
      %s51 = scalar_select %p48, %s49, %s50
      %p54 = pneg %p48
      %p55 = scmp.eq.s32.totalorder %s13, 1
      %p56 = por %p54, %p55
      %p57 = scmp.ne.s32.totalorder %s49, %s52
      %p58 = scmp.eq.s32.totalorder %s13, 0
      %p59 = por %p57, %p58
      %p60 = scmp.ne.s32.totalorder %s49, %s52
      %p61 = scmp.eq.s32.totalorder %s18, 1
      %p62 = por %p60, %p61
      %p63 = scmp.ne.s32.totalorder %s52, %s53
      %p64 = scmp.eq.s32.totalorder %s18, 0
      %p65 = por %p63, %p64
      %p66 = scmp.ne.s32.totalorder %s52, %s53
      %p67 = scmp.eq.s32.totalorder %s19, 1
      %p68 = por %p66, %p67
      %p70 = scmp.ne.s32.totalorder %s53, %s69
      %p71 = scmp.eq.s32.totalorder %s19, 0
      %p72 = por %p70, %p71
      %s74 = sadd.s32 %s73, 1
      %p77 = scmp.eq.s32.totalorder %s13, 1
      %p78 = scmp.ne.s32.totalorder %s73, %s75
      %p79 = scmp.eq.s32.totalorder %s13, 0
      %p80 = por %p78, %p79
      %p81 = scmp.ne.s32.totalorder %s73, %s75
      %p82 = scmp.eq.s32.totalorder %s18, 1
      %p83 = por %p81, %p82
      %p84 = scmp.ne.s32.totalorder %s75, %s76
      %p85 = scmp.eq.s32.totalorder %s18, 0
      %p86 = por %p84, %p85
      %p87 = scmp.ne.s32.totalorder %s75, %s76
      %p88 = scmp.eq.s32.totalorder %s19, 1
      %p89 = por %p87, %p88
      %p91 = scmp.ne.s32.totalorder %s76, %s90
      %p92 = scmp.eq.s32.totalorder %s19, 0
      %p93 = por %p91, %p92
      %s95 = sadd.s32 %s94, 1
      %p98 = scmp.eq.s32.totalorder %s13, 1
      %p99 = scmp.ne.s32.totalorder %s94, %s96
      %p100 = scmp.eq.s32.totalorder %s13, 0
      %p101 = por %p99, %p100
      %p102 = scmp.ne.s32.totalorder %s94, %s96
      %p103 = scmp.eq.s32.totalorder %s18, 1
      %p104 = por %p102, %p103
      %p105 = scmp.ne.s32.totalorder %s96, %s97
      %p106 = scmp.eq.s32.totalorder %s18, 0
      %p107 = por %p105, %p106
      %p108 = scmp.ne.s32.totalorder %s96, %s97
      %p109 = scmp.eq.s32.totalorder %s19, 1
      %p110 = por %p108, %p109
      %p112 = scmp.ne.s32.totalorder %s97, %s111
      %p113 = scmp.eq.s32.totalorder %s19, 0
      %p114 = por %p112, %p113
      %s115 = ssub.s32 %s13, %s20
      %p116 = scmp.eq.s32.totalorder %s115, 0
      %s118 = sadd.s32 %s117, 1
      %s119 = scalar_select %p116, %s117, %s118
      %p122 = pneg %p116
      %p123 = scmp.eq.s32.totalorder %s13, 1
      %p124 = por %p122, %p123
      %p125 = scmp.ne.s32.totalorder %s117, %s120
      %p126 = scmp.eq.s32.totalorder %s13, 0
      %p127 = por %p125, %p126
      %p128 = scmp.ne.s32.totalorder %s117, %s120
      %p129 = scmp.eq.s32.totalorder %s18, 1
      %p130 = por %p128, %p129
      %p131 = scmp.ne.s32.totalorder %s120, %s121
      %p132 = scmp.eq.s32.totalorder %s18, 0
      %p133 = por %p131, %p132
      %p134 = scmp.ne.s32.totalorder %s120, %s121
      %p135 = scmp.eq.s32.totalorder %s19, 1
      %p136 = por %p134, %p135
      %p138 = scmp.ne.s32.totalorder %s121, %s137
      %p139 = scmp.eq.s32.totalorder %s19, 0
      %p140 = por %p138, %p139
      %p141 = scmp.le.s32.totalorder 1, %s13
      %p142 = scmp.lt.s32.totalorder %s13, 3
      %p143 = pnand %p141, %p142
      %p144 = pneg %p143
      // Predicated region
      $region9: #{decoder_forward.21} parent=5 // pred_check
        _
      $region10: #{decoder_forward.21} parent=5 // pred_check_branch
        %146 = sbr.rel (%p143) target = $region12
      $region11: #{decoder_forward.21} parent=5 // pred_region
        %s147 = ssub.s32 %s13, 1
        // Predicated region
        $region13: #{decoder_forward.21} parent=11 // pred_check
          %p148 = pneg %p86
        $region14: #{decoder_forward.21} parent=11 // pred_check_branch
          %150 = sbr.rel (%p148) target = $region16
        $region15: #{decoder_forward.21} parent=11 // pred_region
          _
        $region16: #{decoder_forward.21} parent=11 // pred_fallthru
          _
        // Predicated region
        $region17: #{decoder_forward.21} parent=11 // pred_check
          %p151 = pneg %p107
        $region18: #{decoder_forward.21} parent=11 // pred_check_branch
          %153 = sbr.rel (%p151) target = $region20
        $region19: #{decoder_forward.21} parent=11 // pred_region
          _
        $region20: #{decoder_forward.21} parent=11 // pred_fallthru
          _
      $region12: #{decoder_forward.21} parent=5 // pred_fallthru
        _
      %p154 = scmp.lt.s32.totalorder %s13, 2
      // Predicated region
      $region21: #{decoder_forward.21} parent=5 // pred_check
        %p155 = pneg %p154
      $region22: #{decoder_forward.21} parent=5 // pred_check_branch
        %157 = sbr.rel (%p155) target = $region24
      $region23: #{decoder_forward.21} parent=5 // pred_region
        // Predicated region
        $region25: #{decoder_forward.21} parent=23 // pred_check
          %p158 = pneg %p33
        $region26: #{decoder_forward.21} parent=23 // pred_check_branch
          %160 = sbr.rel (%p158) target = $region28
        $region27: #{decoder_forward.21} parent=23 // pred_region
          %p161 = scmp.lt.s32.totalorder %s13, 1
          %s162 = scalar_select %p161, %s13, 1
          %s163 = smul.addr %s162, 8
          %s164 = scalar_lea.vmem %s0, %s163
        $region28: #{decoder_forward.21} parent=23 // pred_fallthru
          _
        // Predicated region
        $region29: #{decoder_forward.21} parent=23 // pred_check
          %p165 = pneg %p59
        $region30: #{decoder_forward.21} parent=23 // pred_check_branch
          %167 = sbr.rel (%p165) target = $region32
        $region31: #{decoder_forward.21} parent=23 // pred_region
          %p168 = scmp.lt.s32.totalorder %s13, 1
          %s169 = scalar_select %p168, %s13, 1
          %s170 = smul.addr %s169, 8
          %s171 = scalar_lea.vmem %s1, %s170
        $region32: #{decoder_forward.21} parent=23 // pred_fallthru
          _
      $region24: #{decoder_forward.21} parent=5 // pred_fallthru
        _
      %p172 = scmp.le.s32.totalorder 1, %s13
      %p173 = scmp.lt.s32.totalorder %s13, 3
      %p174 = pnand %p172, %p173
      %p175 = pneg %p174
      // Predicated region
      $region33: #{decoder_forward.21} parent=5 // pred_check
        _
      $region34: #{decoder_forward.21} parent=5 // pred_check_branch
        %177 = sbr.rel (%p174) target = $region36
      $region35: #{decoder_forward.21} parent=5 // pred_region
        %s178 = ssub.s32 %s13, 1
        %p179 = scmp.lt.s32.totalorder %s18, 1
        %s180 = scalar_select %p179, %s18, 1
        %s181 = smul.addr %s180, 8
        %s182 = scalar_lea.vmem %s0, %s181
        %p183 = pneg %p39
        %p184 = pneg %p36
        %p185 = scmp.lt.s32.totalorder %s18, 1
        %s186 = scalar_select %p185, %s18, 1
        %s187 = smul.addr %s186, 8
        %s188 = scalar_lea.vmem %s1, %s187
        %p189 = pneg %p65
        %p190 = pneg %p62
        %p191 = pneg %p86
        %p192 = pneg %p83
        %p193 = pneg %p107
        %p194 = pneg %p104
        %p195 = pneg %p133
        %p196 = pneg %p130
        %s197 = sand.u32 %s120, 1
        %s198 = scalar_lea.sflag [#allocation3], %s197
        %s199 = sand.u32 %s120, 1
        %s200 = smul.addr %s199, 8
        %s201 = scalar_lea.vmem [#allocation2], %s200
        %p202 = scmp.lt.s32.totalorder %s18, 1
        %s203 = scalar_select %p202, %s18, 1
        %s204 = smul.addr %s203, 8
        %s205 = scalar_lea.vmem %s0, %s204
        %p206 = scmp.lt.s32.totalorder %s18, 1
        %s207 = scalar_select %p206, %s18, 1
        %s208 = smul.addr %s207, 8
        %s209 = scalar_lea.vmem %s1, %s208
        %v210 = vld [vmem:[%s205] sm:$0xff]
        %v211 = vld [vmem:[%s209] sm:$0xff]
        %v212 = vadd.f32 %v210, %v211
        %vm213 = vcmask 261120
        %v214 = vsel %vm213, %v212, 0.0
        %215 = vadd.xlane.f32.xlu0 %v214
        %v216 = vpop.xlane.xlu0 %215
        %v217 = vrcp.pop 32.0
        %v218 = vmul.f32 %v216, %v217
        %v219 = vsub.f32 %v212, %v218
        %v220 = vmul.f32 %v219, %v219
        %v221 = vsel %vm213, %v220, 0.0
        %222 = vadd.xlane.f32.xlu0 %v221
        %v223 = vpop.xlane.xlu0 %222
        %v224 = vmul.f32 %v223, %v217
        %v225 = vadd.f32 %v224, 1e-12
        %v226 = vrsqrt.pop %v225
        %v227 = vmul.f32 %v219, %v226
        %v228 = vld [vmem:[%s2] sm:$0x1]
        %v230 = vlaneseq
        %v231 = vshrl.u32 %v230, 7
        %v232 = vsub.s32 0, %v231
        %v233 = vrot.slane %v228, %v232
        %v235 = vmul.f32 %v227, %v233
        %v236 = vld [vmem:[%s3] sm:$0x1]
        %v238 = vlaneseq
        %v239 = vshrl.u32 %v238, 7
        %v240 = vsub.s32 0, %v239
        %v241 = vrot.slane %v236, %v240
        %v243 = vadd.f32 %v235, %v241
        %244 = vst.msk [vmem:[%s201] sm:$0xff] %vm213, %v243
        %s245 = sand.u32 %s120, 1
        %s246 = scalar_lea.sflag [#allocation3], %s245
        %s247 = sand.u32 %s120, 1
        %s248 = smul.addr %s247, 8
        %s249 = scalar_lea.vmem [#allocation2], %s248
        // Predicated region
        $region37: #{decoder_forward.21} parent=35 // pred_check
          %p250 = pneg %p130
        $region38: #{decoder_forward.21} parent=35 // pred_check_branch
          %252 = sbr.rel (%p250) target = $region40
        $region39: #{decoder_forward.21} parent=35 // pred_region
          %s254 = ssub.s32 128, 128
          %255 = vsyncadd %s246, %s254
          %s256 = smul.addr %s18, 128
          %s257 = scalar_lea.hbm %s4, %s256
          %s259 = sshll.u32 %s249, 4
          %s260 = int_to_ptr.vmem [resolvable:$true] %s259
          %262 = dma.vmem_to_hbm [thread:$0]  %s260, 128, %s257, %s246
        $region40: #{decoder_forward.21} parent=35 // pred_fallthru
          _
      $region36: #{decoder_forward.21} parent=5 // pred_fallthru
        _
      %p263 = scmp.le.s32.totalorder 2, %s13
      // Predicated region
      $region41: #{decoder_forward.21} parent=5 // pred_check
        %p264 = pneg %p263
      $region42: #{decoder_forward.21} parent=5 // pred_check_branch
        %266 = sbr.rel (%p264) target = $region44
      $region43: #{decoder_forward.21} parent=5 // pred_region
        %s267 = ssub.s32 %s13, 2
        // Predicated region
        $region45: #{decoder_forward.21} parent=43 // pred_check
          %p268 = pneg %p136
        $region46: #{decoder_forward.21} parent=43 // pred_check_branch
          %270 = sbr.rel (%p268) target = $region48
        $region47: #{decoder_forward.21} parent=43 // pred_region
          %s271 = sand.u32 %s121, 1
          %s272 = scalar_lea.sflag [#allocation3], %s271
          %s273 = sand.u32 %s121, 1
          %s274 = smul.addr %s273, 8
          %s275 = scalar_lea.vmem [#allocation2], %s274
          %276 = dma.done %s272, 128
        $region48: #{decoder_forward.21} parent=43 // pred_fallthru
          _
      $region44: #{decoder_forward.21} parent=5 // pred_fallthru
        _
    $region6: #{decoder_forward.21} parent=1 // loop_footer
      %s17 = sadd.s32 1, %s13
    $region7: #{decoder_forward.21} parent=1 // loop_footer_branch
      %12 = sbr.rel target = $region3
    $region8: #{decoder_forward.21} parent=1 // loop_exit
      _
    %277 = vsyncpa [#allocation3], 1
    %s278 = scalar_lea.sflag [#allocation3], 1
    %279 = vsyncpa %s278, 1

// kernel: decoder_forward.20
$region0: #{decoder_forward.20}
  #allocation0 [shape = 'u32[]', space=smem, size = 0x4, offset = 0x4, fixed_abs, tag = 'smem constant byte address 0x4 - core index']
  #allocation1 [shape = 'u32[144,128]{1,0:T(1,128)}', space=vmem, size = 0x12000, scoped, tag = 'internal scratch']
  %s0 = inlined_call_operand.vmem [shape: f32[16,32], index: 0, kind: input, shape index: {}]
  %s1 = inlined_call_operand.vmem [shape: f32[64,32], index: 1, kind: input, shape index: {}]
  %s2 = inlined_call_operand.vmem [shape: f32[1,64], index: 2, kind: input, shape index: {}]
  %s3 = inlined_call_operand.vmem [shape: f32[32,64], index: 3, kind: input, shape index: {}]
  %s4 = inlined_call_operand.vmem [shape: f32[1,32], index: 4, kind: input, shape index: {}]
  %s5 = inlined_call_operand.vmem [shape: f32[16,32], index: 5, kind: output, shape index: {}]
  %s6 = sld [smem:[#allocation0]]
  $region53: #{decoder_forward.20} parent=0
    _
  %s8 = ssub.s32 1, %s6
  %s9 = scalar_select 0, %s8, %s6
  loop: start=0, step=1, limit=4
  $region2: #{decoder_forward.20} parent=0 // loop_pre_header
    _
  $region3: #{decoder_forward.20} parent=0 // loop_header
    %s11 = sphi 0, %s15
    %p12 = scmp.ge.s32.totalorder %s11, 4
    %s21 = sphi 0, %s23
    %s24 = sphi 0, %s21
    %s25 = sphi 0, %s24
    %s41 = sphi 0, %s25
    %s45 = sphi 0, %s45
    %s47 = sphi 0, %s45
    %s48 = sphi 0, %s47
    %s62 = sphi 0, %s48
    %s66 = sphi 0, %s66
    %s68 = sphi 0, %s66
    %s69 = sphi 0, %s68
    %s83 = sphi 0, %s69
    %s87 = sphi 0, %s87
    %s89 = sphi 0, %s87
    %s90 = sphi 0, %s89
    %s104 = sphi 0, %s90
    %s108 = sphi 0, %s108
    %s110 = sphi 0, %s108
    %s111 = sphi 0, %s110
    %s125 = sphi 0, %s111
    %s131 = sphi 0, %s133
    %s134 = sphi 0, %s131
    %s135 = sphi 0, %s134
    %s151 = sphi 0, %s135
  $region4: #{decoder_forward.20} parent=0 // loop_header_branch
    %14 = sbr.rel (%p12) target = $region8
  $region5: #{decoder_forward.20} parent=0 // loop_body
    %s16 = ssub.s32 %s11, 1
    %s17 = ssub.s32 %s11, 2
    %s18 = sadd.s32 %s11, 1
    %s19 = ssub.s32 %s11, %s18
    %p20 = scmp.eq.s32.totalorder %s19, 0
    %s22 = sadd.s32 %s21, 1
    %s23 = scalar_select %p20, %s21, %s22
    %p26 = pneg %p20
    %p27 = scmp.eq.s32.totalorder %s11, 1
    %p28 = por %p26, %p27
    %p29 = scmp.ne.s32.totalorder %s21, %s24
    %p30 = scmp.eq.s32.totalorder %s11, 0
    %p31 = por %p29, %p30
    %p32 = scmp.ne.s32.totalorder %s21, %s24
    %p33 = scmp.eq.s32.totalorder %s16, 1
    %p34 = por %p32, %p33
    %p35 = scmp.ne.s32.totalorder %s24, %s25
    %p36 = scmp.eq.s32.totalorder %s16, 0
    %p37 = por %p35, %p36
    %p38 = scmp.ne.s32.totalorder %s24, %s25
    %p39 = scmp.eq.s32.totalorder %s17, 1
    %p40 = por %p38, %p39
    %p42 = scmp.ne.s32.totalorder %s25, %s41
    %p43 = scmp.eq.s32.totalorder %s17, 0
    %p44 = por %p42, %p43
    %s46 = sadd.s32 %s45, 1
    %p49 = scmp.eq.s32.totalorder %s11, 1
    %p50 = scmp.ne.s32.totalorder %s45, %s47
    %p51 = scmp.eq.s32.totalorder %s11, 0
    %p52 = por %p50, %p51
    %p53 = scmp.ne.s32.totalorder %s45, %s47
    %p54 = scmp.eq.s32.totalorder %s16, 1
    %p55 = por %p53, %p54
    %p56 = scmp.ne.s32.totalorder %s47, %s48
    %p57 = scmp.eq.s32.totalorder %s16, 0
    %p58 = por %p56, %p57
    %p59 = scmp.ne.s32.totalorder %s47, %s48
    %p60 = scmp.eq.s32.totalorder %s17, 1
    %p61 = por %p59, %p60
    %p63 = scmp.ne.s32.totalorder %s48, %s62
    %p64 = scmp.eq.s32.totalorder %s17, 0
    %p65 = por %p63, %p64
    %s67 = sadd.s32 %s66, 1
    %p70 = scmp.eq.s32.totalorder %s11, 1
    %p71 = scmp.ne.s32.totalorder %s66, %s68
    %p72 = scmp.eq.s32.totalorder %s11, 0
    %p73 = por %p71, %p72
    %p74 = scmp.ne.s32.totalorder %s66, %s68
    %p75 = scmp.eq.s32.totalorder %s16, 1
    %p76 = por %p74, %p75
    %p77 = scmp.ne.s32.totalorder %s68, %s69
    %p78 = scmp.eq.s32.totalorder %s16, 0
    %p79 = por %p77, %p78
    %p80 = scmp.ne.s32.totalorder %s68, %s69
    %p81 = scmp.eq.s32.totalorder %s17, 1
    %p82 = por %p80, %p81
    %p84 = scmp.ne.s32.totalorder %s69, %s83
    %p85 = scmp.eq.s32.totalorder %s17, 0
    %p86 = por %p84, %p85
    %s88 = sadd.s32 %s87, 1
    %p91 = scmp.eq.s32.totalorder %s11, 1
    %p92 = scmp.ne.s32.totalorder %s87, %s89
    %p93 = scmp.eq.s32.totalorder %s11, 0
    %p94 = por %p92, %p93
    %p95 = scmp.ne.s32.totalorder %s87, %s89
    %p96 = scmp.eq.s32.totalorder %s16, 1
    %p97 = por %p95, %p96
    %p98 = scmp.ne.s32.totalorder %s89, %s90
    %p99 = scmp.eq.s32.totalorder %s16, 0
    %p100 = por %p98, %p99
    %p101 = scmp.ne.s32.totalorder %s89, %s90
    %p102 = scmp.eq.s32.totalorder %s17, 1
    %p103 = por %p101, %p102
    %p105 = scmp.ne.s32.totalorder %s90, %s104
    %p106 = scmp.eq.s32.totalorder %s17, 0
    %p107 = por %p105, %p106
    %s109 = sadd.s32 %s108, 1
    %p112 = scmp.eq.s32.totalorder %s11, 1
    %p113 = scmp.ne.s32.totalorder %s108, %s110
    %p114 = scmp.eq.s32.totalorder %s11, 0
    %p115 = por %p113, %p114
    %p116 = scmp.ne.s32.totalorder %s108, %s110
    %p117 = scmp.eq.s32.totalorder %s16, 1
    %p118 = por %p116, %p117
    %p119 = scmp.ne.s32.totalorder %s110, %s111
    %p120 = scmp.eq.s32.totalorder %s16, 0
    %p121 = por %p119, %p120
    %p122 = scmp.ne.s32.totalorder %s110, %s111
    %p123 = scmp.eq.s32.totalorder %s17, 1
    %p124 = por %p122, %p123
    %p126 = scmp.ne.s32.totalorder %s111, %s125
    %p127 = scmp.eq.s32.totalorder %s17, 0
    %p128 = por %p126, %p127
    %s129 = ssub.s32 %s11, %s18
    %p130 = scmp.eq.s32.totalorder %s129, 0
    %s132 = sadd.s32 %s131, 1
    %s133 = scalar_select %p130, %s131, %s132
    %p136 = pneg %p130
    %p137 = scmp.eq.s32.totalorder %s11, 1
    %p138 = por %p136, %p137
    %p139 = scmp.ne.s32.totalorder %s131, %s134
    %p140 = scmp.eq.s32.totalorder %s11, 0
    %p141 = por %p139, %p140
    %p142 = scmp.ne.s32.totalorder %s131, %s134
    %p143 = scmp.eq.s32.totalorder %s16, 1
    %p144 = por %p142, %p143
    %p145 = scmp.ne.s32.totalorder %s134, %s135
    %p146 = scmp.eq.s32.totalorder %s16, 0
    %p147 = por %p145, %p146
    %p148 = scmp.ne.s32.totalorder %s134, %s135
    %p149 = scmp.eq.s32.totalorder %s17, 1
    %p150 = por %p148, %p149
    %p152 = scmp.ne.s32.totalorder %s135, %s151
    %p153 = scmp.eq.s32.totalorder %s17, 0
    %p154 = por %p152, %p153
    %p155 = scmp.le.s32.totalorder 1, %s11
    %p156 = scmp.lt.s32.totalorder %s11, 3
    %p157 = pnand %p155, %p156
    %p158 = pneg %p157
    // Predicated region
    $region9: #{decoder_forward.20} parent=5 // pred_check
      _
    $region10: #{decoder_forward.20} parent=5 // pred_check_branch
      %160 = sbr.rel (%p157) target = $region12
    $region11: #{decoder_forward.20} parent=5 // pred_region
      %s161 = ssub.s32 %s11, 1
      // Predicated region
      $region13: #{decoder_forward.20} parent=11 // pred_check
        %p162 = pneg %p58
      $region14: #{decoder_forward.20} parent=11 // pred_check_branch
        %164 = sbr.rel (%p162) target = $region16
      $region15: #{decoder_forward.20} parent=11 // pred_region
        _
      $region16: #{decoder_forward.20} parent=11 // pred_fallthru
        _
      // Predicated region
      $region17: #{decoder_forward.20} parent=11 // pred_check
        %p165 = pneg %p79
      $region18: #{decoder_forward.20} parent=11 // pred_check_branch
        %167 = sbr.rel (%p165) target = $region20
      $region19: #{decoder_forward.20} parent=11 // pred_region
        _
      $region20: #{decoder_forward.20} parent=11 // pred_fallthru
        _
      // Predicated region
      $region21: #{decoder_forward.20} parent=11 // pred_check
        %p168 = pneg %p100
      $region22: #{decoder_forward.20} parent=11 // pred_check_branch
        %170 = sbr.rel (%p168) target = $region24
      $region23: #{decoder_forward.20} parent=11 // pred_region
        _
      $region24: #{decoder_forward.20} parent=11 // pred_fallthru
        _
      // Predicated region
      $region25: #{decoder_forward.20} parent=11 // pred_check
        %p171 = pneg %p121
      $region26: #{decoder_forward.20} parent=11 // pred_check_branch
        %173 = sbr.rel (%p171) target = $region28
      $region27: #{decoder_forward.20} parent=11 // pred_region
        _
      $region28: #{decoder_forward.20} parent=11 // pred_fallthru
        _
    $region12: #{decoder_forward.20} parent=5 // pred_fallthru
      _
    %p174 = scmp.lt.s32.totalorder %s11, 2
    // Predicated region
    $region29: #{decoder_forward.20} parent=5 // pred_check
      %p175 = pneg %p174
    $region30: #{decoder_forward.20} parent=5 // pred_check_branch
      %177 = sbr.rel (%p175) target = $region32
    $region31: #{decoder_forward.20} parent=5 // pred_region
      // Predicated region
      $region33: #{decoder_forward.20} parent=31 // pred_check
        %p178 = pneg %p31
      $region34: #{decoder_forward.20} parent=31 // pred_check_branch
        %180 = sbr.rel (%p178) target = $region36
      $region35: #{decoder_forward.20} parent=31 // pred_region
        %p181 = scmp.lt.s32.totalorder %s11, 1
        %s182 = scalar_select %p181, %s11, 1
        %s183 = smul.addr %s182, 8
        %s184 = scalar_lea.vmem %s0, %s183
      $region36: #{decoder_forward.20} parent=31 // pred_fallthru
        _
    $region32: #{decoder_forward.20} parent=5 // pred_fallthru
      _
    %p185 = scmp.le.s32.totalorder 1, %s11
    %p186 = scmp.lt.s32.totalorder %s11, 3
    %p187 = pnand %p185, %p186
    %p188 = pneg %p187
    // Predicated region
    $region37: #{decoder_forward.20} parent=5 // pred_check
      _
    $region38: #{decoder_forward.20} parent=5 // pred_check_branch
      %190 = sbr.rel (%p187) target = $region40
    $region39: #{decoder_forward.20} parent=5 // pred_region
      %s191 = ssub.s32 %s11, 1
      %p192 = scmp.lt.s32.totalorder %s16, 1
      %s193 = scalar_select %p192, %s16, 1
      %s194 = smul.addr %s193, 8
      %s195 = scalar_lea.vmem %s0, %s194
      %p196 = pneg %p37
      %p197 = pneg %p34
      %p198 = pneg %p58
      %p199 = pneg %p55
      %p200 = pneg %p79
      %p201 = pneg %p76
      %p202 = pneg %p100
      %p203 = pneg %p97
      %p204 = pneg %p121
      %p205 = pneg %p118
      %p206 = pneg %p147
      %p207 = pneg %p144
      %p208 = scmp.lt.s32.totalorder %s16, 1
      %s209 = scalar_select %p208, %s16, 1
      %s210 = smul.addr %s209, 8
      %s211 = scalar_lea.vmem %s5, %s210
      %p212 = scmp.lt.s32.totalorder %s16, 1
      %s213 = scalar_select %p212, %s16, 1
      %s214 = smul.addr %s213, 8
      %s215 = scalar_lea.vmem %s0, %s214
      %p216 = scmp.lt.s32.totalorder %s16, 1
      %s217 = scalar_select %p216, %s16, 1
      %s218 = smul.addr %s217, 8
      %s219 = scalar_lea.vmem %s5, %s218
      %v220 = vld [vmem:[%s215] sm:$0xff]
      %v221 = vld [vmem:[%s1] sm:$0xff]
      %v222 = vld [vmem:[%s1 + $0x8] sm:$0xff]
      %v223 = vld [vmem:[%s1 + $0x10] sm:$0xff]
      %v224 = vld [vmem:[%s1 + $0x18] sm:$0xff]
      %v225 = vld [vmem:[%s1 + $0x20] sm:$0xff]
      %v226 = vld [vmem:[%s1 + $0x28] sm:$0xff]
      %v227 = vld [vmem:[%s1 + $0x30] sm:$0xff]
      %v228 = vld [vmem:[%s1 + $0x38] sm:$0xff]
      %v229 = vld [vmem:[%s2] sm:$0x1]
      %v231 = vlaneseq
      %v232 = vshrl.u32 %v231, 7
      %v233 = vsub.s32 0, %v232
      %v234 = vrot.slane %v229, %v233
      %vm236 = vcmask 261120
      %v238 = vsel %vm236, %v220, 0
      %v241 = vsel %vm236, %v221, 0
      %v244 = vsel %vm236, %v222, 0
      %v247 = vsel %vm236, %v223, 0
      %v250 = vsel %vm236, %v224, 0
      %v253 = vsel %vm236, %v225, 0
      %v256 = vsel %vm236, %v226, 0
      %v259 = vsel %vm236, %v227, 0
      %v262 = vsel %vm236, %v228, 0
      %264 = vmatprep.subr.mxu0 0.0
      %265 = vmatpush1.xpose.msra.mxu0 %v241
      %266 = vmatprep.subr.mxu0 0.0
      %267 = vmatpush1.xpose.msra.mxu0 %v244
      %268 = vmatprep.subr.mxu0 0.0
      %269 = vmatpush1.xpose.msra.mxu0 %v247
      %270 = vmatprep.subr.mxu0 0.0
      %271 = vmatpush1.xpose.msra.mxu0 %v250
      %272 = vmatprep.subr.mxu0 0.0
      %273 = vmatpush1.xpose.msra.mxu0 %v253
      %274 = vmatprep.subr.mxu0 0.0
      %275 = vmatpush1.xpose.msra.mxu0 %v256
      %276 = vmatprep.subr.mxu0 0.0
      %277 = vmatpush1.xpose.msra.mxu0 %v259
      %278 = vmatprep.subr.mxu0 0.0
      %279 = vmatpush1.xpose.msra.mxu0 %v262
      %280 = vmatprep.subr.mxu0 0.0
      %281 = vmatpush1.xpose.msra.mxu0 0.0
      %282 = vmatprep.subr.mxu0 0.0
      %283 = vmatpush1.xpose.msra.mxu0 0.0
      %284 = vmatprep.subr.mxu0 0.0
      %285 = vmatpush1.xpose.msra.mxu0 0.0
      %286 = vmatprep.subr.mxu0 0.0
      %287 = vmatpush1.xpose.msra.mxu0 0.0
      %288 = vmatprep.subr.mxu0 0.0
      %289 = vmatpush1.xpose.msra.mxu0 0.0
      %290 = vmatprep.subr.mxu0 0.0
      %291 = vmatpush1.xpose.msra.mxu0 0.0
      %292 = vmatprep.subr.mxu0 0.0
      %293 = vmatpush1.xpose.msra.mxu0 0.0
      %294 = vmatprep.subr.mxu0 0.0
      %295 = vmatpush1.xpose.msra.mxu0 0.0
      %296 = vmatprep.subr.mxu0 0.0
      %297 = vmatpush1.xpose.msra.mxu0 0.0
      %298 = vmatprep.subr.mxu0 0.0
      %299 = vmatpush1.xpose.msra.mxu0 0.0
      %300 = vmatprep.subr.mxu0 0.0
      %301 = vmatpush1.xpose.msra.mxu0 0.0
      %302 = vmatprep.subr.mxu0 0.0
      %303 = vmatpush1.xpose.msra.mxu0 0.0
      %304 = vmatprep.subr.mxu0 0.0
      %305 = vmatpush1.xpose.msra.mxu0 0.0
      %306 = vmatprep.subr.mxu0 0.0
      %307 = vmatpush1.xpose.msra.mxu0 0.0
      %308 = vmatprep.subr.mxu0 0.0
      %309 = vmatpush1.xpose.msra.mxu0 0.0
      %310 = vmatprep.subr.mxu0 0.0
      %311 = vmatpush1.xpose.msra.mxu0 0.0
      %312 = vmatprep.subr.mxu0 0.0
      %313 = vmatpush1.xpose.msra.mxu0 0.0
      %314 = vmatprep.subr.mxu0 0.0
      %315 = vmatpush1.xpose.msra.mxu0 0.0
      %316 = vmatprep.subr.mxu0 0.0
      %317 = vmatpush1.xpose.msra.mxu0 0.0
      %318 = vmatprep.subr.mxu0 0.0
      %319 = vmatpush1.xpose.msra.mxu0 0.0
      %320 = vmatprep.subr.mxu0 0.0
      %321 = vmatpush1.xpose.msra.mxu0 0.0
      %322 = vmatprep.subr.mxu0 0.0
      %323 = vmatpush1.xpose.msra.mxu0 0.0
      %324 = vmatprep.subr.mxu0 0.0
      %325 = vmatpush1.xpose.msra.mxu0 0.0
      %326 = vmatprep.subr.mxu0 0.0
      %327 = vmatpush1.xpose.msra.mxu0 0.0
      %328 = vmatprep.mubr.f32.mxu0 0.0
      %329 = vmatmul.mubr.f32.gmra.mrb[0].mxu0 %v238
      %v330 = vpop.f32.mrb[0].mxu0
      %v331 = vadd.f32 %v234, %v330
      %v332 = vpop.f32.mrb[0].mxu0
      %333 = vdwg.mxu0
      %v334 = vmul.f32 %v331, 0.5
      %v335 = vmul.f32 %v331, 0.70710677
      %v336 = verf.f32.pop %v335
      %v337 = vadd.f32 %v336, 1.0
      %v338 = vmul.f32 %v334, %v337
      %v339 = vld [vmem:[%s3] sm:$0xff]
      %v340 = vld [vmem:[%s3 + $0x8] sm:$0xff]
      %v341 = vld [vmem:[%s3 + $0x10] sm:$0xff]
      %v342 = vld [vmem:[%s3 + $0x18] sm:$0xff]
      %v343 = vld [vmem:[%s4] sm:$0x1]
      %v345 = vlaneseq
      %v346 = vshrl.u32 %v345, 7
      %v347 = vsub.s32 0, %v346
      %v348 = vrot.slane %v343, %v347
      %vm350 = vcmask 523264
      %v352 = vsel %vm350, %v338, 0
      %v355 = vsel %vm350, %v339, 0
      %v358 = vsel %vm350, %v340, 0
      %v361 = vsel %vm350, %v341, 0
      %v364 = vsel %vm350, %v342, 0
      %366 = vmatprep.subr.mxu0 0.0
      %367 = vmatpush1.xpose.msra.mxu0 %v355
      %368 = vmatprep.subr.mxu0 0.0
      %369 = vmatpush1.xpose.msra.mxu0 %v358
      %370 = vmatprep.subr.mxu0 0.0
      %371 = vmatpush1.xpose.msra.mxu0 %v361
      %372 = vmatprep.subr.mxu0 0.0
      %373 = vmatpush1.xpose.msra.mxu0 %v364
      %374 = vmatprep.subr.mxu0 0.0
      %375 = vmatpush1.xpose.msra.mxu0 0.0
      %376 = vmatprep.subr.mxu0 0.0
      %377 = vmatpush1.xpose.msra.mxu0 0.0
      %378 = vmatprep.subr.mxu0 0.0
      %379 = vmatpush1.xpose.msra.mxu0 0.0
      %380 = vmatprep.subr.mxu0 0.0
      %381 = vmatpush1.xpose.msra.mxu0 0.0
      %382 = vmatprep.subr.mxu0 0.0
      %383 = vmatpush1.xpose.msra.mxu0 0.0
      %384 = vmatprep.subr.mxu0 0.0
      %385 = vmatpush1.xpose.msra.mxu0 0.0
      %386 = vmatprep.subr.mxu0 0.0
      %387 = vmatpush1.xpose.msra.mxu0 0.0
      %388 = vmatprep.subr.mxu0 0.0
      %389 = vmatpush1.xpose.msra.mxu0 0.0
      %390 = vmatprep.subr.mxu0 0.0
      %391 = vmatpush1.xpose.msra.mxu0 0.0
      %392 = vmatprep.subr.mxu0 0.0
      %393 = vmatpush1.xpose.msra.mxu0 0.0
      %394 = vmatprep.subr.mxu0 0.0
      %395 = vmatpush1.xpose.msra.mxu0 0.0
      %396 = vmatprep.subr.mxu0 0.0
      %397 = vmatpush1.xpose.msra.mxu0 0.0
      %398 = vmatprep.subr.mxu0 0.0
      %399 = vmatpush1.xpose.msra.mxu0 0.0
      %400 = vmatprep.subr.mxu0 0.0
      %401 = vmatpush1.xpose.msra.mxu0 0.0
      %402 = vmatprep.subr.mxu0 0.0
      %403 = vmatpush1.xpose.msra.mxu0 0.0
      %404 = vmatprep.subr.mxu0 0.0
      %405 = vmatpush1.xpose.msra.mxu0 0.0
      %406 = vmatprep.subr.mxu0 0.0
      %407 = vmatpush1.xpose.msra.mxu0 0.0
      %408 = vmatprep.subr.mxu0 0.0
      %409 = vmatpush1.xpose.msra.mxu0 0.0
      %410 = vmatprep.subr.mxu0 0.0
      %411 = vmatpush1.xpose.msra.mxu0 0.0
      %412 = vmatprep.subr.mxu0 0.0
      %413 = vmatpush1.xpose.msra.mxu0 0.0
      %414 = vmatprep.subr.mxu0 0.0
      %415 = vmatpush1.xpose.msra.mxu0 0.0
      %416 = vmatprep.subr.mxu0 0.0
      %417 = vmatpush1.xpose.msra.mxu0 0.0
      %418 = vmatprep.subr.mxu0 0.0
      %419 = vmatpush1.xpose.msra.mxu0 0.0
      %420 = vmatprep.subr.mxu0 0.0
      %421 = vmatpush1.xpose.msra.mxu0 0.0
      %422 = vmatprep.subr.mxu0 0.0
      %423 = vmatpush1.xpose.msra.mxu0 0.0
      %424 = vmatprep.subr.mxu0 0.0
      %425 = vmatpush1.xpose.msra.mxu0 0.0
      %426 = vmatprep.subr.mxu0 0.0
      %427 = vmatpush1.xpose.msra.mxu0 0.0
      %428 = vmatprep.subr.mxu0 0.0
      %429 = vmatpush1.xpose.msra.mxu0 0.0
      %430 = vmatprep.mubr.f32.mxu0 0.0
      %431 = vmatmul.mubr.f32.gmra.mrb[0].mxu0 %v352
      %v432 = vpop.f32.mrb[0].mxu0
      %v433 = vadd.f32 %v348, %v432
      %v434 = vpop.f32.mrb[0].mxu0
      %435 = vdwg.mxu0
      %436 = vst.msk [vmem:[%s219] sm:$0xff] %vm236, %v433
      %p437 = scmp.lt.s32.totalorder %s16, 1
      %s438 = scalar_select %p437, %s16, 1
      %s439 = smul.addr %s438, 8
      %s440 = scalar_lea.vmem %s5, %s439
      // Predicated region
      $region41: #{decoder_forward.20} parent=39 // pred_check
        %p441 = pneg %p144
      $region42: #{decoder_forward.20} parent=39 // pred_check_branch
        %443 = sbr.rel (%p441) target = $region44
      $region43: #{decoder_forward.20} parent=39 // pred_region
        _
      $region44: #{decoder_forward.20} parent=39 // pred_fallthru
        _
    $region40: #{decoder_forward.20} parent=5 // pred_fallthru
      _
    %p444 = scmp.le.s32.totalorder 2, %s11
    // Predicated region
    $region45: #{decoder_forward.20} parent=5 // pred_check
      %p445 = pneg %p444
    $region46: #{decoder_forward.20} parent=5 // pred_check_branch
      %447 = sbr.rel (%p445) target = $region48
    $region47: #{decoder_forward.20} parent=5 // pred_region
      %s448 = ssub.s32 %s11, 2
      // Predicated region
      $region49: #{decoder_forward.20} parent=47 // pred_check
        %p449 = pneg %p150
      $region50: #{decoder_forward.20} parent=47 // pred_check_branch
        %451 = sbr.rel (%p449) target = $region52
      $region51: #{decoder_forward.20} parent=47 // pred_region
        %p452 = scmp.lt.s32.totalorder %s17, 1
        %s453 = scalar_select %p452, %s17, 1
        %s454 = smul.addr %s453, 8
        %s455 = scalar_lea.vmem %s5, %s454
      $region52: #{decoder_forward.20} parent=47 // pred_fallthru
        _
    $region48: #{decoder_forward.20} parent=5 // pred_fallthru
      _
  $region6: #{decoder_forward.20} parent=0 // loop_footer
    %s15 = sadd.s32 1, %s11
  $region7: #{decoder_forward.20} parent=0 // loop_footer_branch
    %10 = sbr.rel target = $region3
  $region8: #{decoder_forward.20} parent=0 // loop_exit
    _

// kernel: decoder_forward.17
$region0: #{decoder_forward.17}
  #allocation0 [shape = 'u32[]', space=smem, size = 0x4, offset = 0x4, fixed_abs, tag = 'smem constant byte address 0x4 - core index']
  #allocation1 [shape = 'u32[144,128]{1,0:T(1,128)}', space=vmem, size = 0x12000, scoped, tag = 'internal scratch']
  %s0 = inlined_call_operand.vmem [shape: f32[2,8,32], index: 0, kind: input, shape index: {}]
  %s1 = inlined_call_operand.vmem [shape: f32[2,16,32], index: 1, kind: input, shape index: {}]
  %s2 = inlined_call_operand.vmem [shape: f32[2,16,32], index: 2, kind: input, shape index: {}]
  %s3 = inlined_call_operand.vmem [shape: s32[2,8,16], index: 3, kind: input, shape index: {}]
  %s4 = inlined_call_operand.vmem [shape: f32[2,8,32], index: 4, kind: output, shape index: {0}]
  %s5 = inlined_call_operand.hbm [shape: f32[2,4,8,16], index: 5, kind: output, shape index: {1}]
  %6 = xla_tuple %s4, %s5
  %s7 = sld [smem:[#allocation0]]
  $region57: #{decoder_forward.17} parent=0
    _
  %s9 = ssub.s32 1, %s7
  %s10 = scalar_select 0, %s9, %s7
  $region1: #{decoder_forward.17} parent=0
    #allocation2 [shape = 'u8[32768]{0}', space=vmem, size = 0x8000, scoped, tag = 'output window, operand 1']
    #allocation3 [shape = 's32[2]{0}', space=sflag, size = 0x8, scoped, tag = 'scoped memory for decoder_forward.17']
    %11 = vsyncpa [#allocation3], 0
    %s12 = scalar_lea.sflag [#allocation3], 1
    %13 = vsyncpa %s12, 0
    loop: start=0, step=1, limit=4
    $region2: #{decoder_forward.17} parent=1 // loop_pre_header
      _
    $region3: #{decoder_forward.17} parent=1 // loop_header
      %s15 = sphi 0, %s19
      %p16 = scmp.ge.s32.totalorder %s15, 4
      %s25 = sphi 0, %s27
      %s28 = sphi 0, %s25
      %s29 = sphi 0, %s28
      %s45 = sphi 0, %s29
      %s51 = sphi 0, %s53
      %s54 = sphi 0, %s51
      %s55 = sphi 0, %s54
      %s71 = sphi 0, %s55
      %s77 = sphi 0, %s79
      %s80 = sphi 0, %s77
      %s81 = sphi 0, %s80
      %s97 = sphi 0, %s81
      %s103 = sphi 0, %s105
      %s106 = sphi 0, %s103
      %s107 = sphi 0, %s106
      %s123 = sphi 0, %s107
      %s129 = sphi 0, %s131
      %s132 = sphi 0, %s129
      %s133 = sphi 0, %s132
      %s149 = sphi 0, %s133
      %s155 = sphi 0, %s157
      %s158 = sphi 0, %s155
      %s159 = sphi 0, %s158
      %s175 = sphi 0, %s159
    $region4: #{decoder_forward.17} parent=1 // loop_header_branch
      %18 = sbr.rel (%p16) target = $region8
    $region5: #{decoder_forward.17} parent=1 // loop_body
      %s20 = ssub.s32 %s15, 1
      %s21 = ssub.s32 %s15, 2
      %s22 = sadd.s32 %s15, 1
      %s23 = ssub.s32 %s15, %s22
      %p24 = scmp.eq.s32.totalorder %s23, 0
      %s26 = sadd.s32 %s25, 1
      %s27 = scalar_select %p24, %s25, %s26
      %p30 = pneg %p24
      %p31 = scmp.eq.s32.totalorder %s15, 1
      %p32 = por %p30, %p31
      %p33 = scmp.ne.s32.totalorder %s25, %s28
      %p34 = scmp.eq.s32.totalorder %s15, 0
      %p35 = por %p33, %p34
      %p36 = scmp.ne.s32.totalorder %s25, %s28
      %p37 = scmp.eq.s32.totalorder %s20, 1
      %p38 = por %p36, %p37
      %p39 = scmp.ne.s32.totalorder %s28, %s29
      %p40 = scmp.eq.s32.totalorder %s20, 0
      %p41 = por %p39, %p40
      %p42 = scmp.ne.s32.totalorder %s28, %s29
      %p43 = scmp.eq.s32.totalorder %s21, 1
      %p44 = por %p42, %p43
      %p46 = scmp.ne.s32.totalorder %s29, %s45
      %p47 = scmp.eq.s32.totalorder %s21, 0
      %p48 = por %p46, %p47
      %s49 = ssub.s32 %s15, %s22
      %p50 = scmp.eq.s32.totalorder %s49, 0
      %s52 = sadd.s32 %s51, 1
      %s53 = scalar_select %p50, %s51, %s52
      %p56 = pneg %p50
      %p57 = scmp.eq.s32.totalorder %s15, 1
      %p58 = por %p56, %p57
      %p59 = scmp.ne.s32.totalorder %s51, %s54
      %p60 = scmp.eq.s32.totalorder %s15, 0
      %p61 = por %p59, %p60
      %p62 = scmp.ne.s32.totalorder %s51, %s54
      %p63 = scmp.eq.s32.totalorder %s20, 1
      %p64 = por %p62, %p63
      %p65 = scmp.ne.s32.totalorder %s54, %s55
      %p66 = scmp.eq.s32.totalorder %s20, 0
      %p67 = por %p65, %p66
      %p68 = scmp.ne.s32.totalorder %s54, %s55
      %p69 = scmp.eq.s32.totalorder %s21, 1
      %p70 = por %p68, %p69
      %p72 = scmp.ne.s32.totalorder %s55, %s71
      %p73 = scmp.eq.s32.totalorder %s21, 0
      %p74 = por %p72, %p73
      %s75 = ssub.s32 %s15, %s22
      %p76 = scmp.eq.s32.totalorder %s75, 0
      %s78 = sadd.s32 %s77, 1
      %s79 = scalar_select %p76, %s77, %s78
      %p82 = pneg %p76
      %p83 = scmp.eq.s32.totalorder %s15, 1
      %p84 = por %p82, %p83
      %p85 = scmp.ne.s32.totalorder %s77, %s80
      %p86 = scmp.eq.s32.totalorder %s15, 0
      %p87 = por %p85, %p86
      %p88 = scmp.ne.s32.totalorder %s77, %s80
      %p89 = scmp.eq.s32.totalorder %s20, 1
      %p90 = por %p88, %p89
      %p91 = scmp.ne.s32.totalorder %s80, %s81
      %p92 = scmp.eq.s32.totalorder %s20, 0
      %p93 = por %p91, %p92
      %p94 = scmp.ne.s32.totalorder %s80, %s81
      %p95 = scmp.eq.s32.totalorder %s21, 1
      %p96 = por %p94, %p95
      %p98 = scmp.ne.s32.totalorder %s81, %s97
      %p99 = scmp.eq.s32.totalorder %s21, 0
      %p100 = por %p98, %p99
      %s101 = ssub.s32 %s15, %s22
      %p102 = scmp.eq.s32.totalorder %s101, 0
      %s104 = sadd.s32 %s103, 1
      %s105 = scalar_select %p102, %s103, %s104
      %p108 = pneg %p102
      %p109 = scmp.eq.s32.totalorder %s15, 1
      %p110 = por %p108, %p109
      %p111 = scmp.ne.s32.totalorder %s103, %s106
      %p112 = scmp.eq.s32.totalorder %s15, 0
      %p113 = por %p111, %p112
      %p114 = scmp.ne.s32.totalorder %s103, %s106
      %p115 = scmp.eq.s32.totalorder %s20, 1
      %p116 = por %p114, %p115
      %p117 = scmp.ne.s32.totalorder %s106, %s107
      %p118 = scmp.eq.s32.totalorder %s20, 0
      %p119 = por %p117, %p118
      %p120 = scmp.ne.s32.totalorder %s106, %s107
      %p121 = scmp.eq.s32.totalorder %s21, 1
      %p122 = por %p120, %p121
      %p124 = scmp.ne.s32.totalorder %s107, %s123
      %p125 = scmp.eq.s32.totalorder %s21, 0
      %p126 = por %p124, %p125
      %s127 = ssub.s32 %s15, %s22
      %p128 = scmp.eq.s32.totalorder %s127, 0
      %s130 = sadd.s32 %s129, 1
      %s131 = scalar_select %p128, %s129, %s130
      %p134 = pneg %p128
      %p135 = scmp.eq.s32.totalorder %s15, 1
      %p136 = por %p134, %p135
      %p137 = scmp.ne.s32.totalorder %s129, %s132
      %p138 = scmp.eq.s32.totalorder %s15, 0
      %p139 = por %p137, %p138
      %p140 = scmp.ne.s32.totalorder %s129, %s132
      %p141 = scmp.eq.s32.totalorder %s20, 1
      %p142 = por %p140, %p141
      %p143 = scmp.ne.s32.totalorder %s132, %s133
      %p144 = scmp.eq.s32.totalorder %s20, 0
      %p145 = por %p143, %p144
      %p146 = scmp.ne.s32.totalorder %s132, %s133
      %p147 = scmp.eq.s32.totalorder %s21, 1
      %p148 = por %p146, %p147
      %p150 = scmp.ne.s32.totalorder %s133, %s149
      %p151 = scmp.eq.s32.totalorder %s21, 0
      %p152 = por %p150, %p151
      %s153 = ssub.s32 %s15, %s22
      %p154 = scmp.eq.s32.totalorder %s153, 0
      %s156 = sadd.s32 %s155, 1
      %s157 = scalar_select %p154, %s155, %s156
      %p160 = pneg %p154
      %p161 = scmp.eq.s32.totalorder %s15, 1
      %p162 = por %p160, %p161
      %p163 = scmp.ne.s32.totalorder %s155, %s158
      %p164 = scmp.eq.s32.totalorder %s15, 0
      %p165 = por %p163, %p164
      %p166 = scmp.ne.s32.totalorder %s155, %s158
      %p167 = scmp.eq.s32.totalorder %s20, 1
      %p168 = por %p166, %p167
      %p169 = scmp.ne.s32.totalorder %s158, %s159
      %p170 = scmp.eq.s32.totalorder %s20, 0
      %p171 = por %p169, %p170
      %p172 = scmp.ne.s32.totalorder %s158, %s159
      %p173 = scmp.eq.s32.totalorder %s21, 1
      %p174 = por %p172, %p173
      %p176 = scmp.ne.s32.totalorder %s159, %s175
      %p177 = scmp.eq.s32.totalorder %s21, 0
      %p178 = por %p176, %p177
      %p179 = scmp.le.s32.totalorder 1, %s15
      %p180 = scmp.lt.s32.totalorder %s15, 3
      %p181 = pnand %p179, %p180
      %p182 = pneg %p181
      // Predicated region
      $region9: #{decoder_forward.17} parent=5 // pred_check
        _
      $region10: #{decoder_forward.17} parent=5 // pred_check_branch
        %184 = sbr.rel (%p181) target = $region12
      $region11: #{decoder_forward.17} parent=5 // pred_region
        %s185 = ssub.s32 %s15, 1
      $region12: #{decoder_forward.17} parent=5 // pred_fallthru
        _
      %p186 = scmp.lt.s32.totalorder %s15, 2
      // Predicated region
      $region13: #{decoder_forward.17} parent=5 // pred_check
        %p187 = pneg %p186
      $region14: #{decoder_forward.17} parent=5 // pred_check_branch
        %189 = sbr.rel (%p187) target = $region16
      $region15: #{decoder_forward.17} parent=5 // pred_region
        // Predicated region
        $region17: #{decoder_forward.17} parent=15 // pred_check
          %p190 = pneg %p35
        $region18: #{decoder_forward.17} parent=15 // pred_check_branch
          %192 = sbr.rel (%p190) target = $region20
        $region19: #{decoder_forward.17} parent=15 // pred_region
          %p193 = scmp.lt.s32.totalorder %s15, 1
          %s194 = scalar_select %p193, %s15, 1
          %s195 = smul.addr %s194, 8
          %s196 = scalar_lea.vmem %s0, %s195
        $region20: #{decoder_forward.17} parent=15 // pred_fallthru
          _
        // Predicated region
        $region21: #{decoder_forward.17} parent=15 // pred_check
          %p197 = pneg %p61
        $region22: #{decoder_forward.17} parent=15 // pred_check_branch
          %199 = sbr.rel (%p197) target = $region24
        $region23: #{decoder_forward.17} parent=15 // pred_region
          %p200 = scmp.lt.s32.totalorder %s15, 1
          %s201 = scalar_select %p200, %s15, 1
          %s202 = smul.addr %s201, 2
          %s203 = smul.addr %s202, 8
          %s204 = scalar_lea.vmem %s1, %s203
        $region24: #{decoder_forward.17} parent=15 // pred_fallthru
          _
        // Predicated region
        $region25: #{decoder_forward.17} parent=15 // pred_check
          %p205 = pneg %p87
        $region26: #{decoder_forward.17} parent=15 // pred_check_branch
          %207 = sbr.rel (%p205) target = $region28
        $region27: #{decoder_forward.17} parent=15 // pred_region
          %p208 = scmp.lt.s32.totalorder %s15, 1
          %s209 = scalar_select %p208, %s15, 1
          %s210 = smul.addr %s209, 2
          %s211 = smul.addr %s210, 8
          %s212 = scalar_lea.vmem %s2, %s211
        $region28: #{decoder_forward.17} parent=15 // pred_fallthru
          _
        // Predicated region
        $region29: #{decoder_forward.17} parent=15 // pred_check
          %p213 = pneg %p113
        $region30: #{decoder_forward.17} parent=15 // pred_check_branch
          %215 = sbr.rel (%p213) target = $region32
        $region31: #{decoder_forward.17} parent=15 // pred_region
          %p216 = scmp.lt.s32.totalorder %s15, 1
          %s217 = scalar_select %p216, %s15, 1
          %s218 = smul.addr %s217, 8
          %s219 = scalar_lea.vmem %s3, %s218
        $region32: #{decoder_forward.17} parent=15 // pred_fallthru
          _
      $region16: #{decoder_forward.17} parent=5 // pred_fallthru
        _
      %p220 = scmp.le.s32.totalorder 1, %s15
      %p221 = scmp.lt.s32.totalorder %s15, 3
      %p222 = pnand %p220, %p221
      %p223 = pneg %p222
      // Predicated region
      $region33: #{decoder_forward.17} parent=5 // pred_check
        _
      $region34: #{decoder_forward.17} parent=5 // pred_check_branch
        %225 = sbr.rel (%p222) target = $region36
      $region35: #{decoder_forward.17} parent=5 // pred_region
        %s226 = ssub.s32 %s15, 1
        %p227 = scmp.lt.s32.totalorder %s20, 1
        %s228 = scalar_select %p227, %s20, 1
        %s229 = smul.addr %s228, 8
        %s230 = scalar_lea.vmem %s0, %s229
        %p231 = pneg %p41
        %p232 = pneg %p38
        %p233 = scmp.lt.s32.totalorder %s20, 1
        %s234 = scalar_select %p233, %s20, 1
        %s235 = smul.addr %s234, 2
        %s236 = smul.addr %s235, 8
        %s237 = scalar_lea.vmem %s1, %s236
        %p238 = pneg %p67
        %p239 = pneg %p64
        %p240 = scmp.lt.s32.totalorder %s20, 1
        %s241 = scalar_select %p240, %s20, 1
        %s242 = smul.addr %s241, 2
        %s243 = smul.addr %s242, 8
        %s244 = scalar_lea.vmem %s2, %s243
        %p245 = pneg %p93
        %p246 = pneg %p90
        %p247 = scmp.lt.s32.totalorder %s20, 1
        %s248 = scalar_select %p247, %s20, 1
        %s249 = smul.addr %s248, 8
        %s250 = scalar_lea.vmem %s3, %s249
        %p251 = pneg %p119
        %p252 = pneg %p116
        %p253 = pneg %p145
        %p254 = pneg %p142
        %p255 = scmp.lt.s32.totalorder %s20, 1
        %s256 = scalar_select %p255, %s20, 1
        %s257 = smul.addr %s256, 8
        %s258 = scalar_lea.vmem %s4, %s257
        %p259 = pneg %p171
        %p260 = pneg %p168
        %s261 = sand.u32 %s158, 1
        %s262 = scalar_lea.sflag [#allocation3], %s261
        %s263 = sand.u32 %s158, 1
        %s264 = smul.addr %s263, 32
        %s265 = scalar_lea.vmem [#allocation2], %s264
        %p266 = scmp.lt.s32.totalorder %s20, 1
        %s267 = scalar_select %p266, %s20, 1
        %s268 = smul.addr %s267, 8
        %s269 = scalar_lea.vmem %s0, %s268
        %p270 = scmp.lt.s32.totalorder %s20, 1
        %s271 = scalar_select %p270, %s20, 1
        %s272 = smul.addr %s271, 2
        %s273 = smul.addr %s272, 8
        %s274 = scalar_lea.vmem %s1, %s273
        %p275 = scmp.lt.s32.totalorder %s20, 1
        %s276 = scalar_select %p275, %s20, 1
        %s277 = smul.addr %s276, 2
        %s278 = smul.addr %s277, 8
        %s279 = scalar_lea.vmem %s2, %s278
        %p280 = scmp.lt.s32.totalorder %s20, 1
        %s281 = scalar_select %p280, %s20, 1
        %s282 = smul.addr %s281, 8
        %s283 = scalar_lea.vmem %s3, %s282
        %p284 = scmp.lt.s32.totalorder %s20, 1
        %s285 = scalar_select %p284, %s20, 1
        %s286 = smul.addr %s285, 8
        %s287 = scalar_lea.vmem %s4, %s286
        %v288 = vld [vmem:[%s269] sm:$0xff]
        %v289 = vld [vmem:[%s274] sm:$0xff]
        %v290 = vld [vmem:[%s274 + $0x8] sm:$0xff]
        %v291 = vld [vmem:[%s279] sm:$0xff]
        %v292 = vld [vmem:[%s279 + $0x8] sm:$0xff]
        %v293 = vld [vmem:[%s283] sm:$0xff]
        %vm294 = vcmp.ne.s32.totalorder %v293, 0
        %vm295 = vcmask 64512
        %v297 = vsel %vm295, %v288, 0
        %v300 = vsel %vm295, %v289, 0
        %v303 = vsel %vm295, %v290, 0
        %305 = vmatprep.subr.mxu0 0.0
        %306 = vmatpush1.xpose.msra.mxu0 %v300
        %307 = vmatprep.subr.mxu0 0.0
        %308 = vmatpush1.xpose.msra.mxu0 %v303
        %309 = vmatprep.subr.mxu0 0.0
        %310 = vmatpush1.xpose.msra.mxu0 0.0
        %311 = vmatprep.subr.mxu0 0.0
        %312 = vmatpush1.xpose.msra.mxu0 0.0
        %313 = vmatprep.subr.mxu0 0.0
        %314 = vmatpush1.xpose.msra.mxu0 0.0
        %315 = vmatprep.subr.mxu0 0.0
        %316 = vmatpush1.xpose.msra.mxu0 0.0
        %317 = vmatprep.subr.mxu0 0.0
        %318 = vmatpush1.xpose.msra.mxu0 0.0
        %319 = vmatprep.subr.mxu0 0.0
        %320 = vmatpush1.xpose.msra.mxu0 0.0
        %321 = vmatprep.subr.mxu0 0.0
        %322 = vmatpush1.xpose.msra.mxu0 0.0
        %323 = vmatprep.subr.mxu0 0.0
        %324 = vmatpush1.xpose.msra.mxu0 0.0
        %325 = vmatprep.subr.mxu0 0.0
        %326 = vmatpush1.xpose.msra.mxu0 0.0
        %327 = vmatprep.subr.mxu0 0.0
        %328 = vmatpush1.xpose.msra.mxu0 0.0
        %329 = vmatprep.subr.mxu0 0.0
        %330 = vmatpush1.xpose.msra.mxu0 0.0
        %331 = vmatprep.subr.mxu0 0.0
        %332 = vmatpush1.xpose.msra.mxu0 0.0
        %333 = vmatprep.subr.mxu0 0.0
        %334 = vmatpush1.xpose.msra.mxu0 0.0
        %335 = vmatprep.subr.mxu0 0.0
        %336 = vmatpush1.xpose.msra.mxu0 0.0
        %337 = vmatprep.subr.mxu0 0.0
        %338 = vmatpush1.xpose.msra.mxu0 0.0
        %339 = vmatprep.subr.mxu0 0.0
        %340 = vmatpush1.xpose.msra.mxu0 0.0
        %341 = vmatprep.subr.mxu0 0.0
        %342 = vmatpush1.xpose.msra.mxu0 0.0
        %343 = vmatprep.subr.mxu0 0.0
        %344 = vmatpush1.xpose.msra.mxu0 0.0
        %345 = vmatprep.subr.mxu0 0.0
        %346 = vmatpush1.xpose.msra.mxu0 0.0
        %347 = vmatprep.subr.mxu0 0.0
        %348 = vmatpush1.xpose.msra.mxu0 0.0
        %349 = vmatprep.subr.mxu0 0.0
        %350 = vmatpush1.xpose.msra.mxu0 0.0
        %351 = vmatprep.subr.mxu0 0.0
        %352 = vmatpush1.xpose.msra.mxu0 0.0
        %353 = vmatprep.subr.mxu0 0.0
        %354 = vmatpush1.xpose.msra.mxu0 0.0
        %355 = vmatprep.subr.mxu0 0.0
        %356 = vmatpush1.xpose.msra.mxu0 0.0
        %357 = vmatprep.subr.mxu0 0.0
        %358 = vmatpush1.xpose.msra.mxu0 0.0
        %359 = vmatprep.subr.mxu0 0.0
        %360 = vmatpush1.xpose.msra.mxu0 0.0
        %361 = vmatprep.subr.mxu0 0.0
        %362 = vmatpush1.xpose.msra.mxu0 0.0
        %363 = vmatprep.subr.mxu0 0.0
        %364 = vmatpush1.xpose.msra.mxu0 0.0
        %365 = vmatprep.subr.mxu0 0.0
        %366 = vmatpush1.xpose.msra.mxu0 0.0
        %367 = vmatprep.subr.mxu0 0.0
        %368 = vmatpush1.xpose.msra.mxu0 0.0
        %369 = vmatprep.mubr.f32.mxu0 0.0
        %370 = vmatmul.mubr.f32.gmra.mrb[0].mxu0 %v297
        %v371 = vpop.f32.mrb[0].mxu0
        %v372 = vadd.f32 0.0, %v371
        %v373 = vpop.f32.mrb[0].mxu0
        %374 = vdwg.mxu0
        %v375 = vmul.f32 %v372, 0.35355338
        %v376 = vsel %vm294, -1e+09, %v375
        %vm377 = vcmask 130048
        %v378 = vsel %vm377, %v376, -inf
        %379 = vmax.xlane.f32.xlu0 %v378
        %v380 = vpop.xlane.xlu0 %379
        %v381 = vsub.f32 %v376, %v380
        %v382 = vmul.f32 %v381, 1.442695
        %v383 = vpow.pop %v382
        %v384 = vsel %vm377, %v383, 0.0
        %385 = vadd.xlane.f32.xlu0 %v384
        %v386 = vpop.xlane.xlu0 %385
        %v387 = vrcp.pop %v386
        %v388 = vmul.f32 %v383, %v387
        %v390 = vsel %vm377, %v388, 0
        %392 = vmatprep.subr.mxu0 0.0
        %393 = vmatpush1.msra.mxu0 %v291
        %394 = vmatprep.subr.mxu0 0.0
        %395 = vmatpush1.msra.mxu0 %v292
        %396 = vmatprep.subr.mxu0 0.0
        %397 = vmatpush1.msra.mxu0 0.0
        %398 = vmatprep.subr.mxu0 0.0
        %399 = vmatpush1.msra.mxu0 0.0
        %400 = vmatprep.subr.mxu0 0.0
        %401 = vmatpush1.msra.mxu0 0.0
        %402 = vmatprep.subr.mxu0 0.0
        %403 = vmatpush1.msra.mxu0 0.0
        %404 = vmatprep.subr.mxu0 0.0
        %405 = vmatpush1.msra.mxu0 0.0
        %406 = vmatprep.subr.mxu0 0.0
        %407 = vmatpush1.msra.mxu0 0.0
        %408 = vmatprep.subr.mxu0 0.0
        %409 = vmatpush1.msra.mxu0 0.0
        %410 = vmatprep.subr.mxu0 0.0
        %411 = vmatpush1.msra.mxu0 0.0
        %412 = vmatprep.subr.mxu0 0.0
        %413 = vmatpush1.msra.mxu0 0.0
        %414 = vmatprep.subr.mxu0 0.0
        %415 = vmatpush1.msra.mxu0 0.0
        %416 = vmatprep.subr.mxu0 0.0
        %417 = vmatpush1.msra.mxu0 0.0
        %418 = vmatprep.subr.mxu0 0.0
        %419 = vmatpush1.msra.mxu0 0.0
        %420 = vmatprep.subr.mxu0 0.0
        %421 = vmatpush1.msra.mxu0 0.0
        %422 = vmatprep.subr.mxu0 0.0
        %423 = vmatpush1.msra.mxu0 0.0
        %424 = vmatprep.subr.mxu0 0.0
        %425 = vmatpush1.msra.mxu0 0.0
        %426 = vmatprep.subr.mxu0 0.0
        %427 = vmatpush1.msra.mxu0 0.0
        %428 = vmatprep.subr.mxu0 0.0
        %429 = vmatpush1.msra.mxu0 0.0
        %430 = vmatprep.subr.mxu0 0.0
        %431 = vmatpush1.msra.mxu0 0.0
        %432 = vmatprep.subr.mxu0 0.0
        %433 = vmatpush1.msra.mxu0 0.0
        %434 = vmatprep.subr.mxu0 0.0
        %435 = vmatpush1.msra.mxu0 0.0
        %436 = vmatprep.subr.mxu0 0.0
        %437 = vmatpush1.msra.mxu0 0.0
        %438 = vmatprep.subr.mxu0 0.0
        %439 = vmatpush1.msra.mxu0 0.0
        %440 = vmatprep.subr.mxu0 0.0
        %441 = vmatpush1.msra.mxu0 0.0
        %442 = vmatprep.subr.mxu0 0.0
        %443 = vmatpush1.msra.mxu0 0.0
        %444 = vmatprep.subr.mxu0 0.0
        %445 = vmatpush1.msra.mxu0 0.0
        %446 = vmatprep.subr.mxu0 0.0
        %447 = vmatpush1.msra.mxu0 0.0
        %448 = vmatprep.subr.mxu0 0.0
        %449 = vmatpush1.msra.mxu0 0.0
        %450 = vmatprep.subr.mxu0 0.0
        %451 = vmatpush1.msra.mxu0 0.0
        %452 = vmatprep.subr.mxu0 0.0
        %453 = vmatpush1.msra.mxu0 0.0
        %454 = vmatprep.subr.mxu0 0.0
        %455 = vmatpush1.msra.mxu0 0.0
        %456 = vmatprep.mubr.f32.mxu0 0.0
        %457 = vmatmul.mubr.f32.gmra.mrb[0].mxu0 %v390
        %v458 = vpop.f32.mrb[0].mxu0
        %v459 = vadd.f32 0.0, %v458
        %v460 = vpop.f32.mrb[0].mxu0
        %461 = vdwg.mxu0
        %462 = vst.msk [vmem:[%s265] sm:$0xff] %vm377, %v388
        %463 = vrot.lane.b32.xlu0 %v288, 120
        %v464 = vpop.permute.xlu0 %463
        %465 = vrot.lane.b32.xlu0 %v289, 120
        %v466 = vpop.permute.xlu0 %465
        %467 = vrot.lane.b32.xlu0 %v290, 120
        %v468 = vpop.permute.xlu0 %467
        %v469 = vsel %vm295, %v464, 0
        %v471 = vsel %vm295, %v466, 0
        %v473 = vsel %vm295, %v468, 0
        %475 = vmatprep.subr.mxu0 0.0
        %476 = vmatpush1.xpose.msra.mxu0 %v471
        %477 = vmatprep.subr.mxu0 0.0
        %478 = vmatpush1.xpose.msra.mxu0 %v473
        %479 = vmatprep.subr.mxu0 0.0
        %480 = vmatpush1.xpose.msra.mxu0 0.0
        %481 = vmatprep.subr.mxu0 0.0
        %482 = vmatpush1.xpose.msra.mxu0 0.0
        %483 = vmatprep.subr.mxu0 0.0
        %484 = vmatpush1.xpose.msra.mxu0 0.0
        %485 = vmatprep.subr.mxu0 0.0
        %486 = vmatpush1.xpose.msra.mxu0 0.0
        %487 = vmatprep.subr.mxu0 0.0
        %488 = vmatpush1.xpose.msra.mxu0 0.0
        %489 = vmatprep.subr.mxu0 0.0
        %490 = vmatpush1.xpose.msra.mxu0 0.0
        %491 = vmatprep.subr.mxu0 0.0
        %492 = vmatpush1.xpose.msra.mxu0 0.0
        %493 = vmatprep.subr.mxu0 0.0
        %494 = vmatpush1.xpose.msra.mxu0 0.0
        %495 = vmatprep.subr.mxu0 0.0
        %496 = vmatpush1.xpose.msra.mxu0 0.0
        %497 = vmatprep.subr.mxu0 0.0
        %498 = vmatpush1.xpose.msra.mxu0 0.0
        %499 = vmatprep.subr.mxu0 0.0
        %500 = vmatpush1.xpose.msra.mxu0 0.0
        %501 = vmatprep.subr.mxu0 0.0
        %502 = vmatpush1.xpose.msra.mxu0 0.0
        %503 = vmatprep.subr.mxu0 0.0
        %504 = vmatpush1.xpose.msra.mxu0 0.0
        %505 = vmatprep.subr.mxu0 0.0
        %506 = vmatpush1.xpose.msra.mxu0 0.0
        %507 = vmatprep.subr.mxu0 0.0
        %508 = vmatpush1.xpose.msra.mxu0 0.0
        %509 = vmatprep.subr.mxu0 0.0
        %510 = vmatpush1.xpose.msra.mxu0 0.0
        %511 = vmatprep.subr.mxu0 0.0
        %512 = vmatpush1.xpose.msra.mxu0 0.0
        %513 = vmatprep.subr.mxu0 0.0
        %514 = vmatpush1.xpose.msra.mxu0 0.0
        %515 = vmatprep.subr.mxu0 0.0
        %516 = vmatpush1.xpose.msra.mxu0 0.0
        %517 = vmatprep.subr.mxu0 0.0
        %518 = vmatpush1.xpose.msra.mxu0 0.0
        %519 = vmatprep.subr.mxu0 0.0
        %520 = vmatpush1.xpose.msra.mxu0 0.0
        %521 = vmatprep.subr.mxu0 0.0
        %522 = vmatpush1.xpose.msra.mxu0 0.0
        %523 = vmatprep.subr.mxu0 0.0
        %524 = vmatpush1.xpose.msra.mxu0 0.0
        %525 = vmatprep.subr.mxu0 0.0
        %526 = vmatpush1.xpose.msra.mxu0 0.0
        %527 = vmatprep.subr.mxu0 0.0
        %528 = vmatpush1.xpose.msra.mxu0 0.0
        %529 = vmatprep.subr.mxu0 0.0
        %530 = vmatpush1.xpose.msra.mxu0 0.0
        %531 = vmatprep.subr.mxu0 0.0
        %532 = vmatpush1.xpose.msra.mxu0 0.0
        %533 = vmatprep.subr.mxu0 0.0
        %534 = vmatpush1.xpose.msra.mxu0 0.0
        %535 = vmatprep.subr.mxu0 0.0
        %536 = vmatpush1.xpose.msra.mxu0 0.0
        %537 = vmatprep.subr.mxu0 0.0
        %538 = vmatpush1.xpose.msra.mxu0 0.0
        %539 = vmatprep.mubr.f32.mxu0 0.0
        %540 = vmatmul.mubr.f32.gmra.mrb[0].mxu0 %v469
        %v541 = vpop.f32.mrb[0].mxu0
        %v542 = vadd.f32 0.0, %v541
        %v543 = vpop.f32.mrb[0].mxu0
        %544 = vdwg.mxu0
        %v545 = vmul.f32 %v542, 0.35355338
        %v546 = vsel %vm294, -1e+09, %v545
        %v547 = vsel %vm377, %v546, -inf
        %548 = vmax.xlane.f32.xlu0 %v547
        %v549 = vpop.xlane.xlu0 %548
        %v550 = vsub.f32 %v546, %v549
        %v551 = vmul.f32 %v550, 1.442695
        %v552 = vpow.pop %v551
        %v553 = vsel %vm377, %v552, 0.0
        %554 = vadd.xlane.f32.xlu0 %v553
        %v555 = vpop.xlane.xlu0 %554
        %v556 = vrcp.pop %v555
        %v557 = vmul.f32 %v552, %v556
        %560 = vrot.lane.b32.xlu0 %v291, 120
        %v561 = vpop.permute.xlu0 %560
        %562 = vrot.lane.b32.xlu0 %v292, 120
        %v563 = vpop.permute.xlu0 %562
        %v567 = vsel %vm377, %v557, 0
        %569 = vmatprep.subr.mxu0 0.0
        %570 = vmatpush1.msra.mxu0 %v561
        %571 = vmatprep.subr.mxu0 0.0
        %572 = vmatpush1.msra.mxu0 %v563
        %573 = vmatprep.subr.mxu0 0.0
        %574 = vmatpush1.msra.mxu0 0.0
        %575 = vmatprep.subr.mxu0 0.0
        %576 = vmatpush1.msra.mxu0 0.0
        %577 = vmatprep.subr.mxu0 0.0
        %578 = vmatpush1.msra.mxu0 0.0
        %579 = vmatprep.subr.mxu0 0.0
        %580 = vmatpush1.msra.mxu0 0.0
        %581 = vmatprep.subr.mxu0 0.0
        %582 = vmatpush1.msra.mxu0 0.0
        %583 = vmatprep.subr.mxu0 0.0
        %584 = vmatpush1.msra.mxu0 0.0
        %585 = vmatprep.subr.mxu0 0.0
        %586 = vmatpush1.msra.mxu0 0.0
        %587 = vmatprep.subr.mxu0 0.0
        %588 = vmatpush1.msra.mxu0 0.0
        %589 = vmatprep.subr.mxu0 0.0
        %590 = vmatpush1.msra.mxu0 0.0
        %591 = vmatprep.subr.mxu0 0.0
        %592 = vmatpush1.msra.mxu0 0.0
        %593 = vmatprep.subr.mxu0 0.0
        %594 = vmatpush1.msra.mxu0 0.0
        %595 = vmatprep.subr.mxu0 0.0
        %596 = vmatpush1.msra.mxu0 0.0
        %597 = vmatprep.subr.mxu0 0.0
        %598 = vmatpush1.msra.mxu0 0.0
        %599 = vmatprep.subr.mxu0 0.0
        %600 = vmatpush1.msra.mxu0 0.0
        %601 = vmatprep.subr.mxu0 0.0
        %602 = vmatpush1.msra.mxu0 0.0
        %603 = vmatprep.subr.mxu0 0.0
        %604 = vmatpush1.msra.mxu0 0.0
        %605 = vmatprep.subr.mxu0 0.0
        %606 = vmatpush1.msra.mxu0 0.0
        %607 = vmatprep.subr.mxu0 0.0
        %608 = vmatpush1.msra.mxu0 0.0
        %609 = vmatprep.subr.mxu0 0.0
        %610 = vmatpush1.msra.mxu0 0.0
        %611 = vmatprep.subr.mxu0 0.0
        %612 = vmatpush1.msra.mxu0 0.0
        %613 = vmatprep.subr.mxu0 0.0
        %614 = vmatpush1.msra.mxu0 0.0
        %615 = vmatprep.subr.mxu0 0.0
        %616 = vmatpush1.msra.mxu0 0.0
        %617 = vmatprep.subr.mxu0 0.0
        %618 = vmatpush1.msra.mxu0 0.0
        %619 = vmatprep.subr.mxu0 0.0
        %620 = vmatpush1.msra.mxu0 0.0
        %621 = vmatprep.subr.mxu0 0.0
        %622 = vmatpush1.msra.mxu0 0.0
        %623 = vmatprep.subr.mxu0 0.0
        %624 = vmatpush1.msra.mxu0 0.0
        %625 = vmatprep.subr.mxu0 0.0
        %626 = vmatpush1.msra.mxu0 0.0
        %627 = vmatprep.subr.mxu0 0.0
        %628 = vmatpush1.msra.mxu0 0.0
        %629 = vmatprep.subr.mxu0 0.0
        %630 = vmatpush1.msra.mxu0 0.0
        %631 = vmatprep.subr.mxu0 0.0
        %632 = vmatpush1.msra.mxu0 0.0
        %633 = vmatprep.mubr.f32.mxu0 0.0
        %634 = vmatmul.mubr.f32.gmra.mrb[0].mxu0 %v567
        %v635 = vpop.f32.mrb[0].mxu0
        %v636 = vadd.f32 0.0, %v635
        %v637 = vpop.f32.mrb[0].mxu0
        %638 = vdwg.mxu0
        %s639 = scalar_lea.vmem %s265, 8 [#allocation2]
        %640 = vst.msk [vmem:[%s639] sm:$0xff] %vm377, %v557
        %641 = vrot.lane.b32.xlu0 %v288, 112
        %v642 = vpop.permute.xlu0 %641
        %643 = vrot.lane.b32.xlu0 %v289, 112
        %v644 = vpop.permute.xlu0 %643
        %645 = vrot.lane.b32.xlu0 %v290, 112
        %v646 = vpop.permute.xlu0 %645
        %v647 = vsel %vm295, %v642, 0
        %v649 = vsel %vm295, %v644, 0
        %v651 = vsel %vm295, %v646, 0
        %653 = vmatprep.subr.mxu0 0.0
        %654 = vmatpush1.xpose.msra.mxu0 %v649
        %655 = vmatprep.subr.mxu0 0.0
        %656 = vmatpush1.xpose.msra.mxu0 %v651
        %657 = vmatprep.subr.mxu0 0.0
        %658 = vmatpush1.xpose.msra.mxu0 0.0
        %659 = vmatprep.subr.mxu0 0.0
        %660 = vmatpush1.xpose.msra.mxu0 0.0
        %661 = vmatprep.subr.mxu0 0.0
        %662 = vmatpush1.xpose.msra.mxu0 0.0
        %663 = vmatprep.subr.mxu0 0.0
        %664 = vmatpush1.xpose.msra.mxu0 0.0
        %665 = vmatprep.subr.mxu0 0.0
        %666 = vmatpush1.xpose.msra.mxu0 0.0
        %667 = vmatprep.subr.mxu0 0.0
        %668 = vmatpush1.xpose.msra.mxu0 0.0
        %669 = vmatprep.subr.mxu0 0.0
        %670 = vmatpush1.xpose.msra.mxu0 0.0
        %671 = vmatprep.subr.mxu0 0.0
        %672 = vmatpush1.xpose.msra.mxu0 0.0
        %673 = vmatprep.subr.mxu0 0.0
        %674 = vmatpush1.xpose.msra.mxu0 0.0
        %675 = vmatprep.subr.mxu0 0.0
        %676 = vmatpush1.xpose.msra.mxu0 0.0
        %677 = vmatprep.subr.mxu0 0.0
        %678 = vmatpush1.xpose.msra.mxu0 0.0
        %679 = vmatprep.subr.mxu0 0.0
        %680 = vmatpush1.xpose.msra.mxu0 0.0
        %681 = vmatprep.subr.mxu0 0.0
        %682 = vmatpush1.xpose.msra.mxu0 0.0
        %683 = vmatprep.subr.mxu0 0.0
        %684 = vmatpush1.xpose.msra.mxu0 0.0
        %685 = vmatprep.subr.mxu0 0.0
        %686 = vmatpush1.xpose.msra.mxu0 0.0
        %687 = vmatprep.subr.mxu0 0.0
        %688 = vmatpush1.xpose.msra.mxu0 0.0
        %689 = vmatprep.subr.mxu0 0.0
        %690 = vmatpush1.xpose.msra.mxu0 0.0
        %691 = vmatprep.subr.mxu0 0.0
        %692 = vmatpush1.xpose.msra.mxu0 0.0
        %693 = vmatprep.subr.mxu0 0.0
        %694 = vmatpush1.xpose.msra.mxu0 0.0
        %695 = vmatprep.subr.mxu0 0.0
        %696 = vmatpush1.xpose.msra.mxu0 0.0
        %697 = vmatprep.subr.mxu0 0.0
        %698 = vmatpush1.xpose.msra.mxu0 0.0
        %699 = vmatprep.subr.mxu0 0.0
        %700 = vmatpush1.xpose.msra.mxu0 0.0
        %701 = vmatprep.subr.mxu0 0.0
        %702 = vmatpush1.xpose.msra.mxu0 0.0
        %703 = vmatprep.subr.mxu0 0.0
        %704 = vmatpush1.xpose.msra.mxu0 0.0
        %705 = vmatprep.subr.mxu0 0.0
        %706 = vmatpush1.xpose.msra.mxu0 0.0
        %707 = vmatprep.subr.mxu0 0.0
        %708 = vmatpush1.xpose.msra.mxu0 0.0
        %709 = vmatprep.subr.mxu0 0.0
        %710 = vmatpush1.xpose.msra.mxu0 0.0
        %711 = vmatprep.subr.mxu0 0.0
        %712 = vmatpush1.xpose.msra.mxu0 0.0
        %713 = vmatprep.subr.mxu0 0.0
        %714 = vmatpush1.xpose.msra.mxu0 0.0
        %715 = vmatprep.subr.mxu0 0.0
        %716 = vmatpush1.xpose.msra.mxu0 0.0
        %717 = vmatprep.mubr.f32.mxu0 0.0
        %718 = vmatmul.mubr.f32.gmra.mrb[0].mxu0 %v647
        %v719 = vpop.f32.mrb[0].mxu0
        %v720 = vadd.f32 0.0, %v719
        %v721 = vpop.f32.mrb[0].mxu0
        %722 = vdwg.mxu0
        %v723 = vmul.f32 %v720, 0.35355338
        %v724 = vsel %vm294, -1e+09, %v723
        %v725 = vsel %vm377, %v724, -inf
        %726 = vmax.xlane.f32.xlu0 %v725
        %v727 = vpop.xlane.xlu0 %726
        %v728 = vsub.f32 %v724, %v727
        %v729 = vmul.f32 %v728, 1.442695
        %v730 = vpow.pop %v729
        %v731 = vsel %vm377, %v730, 0.0
        %732 = vadd.xlane.f32.xlu0 %v731
        %v733 = vpop.xlane.xlu0 %732
        %v734 = vrcp.pop %v733
        %v735 = vmul.f32 %v730, %v734
        %736 = vrot.lane.b32.xlu0 %v291, 112
        %v737 = vpop.permute.xlu0 %736
        %738 = vrot.lane.b32.xlu0 %v292, 112
        %v739 = vpop.permute.xlu0 %738
        %v743 = vsel %vm377, %v735, 0
        %745 = vmatprep.subr.mxu0 0.0
        %746 = vmatpush1.msra.mxu0 %v737
        %747 = vmatprep.subr.mxu0 0.0
        %748 = vmatpush1.msra.mxu0 %v739
        %749 = vmatprep.subr.mxu0 0.0
        %750 = vmatpush1.msra.mxu0 0.0
        %751 = vmatprep.subr.mxu0 0.0
        %752 = vmatpush1.msra.mxu0 0.0
        %753 = vmatprep.subr.mxu0 0.0
        %754 = vmatpush1.msra.mxu0 0.0
        %755 = vmatprep.subr.mxu0 0.0
        %756 = vmatpush1.msra.mxu0 0.0
        %757 = vmatprep.subr.mxu0 0.0
        %758 = vmatpush1.msra.mxu0 0.0
        %759 = vmatprep.subr.mxu0 0.0
        %760 = vmatpush1.msra.mxu0 0.0
        %761 = vmatprep.subr.mxu0 0.0
        %762 = vmatpush1.msra.mxu0 0.0
        %763 = vmatprep.subr.mxu0 0.0
        %764 = vmatpush1.msra.mxu0 0.0
        %765 = vmatprep.subr.mxu0 0.0
        %766 = vmatpush1.msra.mxu0 0.0
        %767 = vmatprep.subr.mxu0 0.0
        %768 = vmatpush1.msra.mxu0 0.0
        %769 = vmatprep.subr.mxu0 0.0
        %770 = vmatpush1.msra.mxu0 0.0
        %771 = vmatprep.subr.mxu0 0.0
        %772 = vmatpush1.msra.mxu0 0.0
        %773 = vmatprep.subr.mxu0 0.0
        %774 = vmatpush1.msra.mxu0 0.0
        %775 = vmatprep.subr.mxu0 0.0
        %776 = vmatpush1.msra.mxu0 0.0
        %777 = vmatprep.subr.mxu0 0.0
        %778 = vmatpush1.msra.mxu0 0.0
        %779 = vmatprep.subr.mxu0 0.0
        %780 = vmatpush1.msra.mxu0 0.0
        %781 = vmatprep.subr.mxu0 0.0
        %782 = vmatpush1.msra.mxu0 0.0
        %783 = vmatprep.subr.mxu0 0.0
        %784 = vmatpush1.msra.mxu0 0.0
        %785 = vmatprep.subr.mxu0 0.0
        %786 = vmatpush1.msra.mxu0 0.0
        %787 = vmatprep.subr.mxu0 0.0
        %788 = vmatpush1.msra.mxu0 0.0
        %789 = vmatprep.subr.mxu0 0.0
        %790 = vmatpush1.msra.mxu0 0.0
        %791 = vmatprep.subr.mxu0 0.0
        %792 = vmatpush1.msra.mxu0 0.0
        %793 = vmatprep.subr.mxu0 0.0
        %794 = vmatpush1.msra.mxu0 0.0
        %795 = vmatprep.subr.mxu0 0.0
        %796 = vmatpush1.msra.mxu0 0.0
        %797 = vmatprep.subr.mxu0 0.0
        %798 = vmatpush1.msra.mxu0 0.0
        %799 = vmatprep.subr.mxu0 0.0
        %800 = vmatpush1.msra.mxu0 0.0
        %801 = vmatprep.subr.mxu0 0.0
        %802 = vmatpush1.msra.mxu0 0.0
        %803 = vmatprep.subr.mxu0 0.0
        %804 = vmatpush1.msra.mxu0 0.0
        %805 = vmatprep.subr.mxu0 0.0
        %806 = vmatpush1.msra.mxu0 0.0
        %807 = vmatprep.subr.mxu0 0.0
        %808 = vmatpush1.msra.mxu0 0.0
        %809 = vmatprep.mubr.f32.mxu0 0.0
        %810 = vmatmul.mubr.f32.gmra.mrb[0].mxu0 %v743
        %v811 = vpop.f32.mrb[0].mxu0
        %v812 = vadd.f32 0.0, %v811
        %v813 = vpop.f32.mrb[0].mxu0
        %814 = vdwg.mxu0
        %s815 = scalar_lea.vmem %s265, 16 [#allocation2]
        %816 = vst.msk [vmem:[%s815] sm:$0xff] %vm377, %v735
        %817 = vrot.lane.b32.xlu0 %v288, 104
        %v818 = vpop.permute.xlu0 %817
        %819 = vrot.lane.b32.xlu0 %v289, 104
        %v820 = vpop.permute.xlu0 %819
        %821 = vrot.lane.b32.xlu0 %v290, 104
        %v822 = vpop.permute.xlu0 %821
        %v823 = vsel %vm295, %v818, 0
        %v825 = vsel %vm295, %v820, 0
        %v827 = vsel %vm295, %v822, 0
        %829 = vmatprep.subr.mxu0 0.0
        %830 = vmatpush1.xpose.msra.mxu0 %v825
        %831 = vmatprep.subr.mxu0 0.0
        %832 = vmatpush1.xpose.msra.mxu0 %v827
        %833 = vmatprep.subr.mxu0 0.0
        %834 = vmatpush1.xpose.msra.mxu0 0.0
        %835 = vmatprep.subr.mxu0 0.0
        %836 = vmatpush1.xpose.msra.mxu0 0.0
        %837 = vmatprep.subr.mxu0 0.0
        %838 = vmatpush1.xpose.msra.mxu0 0.0
        %839 = vmatprep.subr.mxu0 0.0
        %840 = vmatpush1.xpose.msra.mxu0 0.0
        %841 = vmatprep.subr.mxu0 0.0
        %842 = vmatpush1.xpose.msra.mxu0 0.0
        %843 = vmatprep.subr.mxu0 0.0
        %844 = vmatpush1.xpose.msra.mxu0 0.0
        %845 = vmatprep.subr.mxu0 0.0
        %846 = vmatpush1.xpose.msra.mxu0 0.0
        %847 = vmatprep.subr.mxu0 0.0
        %848 = vmatpush1.xpose.msra.mxu0 0.0
        %849 = vmatprep.subr.mxu0 0.0
        %850 = vmatpush1.xpose.msra.mxu0 0.0
        %851 = vmatprep.subr.mxu0 0.0
        %852 = vmatpush1.xpose.msra.mxu0 0.0
        %853 = vmatprep.subr.mxu0 0.0
        %854 = vmatpush1.xpose.msra.mxu0 0.0
        %855 = vmatprep.subr.mxu0 0.0
        %856 = vmatpush1.xpose.msra.mxu0 0.0
        %857 = vmatprep.subr.mxu0 0.0
        %858 = vmatpush1.xpose.msra.mxu0 0.0
        %859 = vmatprep.subr.mxu0 0.0
        %860 = vmatpush1.xpose.msra.mxu0 0.0
        %861 = vmatprep.subr.mxu0 0.0
        %862 = vmatpush1.xpose.msra.mxu0 0.0
        %863 = vmatprep.subr.mxu0 0.0
        %864 = vmatpush1.xpose.msra.mxu0 0.0
        %865 = vmatprep.subr.mxu0 0.0
        %866 = vmatpush1.xpose.msra.mxu0 0.0
        %867 = vmatprep.subr.mxu0 0.0
        %868 = vmatpush1.xpose.msra.mxu0 0.0
        %869 = vmatprep.subr.mxu0 0.0
        %870 = vmatpush1.xpose.msra.mxu0 0.0
        %871 = vmatprep.subr.mxu0 0.0
        %872 = vmatpush1.xpose.msra.mxu0 0.0
        %873 = vmatprep.subr.mxu0 0.0
        %874 = vmatpush1.xpose.msra.mxu0 0.0
        %875 = vmatprep.subr.mxu0 0.0
        %876 = vmatpush1.xpose.msra.mxu0 0.0
        %877 = vmatprep.subr.mxu0 0.0
        %878 = vmatpush1.xpose.msra.mxu0 0.0
        %879 = vmatprep.subr.mxu0 0.0
        %880 = vmatpush1.xpose.msra.mxu0 0.0
        %881 = vmatprep.subr.mxu0 0.0
        %882 = vmatpush1.xpose.msra.mxu0 0.0
        %883 = vmatprep.subr.mxu0 0.0
        %884 = vmatpush1.xpose.msra.mxu0 0.0
        %885 = vmatprep.subr.mxu0 0.0
        %886 = vmatpush1.xpose.msra.mxu0 0.0
        %887 = vmatprep.subr.mxu0 0.0
        %888 = vmatpush1.xpose.msra.mxu0 0.0
        %889 = vmatprep.subr.mxu0 0.0
        %890 = vmatpush1.xpose.msra.mxu0 0.0
        %891 = vmatprep.subr.mxu0 0.0
        %892 = vmatpush1.xpose.msra.mxu0 0.0
        %893 = vmatprep.mubr.f32.mxu0 0.0
        %894 = vmatmul.mubr.f32.gmra.mrb[0].mxu0 %v823
        %v895 = vpop.f32.mrb[0].mxu0
        %v896 = vadd.f32 0.0, %v895
        %v897 = vpop.f32.mrb[0].mxu0
        %898 = vdwg.mxu0
        %v899 = vmul.f32 %v896, 0.35355338
        %v900 = vsel %vm294, -1e+09, %v899
        %v901 = vsel %vm377, %v900, -inf
        %902 = vmax.xlane.f32.xlu0 %v901
        %v903 = vpop.xlane.xlu0 %902
        %v904 = vsub.f32 %v900, %v903
        %v905 = vmul.f32 %v904, 1.442695
        %v906 = vpow.pop %v905
        %v907 = vsel %vm377, %v906, 0.0
        %908 = vadd.xlane.f32.xlu0 %v907
        %v909 = vpop.xlane.xlu0 %908
        %v910 = vrcp.pop %v909
        %v911 = vmul.f32 %v906, %v910
        %912 = vrot.lane.b32.xlu0 %v291, 104
        %v913 = vpop.permute.xlu0 %912
        %914 = vrot.lane.b32.xlu0 %v292, 104
        %v915 = vpop.permute.xlu0 %914
        %v919 = vsel %vm377, %v911, 0
        %921 = vmatprep.subr.mxu0 0.0
        %922 = vmatpush1.msra.mxu0 %v913
        %923 = vmatprep.subr.mxu0 0.0
        %924 = vmatpush1.msra.mxu0 %v915
        %925 = vmatprep.subr.mxu0 0.0
        %926 = vmatpush1.msra.mxu0 0.0
        %927 = vmatprep.subr.mxu0 0.0
        %928 = vmatpush1.msra.mxu0 0.0
        %929 = vmatprep.subr.mxu0 0.0
        %930 = vmatpush1.msra.mxu0 0.0
        %931 = vmatprep.subr.mxu0 0.0
        %932 = vmatpush1.msra.mxu0 0.0
        %933 = vmatprep.subr.mxu0 0.0
        %934 = vmatpush1.msra.mxu0 0.0
        %935 = vmatprep.subr.mxu0 0.0
        %936 = vmatpush1.msra.mxu0 0.0
        %937 = vmatprep.subr.mxu0 0.0
        %938 = vmatpush1.msra.mxu0 0.0
        %939 = vmatprep.subr.mxu0 0.0
        %940 = vmatpush1.msra.mxu0 0.0
        %941 = vmatprep.subr.mxu0 0.0
        %942 = vmatpush1.msra.mxu0 0.0
        %943 = vmatprep.subr.mxu0 0.0
        %944 = vmatpush1.msra.mxu0 0.0
        %945 = vmatprep.subr.mxu0 0.0
        %946 = vmatpush1.msra.mxu0 0.0
        %947 = vmatprep.subr.mxu0 0.0
        %948 = vmatpush1.msra.mxu0 0.0
        %949 = vmatprep.subr.mxu0 0.0
        %950 = vmatpush1.msra.mxu0 0.0
        %951 = vmatprep.subr.mxu0 0.0
        %952 = vmatpush1.msra.mxu0 0.0
        %953 = vmatprep.subr.mxu0 0.0
        %954 = vmatpush1.msra.mxu0 0.0
        %955 = vmatprep.subr.mxu0 0.0
        %956 = vmatpush1.msra.mxu0 0.0
        %957 = vmatprep.subr.mxu0 0.0
        %958 = vmatpush1.msra.mxu0 0.0
        %959 = vmatprep.subr.mxu0 0.0
        %960 = vmatpush1.msra.mxu0 0.0
        %961 = vmatprep.subr.mxu0 0.0
        %962 = vmatpush1.msra.mxu0 0.0
        %963 = vmatprep.subr.mxu0 0.0
        %964 = vmatpush1.msra.mxu0 0.0
        %965 = vmatprep.subr.mxu0 0.0
        %966 = vmatpush1.msra.mxu0 0.0
        %967 = vmatprep.subr.mxu0 0.0
        %968 = vmatpush1.msra.mxu0 0.0
        %969 = vmatprep.subr.mxu0 0.0
        %970 = vmatpush1.msra.mxu0 0.0
        %971 = vmatprep.subr.mxu0 0.0
        %972 = vmatpush1.msra.mxu0 0.0
        %973 = vmatprep.subr.mxu0 0.0
        %974 = vmatpush1.msra.mxu0 0.0
        %975 = vmatprep.subr.mxu0 0.0
        %976 = vmatpush1.msra.mxu0 0.0
        %977 = vmatprep.subr.mxu0 0.0
        %978 = vmatpush1.msra.mxu0 0.0
        %979 = vmatprep.subr.mxu0 0.0
        %980 = vmatpush1.msra.mxu0 0.0
        %981 = vmatprep.subr.mxu0 0.0
        %982 = vmatpush1.msra.mxu0 0.0
        %983 = vmatprep.subr.mxu0 0.0
        %984 = vmatpush1.msra.mxu0 0.0
        %985 = vmatprep.mubr.f32.mxu0 0.0
        %986 = vmatmul.mubr.f32.gmra.mrb[0].mxu0 %v919
        %v987 = vpop.f32.mrb[0].mxu0
        %v988 = vadd.f32 0.0, %v987
        %v989 = vpop.f32.mrb[0].mxu0
        %990 = vdwg.mxu0
        %s991 = scalar_lea.vmem %s265, 24 [#allocation2]
        %992 = vst.msk [vmem:[%s991] sm:$0xff] %vm377, %v911
        %994 = vrot.lane.b32.xlu0 %v636, 8
        %v995 = vpop.permute.xlu0 %994
        %998 = vrot.lane.b32.xlu0 %v812, 16
        %v999 = vpop.permute.xlu0 %998
        %1002 = vrot.lane.b32.xlu0 %v988, 24
        %v1003 = vpop.permute.xlu0 %1002
        %v1005 = vsel %vm295, %v459, %v995
        %v1006 = vsel %vm377, %v1005, %v999
        %vm1007 = vcmask 195584
        %v1008 = vsel %vm1007, %v1006, %v1003
        %vm1009 = vcmask 261120
        %1010 = vst.msk [vmem:[%s287] sm:$0xff] %vm1009, %v1008
        %p1011 = scmp.lt.s32.totalorder %s20, 1
        %s1012 = scalar_select %p1011, %s20, 1
        %s1013 = smul.addr %s1012, 8
        %s1014 = scalar_lea.vmem %s4, %s1013
        %s1015 = sand.u32 %s158, 1
        %s1016 = scalar_lea.sflag [#allocation3], %s1015
        %s1017 = sand.u32 %s158, 1
        %s1018 = smul.addr %s1017, 32
        %s1019 = scalar_lea.vmem [#allocation2], %s1018
        // Predicated region
        $region37: #{decoder_forward.17} parent=35 // pred_check
          %p1020 = pneg %p142
        $region38: #{decoder_forward.17} parent=35 // pred_check_branch
          %1022 = sbr.rel (%p1020) target = $region40
        $region39: #{decoder_forward.17} parent=35 // pred_region
          _
        $region40: #{decoder_forward.17} parent=35 // pred_fallthru
          _
        // Predicated region
        $region41: #{decoder_forward.17} parent=35 // pred_check
          %p1023 = pneg %p168
        $region42: #{decoder_forward.17} parent=35 // pred_check_branch
          %1025 = sbr.rel (%p1023) target = $region44
        $region43: #{decoder_forward.17} parent=35 // pred_region
          %s1027 = ssub.s32 512, 512
          %1028 = vsyncadd %s1016, %s1027
          %s1029 = smul.addr %s20, 4
          %s1030 = smul.addr %s1029, 128
          %s1031 = scalar_lea.hbm %s5, %s1030
          %s1032 = sshll.u32 %s1019, 4
          %s1033 = int_to_ptr.vmem [resolvable:$true] %s1032
          %1038 = dma.vmem_to_hbm [thread:$0]  %s1033, 512, %s1031, %s1016, 128, 128, 8
        $region44: #{decoder_forward.17} parent=35 // pred_fallthru
          _
      $region36: #{decoder_forward.17} parent=5 // pred_fallthru
        _
      %p1039 = scmp.le.s32.totalorder 2, %s15
      // Predicated region
      $region45: #{decoder_forward.17} parent=5 // pred_check
        %p1040 = pneg %p1039
      $region46: #{decoder_forward.17} parent=5 // pred_check_branch
        %1042 = sbr.rel (%p1040) target = $region48
      $region47: #{decoder_forward.17} parent=5 // pred_region
        %s1043 = ssub.s32 %s15, 2
        // Predicated region
        $region49: #{decoder_forward.17} parent=47 // pred_check
          %p1044 = pneg %p148
        $region50: #{decoder_forward.17} parent=47 // pred_check_branch
          %1046 = sbr.rel (%p1044) target = $region52
        $region51: #{decoder_forward.17} parent=47 // pred_region
          %p1047 = scmp.lt.s32.totalorder %s21, 1
          %s1048 = scalar_select %p1047, %s21, 1
          %s1049 = smul.addr %s1048, 8
          %s1050 = scalar_lea.vmem %s4, %s1049
        $region52: #{decoder_forward.17} parent=47 // pred_fallthru
          _
        // Predicated region
        $region53: #{decoder_forward.17} parent=47 // pred_check
          %p1051 = pneg %p174
        $region54: #{decoder_forward.17} parent=47 // pred_check_branch
          %1053 = sbr.rel (%p1051) target = $region56
        $region55: #{decoder_forward.17} parent=47 // pred_region
          %s1054 = sand.u32 %s159, 1
          %s1055 = scalar_lea.sflag [#allocation3], %s1054
          %s1056 = sand.u32 %s159, 1
          %s1057 = smul.addr %s1056, 32
          %s1058 = scalar_lea.vmem [#allocation2], %s1057
          %1059 = dma.done %s1055, 512
        $region56: #{decoder_forward.17} parent=47 // pred_fallthru
          _
      $region48: #{decoder_forward.17} parent=5 // pred_fallthru
        _
    $region6: #{decoder_forward.17} parent=1 // loop_footer
      %s19 = sadd.s32 1, %s15
    $region7: #{decoder_forward.17} parent=1 // loop_footer_branch
      %14 = sbr.rel target = $region3
    $region8: #{decoder_forward.17} parent=1 // loop_exit
      _
    %1060 = vsyncpa [#allocation3], 1
    %s1061 = scalar_lea.sflag [#allocation3], 1
    %1062 = vsyncpa %s1061, 1

</llo_original>
